<compile_context>
chip_gen: v7x
topology: tpu7x:2x2x1
jax: 0.10.0
libtpu: 0.0.40
codegen_flags: <defaults>
</compile_context>

<pallas_src>
import functools

import jax
import jax.numpy as jnp
from jax.experimental import pallas as pl
from jax.experimental.pallas import tpu as pltpu

EPS = 1e-5
LANE = 128


def _round_up(v, m):
    return (v + m - 1) // m * m


# ---------------------------------------------------------------------------
# Pass 1: conv3x3x3 for one (n, d) output plane as 27 accumulated MXU matmuls,
#         plus per-channel sum / sum-of-squares accumulation (training-mode BN).
# ---------------------------------------------------------------------------
def _conv_stats_kernel(x0_ref, x1_ref, x2_ref, w_ref, y_ref, stats_ref, *, H, W, dil):
    d = pl.program_id(1)
    HW = H * W
    cout_p = y_ref.shape[-1]

    acc = jnp.zeros((HW, cout_p), jnp.float32)
    x_refs = (x0_ref, x1_ref, x2_ref)          # depth taps at padded depths d, d+dil, d+2*dil
    for kd in range(3):
        for kh in range(3):
            for kw in range(3):
                slab = x_refs[kd][kh * dil:kh * dil + H, kw * dil:kw * dil + W, :]
                slab = slab.reshape(HW, slab.shape[-1])
                acc = acc + jnp.dot(slab, w_ref[kd * 9 + kh * 3 + kw],
                                    preferred_element_type=jnp.float32)
    y_ref[...] = acc                            # raw conv output (pre-BN), f32

    # Per-batch-element accumulator over the "arbitrary" d axis (exact BN stats).
    @pl.when(d == 0)
    def _():
        stats_ref[...] = jnp.zeros_like(stats_ref)

    stats_ref[...] += jnp.concatenate(
        [jnp.sum(acc, axis=0, keepdims=True),
         jnp.sum(acc * acc, axis=0, keepdims=True)], axis=0)


def _conv3d_with_stats(xp, w_taps, *, N, D, H, W, dil):
    """xp: (N, D+2*dil, H+2*dil, W+2*dil, cin_p); w_taps: (27, cin_p, cout_p)."""
    _, _, Hp, Wp, cin_p = xp.shape
    cout_p = w_taps.shape[-1]
    HW = H * W

    def x_spec(kd):
        return pl.BlockSpec((None, None, Hp, Wp, cin_p),
                            lambda n, d: (n, d + kd * dil, 0, 0, 0))

    flops = 2 * N * D * HW * (27 * cin_p) * cout_p
    bytes_accessed = (3 * N * D * Hp * Wp * cin_p * xp.dtype.itemsize
                      + w_taps.size * w_taps.dtype.itemsize
                      + N * D * HW * cout_p * 4 + N * 2 * cout_p * 4)

    return pl.pallas_call(
        functools.partial(_conv_stats_kernel, H=H, W=W, dil=dil),
        grid=(N, D),
        in_specs=[x_spec(0), x_spec(1), x_spec(2),
                  pl.BlockSpec((27, cin_p, cout_p), lambda n, d: (0, 0, 0))],
        out_specs=(pl.BlockSpec((None, None, HW, cout_p), lambda n, d: (n, d, 0, 0)),
                   pl.BlockSpec((None, 2, cout_p), lambda n, d: (n, 0, 0))),
        out_shape=(jax.ShapeDtypeStruct((N, D, HW, cout_p), jnp.float32),
                   jax.ShapeDtypeStruct((N, 2, cout_p), jnp.float32)),
        compiler_params=pltpu.CompilerParams(
            dimension_semantics=("parallel", "arbitrary"),
            vmem_limit_bytes=32 * 1024 * 1024),
        cost_estimate=pl.CostEstimate(flops=flops, transcendentals=0,
                                      bytes_accessed=bytes_accessed),
    )(xp, xp, xp, w_taps)


# ---------------------------------------------------------------------------
# Pass 2: tiled BN-apply (+ optional residual) + ReLU.
# ---------------------------------------------------------------------------
def _bn_act_kernel(y_ref, scale_ref, shift_ref, o_ref):
    o_ref[...] = jnp.maximum(
        y_ref[...] * scale_ref[...] + shift_ref[...], 0.0).astype(o_ref.dtype)


def _bn_add_act_kernel(y_ref, scale_ref, shift_ref, res_ref, o_ref):
    o_ref[...] = jnp.maximum(
        y_ref[...] * scale_ref[...] + shift_ref[...] + res_ref[...], 0.0
    ).astype(o_ref.dtype)


def _bn_apply(y, scale, shift, residual, out_dtype):
    N, D, HW, cp = y.shape
    tile = pl.BlockSpec((None, None, HW, cp), lambda n, d: (n, d, 0, 0))
    vec = pl.BlockSpec((1, cp), lambda n, d: (0, 0))   # stays VMEM-resident across grid
    in_specs, args, kernel = [tile, vec, vec], [y, scale, shift], _bn_act_kernel
    if residual is not None:
        in_specs, args, kernel = in_specs + [tile], args + [residual], _bn_add_act_kernel
    return pl.pallas_call(
        kernel,
        grid=(N, D),
        in_specs=in_specs,
        out_specs=tile,
        out_shape=jax.ShapeDtypeStruct((N, D, HW, cp), out_dtype),
        compiler_params=pltpu.CompilerParams(
            dimension_semantics=("parallel", "parallel"),
            vmem_limit_bytes=32 * 1024 * 1024),
    )(*args)


# ---------------------------------------------------------------------------
# BasicBlock forward.
# ---------------------------------------------------------------------------
def basic_block_forward(x_ncdhw, params, dilation=1, compute_dtype=jnp.bfloat16):
    # TODO(synk): stride > 1 and the optional `downsample` branch are not implemented
    #             (module defaults: stride=1, dilation=1, downsample=None).
    w1, g1, b1 = params["w1"], params["g1"], params["b1"]
    w2, g2, b2 = params["w2"], params["g2"], params["b2"]

    N, cin, D, H, W = x_ncdhw.shape
    planes = w1.shape[0]
    assert cin == planes, "downsample=None requires inplanes == planes"
    dil = int(dilation)
    M = N * D * H * W
    cp = _round_up(planes, LANE)                       # lane-dense padded channel count

    x_cl = jnp.transpose(x_ncdhw, (0, 2, 3, 4, 1)).astype(jnp.float32)
    x_cl = jnp.pad(x_cl, ((0, 0),) * 4 + ((0, cp - cin),))     # channel pad (zeros)

    def spatial_pad(a):
        return jnp.pad(a, ((0, 0), (dil, dil), (dil, dil), (dil, dil), (0, 0)))

    def weight_taps(w):
        co, ci = w.shape[0], w.shape[1]
        wt = jnp.transpose(w, (2, 3, 4, 1, 0)).astype(jnp.float32)   # (3,3,3,ci,co)
        wt = jnp.pad(wt, ((0, 0),) * 3 + ((0, cp - ci), (0, cp - co)))
        return wt.reshape(27, cp, cp).astype(compute_dtype)

    def bn_scale_shift(stats, gamma, beta):
        s = jnp.sum(stats[:, 0, :], axis=0)                          # (cp,)
        ss = jnp.sum(stats[:, 1, :], axis=0)
        mean = s / M
        var = jnp.maximum(ss / M - mean * mean, 0.0)                 # biased variance
        g = jnp.pad(gamma.astype(jnp.float32), (0, cp - planes))
        b = jnp.pad(beta.astype(jnp.float32), (0, cp - planes))
        scale = g * jax.lax.rsqrt(var + EPS)
        shift = b - mean * scale
        return scale.reshape(1, cp), shift.reshape(1, cp)

    # ---- conv1 -> bn1 -> relu ------------------------------------------------
    xp1 = spatial_pad(x_cl).astype(compute_dtype)
    y1_raw, stats1 = _conv3d_with_stats(xp1, weight_taps(w1), N=N, D=D, H=H, W=W, dil=dil)
    scale1, shift1 = bn_scale_shift(stats1, g1, b1)
    a1 = _bn_apply(y1_raw, scale1, shift1, None, compute_dtype)      # (N, D, H*W, cp)

    # ---- conv2 -> bn2 -> (+residual) -> relu ----------------------------------
    # TODO(synk): a1 still round-trips HBM once before conv2; fusing the BN apply into
    #             conv2's tap loop would require zero-masking the spatial halo.
    xp2 = spatial_pad(a1.reshape(N, D, H, W, cp))
    y2_raw, stats2 = _conv3d_with_stats(xp2, weight_taps(w2), N=N, D=D, H=H, W=W, dil=dil)
    scale2, shift2 = bn_scale_shift(stats2, g2, b2)
    residual = x_cl.reshape(N, D, H * W, cp)
    out = _bn_apply(y2_raw, scale2, shift2, residual, jnp.float32)   # (N, D, H*W, cp)

    out = out.reshape(N, D, H, W, cp)[..., :planes]
    return jnp.transpose(out, (0, 4, 1, 2, 3))


# ---------------------------------------------------------------------------
# Deterministic parameter init (shapes from BasicBlock.__init__) and pure-JAX reference.
# ---------------------------------------------------------------------------
def init_params(key, inplanes, planes):
    k1, k2, k3, k4, k5, k6 = jax.random.split(key, 6)
    return dict(
        w1=jax.random.normal(k1, (planes, inplanes, 3, 3, 3), jnp.float32) * 0.1,
        w2=jax.random.normal(k2, (planes, planes, 3, 3, 3), jnp.float32) * 0.1,
        g1=jax.random.uniform(k3, (planes,), jnp.float32, 0.5, 1.5),
        b1=jax.random.normal(k4, (planes,), jnp.float32) * 0.1,
        g2=jax.random.uniform(k5, (planes,), jnp.float32, 0.5, 1.5),
        b2=jax.random.normal(k6, (planes,), jnp.float32) * 0.1,
    )


def reference_forward(x, params, dilation=1):
    def conv(x, w):
        return jax.lax.conv_general_dilated(
            x, w, window_strides=(1, 1, 1),
            padding=[(dilation, dilation)] * 3,
            rhs_dilation=(dilation,) * 3,
            dimension_numbers=("NCDHW", "OIDHW", "NCDHW"))

    def bn(x, g, b):
        mean = jnp.mean(x, axis=(0, 2, 3, 4), keepdims=True)
        var = jnp.mean(jnp.square(x - mean), axis=(0, 2, 3, 4), keepdims=True)
        return ((x - mean) * jax.lax.rsqrt(var + EPS)
                * g.reshape(1, -1, 1, 1, 1) + b.reshape(1, -1, 1, 1, 1))

    out = jax.nn.relu(bn(conv(x, params["w1"]), params["g1"], params["b1"]))
    out = bn(conv(out, params["w2"]), params["g2"], params["b2"]) + x
    return jax.nn.relu(out)


if __name__ == "__main__":
    key = jax.random.PRNGKey(0)
    kx, kp = jax.random.split(key)

    N, C, D, H, W = 2, 4, 8, 8, 8                      # inplanes = planes = 4
    x = jax.random.normal(kx, (N, C, D, H, W), jnp.float32)
    params = init_params(kp, inplanes=C, planes=C)

    ref = jax.block_until_ready(reference_forward(x, params))

    # f32 MXU-input path: tight check against the pure-JAX reference.
    out_f32 = jax.block_until_ready(
        jax.jit(functools.partial(basic_block_forward, compute_dtype=jnp.float32))(x, params))
    assert out_f32.shape == ref.shape == (N, C, D, H, W)
    err_f32 = float(jnp.max(jnp.abs(out_f32 - ref)))
    assert jnp.allclose(out_f32, ref, rtol=1e-3, atol=1e-3), f"f32 max_abs_err={err_f32}"

    # Default path (bf16 MXU inputs, f32 accumulation): looser tolerance.
    out_bf16 = jax.block_until_ready(jax.jit(basic_block_forward)(x, params))
    err_bf16 = float(jnp.max(jnp.abs(out_bf16 - ref)))
    assert jnp.allclose(out_bf16, ref, rtol=5e-2, atol=5e-2), f"bf16 max_abs_err={err_bf16}"

    print("KERNEL_OK")
</pallas_src>

<mosaic_0001>
module attributes {stable_mosaic.version = 11 : i64} {
  func.func @_conv_stats_kernel(%arg0: i32, %arg1: i32, %arg2: memref<1x1x10x10x128xf32, #tpu.memory_space<vmem>>, %arg3: memref<1x1x10x10x128xf32, #tpu.memory_space<vmem>>, %arg4: memref<1x1x10x10x128xf32, #tpu.memory_space<vmem>>, %arg5: memref<27x128x128xf32, #tpu.memory_space<vmem>>, %arg6: memref<1x1x64x128xf32, #tpu.memory_space<vmem>>, %arg7: memref<1x2x128xf32, #tpu.memory_space<vmem>>) attributes {dimension_semantics = [#tpu.dimension_semantics<parallel>, #tpu.dimension_semantics<arbitrary>], iteration_bounds = array<i64: 2, 8>, scalar_prefetch = 0 : i64, scratch_operands = 0 : i64, tpu.core_type = #tpu.core_type<tc>, window_params = [{transform_indices = @transform_0, window_bounds = array<i64: 1, 1, 10, 10, 128>}, {transform_indices = @transform_1, window_bounds = array<i64: 1, 1, 10, 10, 128>}, {transform_indices = @transform_2, window_bounds = array<i64: 1, 1, 10, 10, 128>}, {pipeline_mode = #tpu.pipeline_mode<synchronous>, transform_indices = @transform_3, window_bounds = array<i64: 27, 128, 128>}, {transform_indices = @transform_4, window_bounds = array<i64: 1, 1, 64, 128>}, {transform_indices = @transform_5, window_bounds = array<i64: 1, 2, 128>}]} {
    %cst = arith.constant 0.000000e+00 : f32
    %0 = vector.broadcast %cst : f32 to vector<64x128xf32>
    %c0 = arith.constant 0 : index
    %c0_0 = arith.constant 0 : index
    %c0_1 = arith.constant 0 : index
    %c0_2 = arith.constant 0 : index
    %c0_3 = arith.constant 0 : index
    %1 = vector.load %arg2[%c0, %c0_0, %c0_1, %c0_2, %c0_3] : memref<1x1x10x10x128xf32, #tpu.memory_space<vmem>>, vector<1x1x8x8x128xf32>
    %2 = vector.shape_cast %1 : vector<1x1x8x8x128xf32> to vector<8x8x128xf32>
    %3 = vector.shape_cast %2 : vector<8x8x128xf32> to vector<64x128xf32>
    %c0_4 = arith.constant 0 : index
    %c0_5 = arith.constant 0 : index
    %c0_6 = arith.constant 0 : index
    %4 = vector.load %arg5[%c0_4, %c0_5, %c0_6] : memref<27x128x128xf32, #tpu.memory_space<vmem>>, vector<1x128x128xf32>
    %5 = vector.shape_cast %4 : vector<1x128x128xf32> to vector<128x128xf32>
    %cst_7 = arith.constant dense<0.000000e+00> : vector<64x128xf32>
    %6 = tpu.matmul %3, %5, %cst_7 {dimension_numbers = #tpu.dot_dimension_numbers<[1], [0], [0], [1], [0, 0, 1, 1], [], []>} : vector<64x128xf32>, vector<128x128xf32>, vector<64x128xf32> -> vector<64x128xf32>
    %7 = arith.addf %0, %6 : vector<64x128xf32>
    %c0_8 = arith.constant 0 : index
    %c0_9 = arith.constant 0 : index
    %c0_10 = arith.constant 0 : index
    %c1 = arith.constant 1 : index
    %c0_11 = arith.constant 0 : index
    %8 = vector.load %arg2[%c0_8, %c0_9, %c0_10, %c1, %c0_11] : memref<1x1x10x10x128xf32, #tpu.memory_space<vmem>>, vector<1x1x8x8x128xf32>
    %9 = vector.shape_cast %8 : vector<1x1x8x8x128xf32> to vector<8x8x128xf32>
    %10 = vector.shape_cast %9 : vector<8x8x128xf32> to vector<64x128xf32>
    %c1_12 = arith.constant 1 : index
    %c0_13 = arith.constant 0 : index
    %c0_14 = arith.constant 0 : index
    %11 = vector.load %arg5[%c1_12, %c0_13, %c0_14] : memref<27x128x128xf32, #tpu.memory_space<vmem>>, vector<1x128x128xf32>
    %12 = vector.shape_cast %11 : vector<1x128x128xf32> to vector<128x128xf32>
    %cst_15 = arith.constant dense<0.000000e+00> : vector<64x128xf32>
    %13 = tpu.matmul %10, %12, %cst_15 {dimension_numbers = #tpu.dot_dimension_numbers<[1], [0], [0], [1], [0, 0, 1, 1], [], []>} : vector<64x128xf32>, vector<128x128xf32>, vector<64x128xf32> -> vector<64x128xf32>
    %14 = arith.addf %7, %13 : vector<64x128xf32>
    %c0_16 = arith.constant 0 : index
    %c0_17 = arith.constant 0 : index
    %c0_18 = arith.constant 0 : index
    %c2 = arith.constant 2 : index
    %c0_19 = arith.constant 0 : index
    %15 = vector.load %arg2[%c0_16, %c0_17, %c0_18, %c2, %c0_19] : memref<1x1x10x10x128xf32, #tpu.memory_space<vmem>>, vector<1x1x8x8x128xf32>
    %16 = vector.shape_cast %15 : vector<1x1x8x8x128xf32> to vector<8x8x128xf32>
    %17 = vector.shape_cast %16 : vector<8x8x128xf32> to vector<64x128xf32>
    %c2_20 = arith.constant 2 : index
    %c0_21 = arith.constant 0 : index
    %c0_22 = arith.constant 0 : index
    %18 = vector.load %arg5[%c2_20, %c0_21, %c0_22] : memref<27x128x128xf32, #tpu.memory_space<vmem>>, vector<1x128x128xf32>
    %19 = vector.shape_cast %18 : vector<1x128x128xf32> to vector<128x128xf32>
    %cst_23 = arith.constant dense<0.000000e+00> : vector<64x128xf32>
    %20 = tpu.matmul %17, %19, %cst_23 {dimension_numbers = #tpu.dot_dimension_numbers<[1], [0], [0], [1], [0, 0, 1, 1], [], []>} : vector<64x128xf32>, vector<128x128xf32>, vector<64x128xf32> -> vector<64x128xf32>
    %21 = arith.addf %14, %20 : vector<64x128xf32>
    %c0_24 = arith.constant 0 : index
    %c0_25 = arith.constant 0 : index
    %c1_26 = arith.constant 1 : index
    %c0_27 = arith.constant 0 : index
    %c0_28 = arith.constant 0 : index
    %22 = vector.load %arg2[%c0_24, %c0_25, %c1_26, %c0_27, %c0_28] : memref<1x1x10x10x128xf32, #tpu.memory_space<vmem>>, vector<1x1x8x8x128xf32>
    %23 = vector.shape_cast %22 : vector<1x1x8x8x128xf32> to vector<8x8x128xf32>
    %24 = vector.shape_cast %23 : vector<8x8x128xf32> to vector<64x128xf32>
    %c3 = arith.constant 3 : index
    %c0_29 = arith.constant 0 : index
    %c0_30 = arith.constant 0 : index
    %25 = vector.load %arg5[%c3, %c0_29, %c0_30] : memref<27x128x128xf32, #tpu.memory_space<vmem>>, vector<1x128x128xf32>
    %26 = vector.shape_cast %25 : vector<1x128x128xf32> to vector<128x128xf32>
    %cst_31 = arith.constant dense<0.000000e+00> : vector<64x128xf32>
    %27 = tpu.matmul %24, %26, %cst_31 {dimension_numbers = #tpu.dot_dimension_numbers<[1], [0], [0], [1], [0, 0, 1, 1], [], []>} : vector<64x128xf32>, vector<128x128xf32>, vector<64x128xf32> -> vector<64x128xf32>
    %28 = arith.addf %21, %27 : vector<64x128xf32>
    %c0_32 = arith.constant 0 : index
    %c0_33 = arith.constant 0 : index
    %c1_34 = arith.constant 1 : index
    %c1_35 = arith.constant 1 : index
    %c0_36 = arith.constant 0 : index
    %29 = vector.load %arg2[%c0_32, %c0_33, %c1_34, %c1_35, %c0_36] : memref<1x1x10x10x128xf32, #tpu.memory_space<vmem>>, vector<1x1x8x8x128xf32>
    %30 = vector.shape_cast %29 : vector<1x1x8x8x128xf32> to vector<8x8x128xf32>
    %31 = vector.shape_cast %30 : vector<8x8x128xf32> to vector<64x128xf32>
    %c4 = arith.constant 4 : index
    %c0_37 = arith.constant 0 : index
    %c0_38 = arith.constant 0 : index
    %32 = vector.load %arg5[%c4, %c0_37, %c0_38] : memref<27x128x128xf32, #tpu.memory_space<vmem>>, vector<1x128x128xf32>
    %33 = vector.shape_cast %32 : vector<1x128x128xf32> to vector<128x128xf32>
    %cst_39 = arith.constant dense<0.000000e+00> : vector<64x128xf32>
    %34 = tpu.matmul %31, %33, %cst_39 {dimension_numbers = #tpu.dot_dimension_numbers<[1], [0], [0], [1], [0, 0, 1, 1], [], []>} : vector<64x128xf32>, vector<128x128xf32>, vector<64x128xf32> -> vector<64x128xf32>
    %35 = arith.addf %28, %34 : vector<64x128xf32>
    %c0_40 = arith.constant 0 : index
    %c0_41 = arith.constant 0 : index
    %c1_42 = arith.constant 1 : index
    %c2_43 = arith.constant 2 : index
    %c0_44 = arith.constant 0 : index
    %36 = vector.load %arg2[%c0_40, %c0_41, %c1_42, %c2_43, %c0_44] : memref<1x1x10x10x128xf32, #tpu.memory_space<vmem>>, vector<1x1x8x8x128xf32>
    %37 = vector.shape_cast %36 : vector<1x1x8x8x128xf32> to vector<8x8x128xf32>
    %38 = vector.shape_cast %37 : vector<8x8x128xf32> to vector<64x128xf32>
    %c5 = arith.constant 5 : index
    %c0_45 = arith.constant 0 : index
    %c0_46 = arith.constant 0 : index
    %39 = vector.load %arg5[%c5, %c0_45, %c0_46] : memref<27x128x128xf32, #tpu.memory_space<vmem>>, vector<1x128x128xf32>
    %40 = vector.shape_cast %39 : vector<1x128x128xf32> to vector<128x128xf32>
    %cst_47 = arith.constant dense<0.000000e+00> : vector<64x128xf32>
    %41 = tpu.matmul %38, %40, %cst_47 {dimension_numbers = #tpu.dot_dimension_numbers<[1], [0], [0], [1], [0, 0, 1, 1], [], []>} : vector<64x128xf32>, vector<128x128xf32>, vector<64x128xf32> -> vector<64x128xf32>
    %42 = arith.addf %35, %41 : vector<64x128xf32>
    %c0_48 = arith.constant 0 : index
    %c0_49 = arith.constant 0 : index
    %c2_50 = arith.constant 2 : index
    %c0_51 = arith.constant 0 : index
    %c0_52 = arith.constant 0 : index
    %43 = vector.load %arg2[%c0_48, %c0_49, %c2_50, %c0_51, %c0_52] : memref<1x1x10x10x128xf32, #tpu.memory_space<vmem>>, vector<1x1x8x8x128xf32>
    %44 = vector.shape_cast %43 : vector<1x1x8x8x128xf32> to vector<8x8x128xf32>
    %45 = vector.shape_cast %44 : vector<8x8x128xf32> to vector<64x128xf32>
    %c6 = arith.constant 6 : index
    %c0_53 = arith.constant 0 : index
    %c0_54 = arith.constant 0 : index
    %46 = vector.load %arg5[%c6, %c0_53, %c0_54] : memref<27x128x128xf32, #tpu.memory_space<vmem>>, vector<1x128x128xf32>
    %47 = vector.shape_cast %46 : vector<1x128x128xf32> to vector<128x128xf32>
    %cst_55 = arith.constant dense<0.000000e+00> : vector<64x128xf32>
    %48 = tpu.matmul %45, %47, %cst_55 {dimension_numbers = #tpu.dot_dimension_numbers<[1], [0], [0], [1], [0, 0, 1, 1], [], []>} : vector<64x128xf32>, vector<128x128xf32>, vector<64x128xf32> -> vector<64x128xf32>
    %49 = arith.addf %42, %48 : vector<64x128xf32>
    %c0_56 = arith.constant 0 : index
    %c0_57 = arith.constant 0 : index
    %c2_58 = arith.constant 2 : index
    %c1_59 = arith.constant 1 : index
    %c0_60 = arith.constant 0 : index
    %50 = vector.load %arg2[%c0_56, %c0_57, %c2_58, %c1_59, %c0_60] : memref<1x1x10x10x128xf32, #tpu.memory_space<vmem>>, vector<1x1x8x8x128xf32>
    %51 = vector.shape_cast %50 : vector<1x1x8x8x128xf32> to vector<8x8x128xf32>
    %52 = vector.shape_cast %51 : vector<8x8x128xf32> to vector<64x128xf32>
    %c7 = arith.constant 7 : index
    %c0_61 = arith.constant 0 : index
    %c0_62 = arith.constant 0 : index
    %53 = vector.load %arg5[%c7, %c0_61, %c0_62] : memref<27x128x128xf32, #tpu.memory_space<vmem>>, vector<1x128x128xf32>
    %54 = vector.shape_cast %53 : vector<1x128x128xf32> to vector<128x128xf32>
    %cst_63 = arith.constant dense<0.000000e+00> : vector<64x128xf32>
    %55 = tpu.matmul %52, %54, %cst_63 {dimension_numbers = #tpu.dot_dimension_numbers<[1], [0], [0], [1], [0, 0, 1, 1], [], []>} : vector<64x128xf32>, vector<128x128xf32>, vector<64x128xf32> -> vector<64x128xf32>
    %56 = arith.addf %49, %55 : vector<64x128xf32>
    %c0_64 = arith.constant 0 : index
    %c0_65 = arith.constant 0 : index
    %c2_66 = arith.constant 2 : index
    %c2_67 = arith.constant 2 : index
    %c0_68 = arith.constant 0 : index
    %57 = vector.load %arg2[%c0_64, %c0_65, %c2_66, %c2_67, %c0_68] : memref<1x1x10x10x128xf32, #tpu.memory_space<vmem>>, vector<1x1x8x8x128xf32>
    %58 = vector.shape_cast %57 : vector<1x1x8x8x128xf32> to vector<8x8x128xf32>
    %59 = vector.shape_cast %58 : vector<8x8x128xf32> to vector<64x128xf32>
    %c8 = arith.constant 8 : index
    %c0_69 = arith.constant 0 : index
    %c0_70 = arith.constant 0 : index
    %60 = vector.load %arg5[%c8, %c0_69, %c0_70] : memref<27x128x128xf32, #tpu.memory_space<vmem>>, vector<1x128x128xf32>
    %61 = vector.shape_cast %60 : vector<1x128x128xf32> to vector<128x128xf32>
    %cst_71 = arith.constant dense<0.000000e+00> : vector<64x128xf32>
    %62 = tpu.matmul %59, %61, %cst_71 {dimension_numbers = #tpu.dot_dimension_numbers<[1], [0], [0], [1], [0, 0, 1, 1], [], []>} : vector<64x128xf32>, vector<128x128xf32>, vector<64x128xf32> -> vector<64x128xf32>
    %63 = arith.addf %56, %62 : vector<64x128xf32>
    %c0_72 = arith.constant 0 : index
    %c0_73 = arith.constant 0 : index
    %c0_74 = arith.constant 0 : index
    %c0_75 = arith.constant 0 : index
    %c0_76 = arith.constant 0 : index
    %64 = vector.load %arg3[%c0_72, %c0_73, %c0_74, %c0_75, %c0_76] : memref<1x1x10x10x128xf32, #tpu.memory_space<vmem>>, vector<1x1x8x8x128xf32>
    %65 = vector.shape_cast %64 : vector<1x1x8x8x128xf32> to vector<8x8x128xf32>
    %66 = vector.shape_cast %65 : vector<8x8x128xf32> to vector<64x128xf32>
    %c9 = arith.constant 9 : index
    %c0_77 = arith.constant 0 : index
    %c0_78 = arith.constant 0 : index
    %67 = vector.load %arg5[%c9, %c0_77, %c0_78] : memref<27x128x128xf32, #tpu.memory_space<vmem>>, vector<1x128x128xf32>
    %68 = vector.shape_cast %67 : vector<1x128x128xf32> to vector<128x128xf32>
    %cst_79 = arith.constant dense<0.000000e+00> : vector<64x128xf32>
    %69 = tpu.matmul %66, %68, %cst_79 {dimension_numbers = #tpu.dot_dimension_numbers<[1], [0], [0], [1], [0, 0, 1, 1], [], []>} : vector<64x128xf32>, vector<128x128xf32>, vector<64x128xf32> -> vector<64x128xf32>
    %70 = arith.addf %63, %69 : vector<64x128xf32>
    %c0_80 = arith.constant 0 : index
    %c0_81 = arith.constant 0 : index
    %c0_82 = arith.constant 0 : index
    %c1_83 = arith.constant 1 : index
    %c0_84 = arith.constant 0 : index
    %71 = vector.load %arg3[%c0_80, %c0_81, %c0_82, %c1_83, %c0_84] : memref<1x1x10x10x128xf32, #tpu.memory_space<vmem>>, vector<1x1x8x8x128xf32>
    %72 = vector.shape_cast %71 : vector<1x1x8x8x128xf32> to vector<8x8x128xf32>
    %73 = vector.shape_cast %72 : vector<8x8x128xf32> to vector<64x128xf32>
    %c10 = arith.constant 10 : index
    %c0_85 = arith.constant 0 : index
    %c0_86 = arith.constant 0 : index
    %74 = vector.load %arg5[%c10, %c0_85, %c0_86] : memref<27x128x128xf32, #tpu.memory_space<vmem>>, vector<1x128x128xf32>
    %75 = vector.shape_cast %74 : vector<1x128x128xf32> to vector<128x128xf32>
    %cst_87 = arith.constant dense<0.000000e+00> : vector<64x128xf32>
    %76 = tpu.matmul %73, %75, %cst_87 {dimension_numbers = #tpu.dot_dimension_numbers<[1], [0], [0], [1], [0, 0, 1, 1], [], []>} : vector<64x128xf32>, vector<128x128xf32>, vector<64x128xf32> -> vector<64x128xf32>
    %77 = arith.addf %70, %76 : vector<64x128xf32>
    %c0_88 = arith.constant 0 : index
    %c0_89 = arith.constant 0 : index
    %c0_90 = arith.constant 0 : index
    %c2_91 = arith.constant 2 : index
    %c0_92 = arith.constant 0 : index
    %78 = vector.load %arg3[%c0_88, %c0_89, %c0_90, %c2_91, %c0_92] : memref<1x1x10x10x128xf32, #tpu.memory_space<vmem>>, vector<1x1x8x8x128xf32>
    %79 = vector.shape_cast %78 : vector<1x1x8x8x128xf32> to vector<8x8x128xf32>
    %80 = vector.shape_cast %79 : vector<8x8x128xf32> to vector<64x128xf32>
    %c11 = arith.constant 11 : index
    %c0_93 = arith.constant 0 : index
    %c0_94 = arith.constant 0 : index
    %81 = vector.load %arg5[%c11, %c0_93, %c0_94] : memref<27x128x128xf32, #tpu.memory_space<vmem>>, vector<1x128x128xf32>
    %82 = vector.shape_cast %81 : vector<1x128x128xf32> to vector<128x128xf32>
    %cst_95 = arith.constant dense<0.000000e+00> : vector<64x128xf32>
    %83 = tpu.matmul %80, %82, %cst_95 {dimension_numbers = #tpu.dot_dimension_numbers<[1], [0], [0], [1], [0, 0, 1, 1], [], []>} : vector<64x128xf32>, vector<128x128xf32>, vector<64x128xf32> -> vector<64x128xf32>
    %84 = arith.addf %77, %83 : vector<64x128xf32>
    %c0_96 = arith.constant 0 : index
    %c0_97 = arith.constant 0 : index
    %c1_98 = arith.constant 1 : index
    %c0_99 = arith.constant 0 : index
    %c0_100 = arith.constant 0 : index
    %85 = vector.load %arg3[%c0_96, %c0_97, %c1_98, %c0_99, %c0_100] : memref<1x1x10x10x128xf32, #tpu.memory_space<vmem>>, vector<1x1x8x8x128xf32>
    %86 = vector.shape_cast %85 : vector<1x1x8x8x128xf32> to vector<8x8x128xf32>
    %87 = vector.shape_cast %86 : vector<8x8x128xf32> to vector<64x128xf32>
    %c12 = arith.constant 12 : index
    %c0_101 = arith.constant 0 : index
    %c0_102 = arith.constant 0 : index
    %88 = vector.load %arg5[%c12, %c0_101, %c0_102] : memref<27x128x128xf32, #tpu.memory_space<vmem>>, vector<1x128x128xf32>
    %89 = vector.shape_cast %88 : vector<1x128x128xf32> to vector<128x128xf32>
    %cst_103 = arith.constant dense<0.000000e+00> : vector<64x128xf32>
    %90 = tpu.matmul %87, %89, %cst_103 {dimension_numbers = #tpu.dot_dimension_numbers<[1], [0], [0], [1], [0, 0, 1, 1], [], []>} : vector<64x128xf32>, vector<128x128xf32>, vector<64x128xf32> -> vector<64x128xf32>
    %91 = arith.addf %84, %90 : vector<64x128xf32>
    %c0_104 = arith.constant 0 : index
    %c0_105 = arith.constant 0 : index
    %c1_106 = arith.constant 1 : index
    %c1_107 = arith.constant 1 : index
    %c0_108 = arith.constant 0 : index
    %92 = vector.load %arg3[%c0_104, %c0_105, %c1_106, %c1_107, %c0_108] : memref<1x1x10x10x128xf32, #tpu.memory_space<vmem>>, vector<1x1x8x8x128xf32>
    %93 = vector.shape_cast %92 : vector<1x1x8x8x128xf32> to vector<8x8x128xf32>
    %94 = vector.shape_cast %93 : vector<8x8x128xf32> to vector<64x128xf32>
    %c13 = arith.constant 13 : index
    %c0_109 = arith.constant 0 : index
    %c0_110 = arith.constant 0 : index
    %95 = vector.load %arg5[%c13, %c0_109, %c0_110] : memref<27x128x128xf32, #tpu.memory_space<vmem>>, vector<1x128x128xf32>
    %96 = vector.shape_cast %95 : vector<1x128x128xf32> to vector<128x128xf32>
    %cst_111 = arith.constant dense<0.000000e+00> : vector<64x128xf32>
    %97 = tpu.matmul %94, %96, %cst_111 {dimension_numbers = #tpu.dot_dimension_numbers<[1], [0], [0], [1], [0, 0, 1, 1], [], []>} : vector<64x128xf32>, vector<128x128xf32>, vector<64x128xf32> -> vector<64x128xf32>
    %98 = arith.addf %91, %97 : vector<64x128xf32>
    %c0_112 = arith.constant 0 : index
    %c0_113 = arith.constant 0 : index
    %c1_114 = arith.constant 1 : index
    %c2_115 = arith.constant 2 : index
    %c0_116 = arith.constant 0 : index
    %99 = vector.load %arg3[%c0_112, %c0_113, %c1_114, %c2_115, %c0_116] : memref<1x1x10x10x128xf32, #tpu.memory_space<vmem>>, vector<1x1x8x8x128xf32>
    %100 = vector.shape_cast %99 : vector<1x1x8x8x128xf32> to vector<8x8x128xf32>
    %101 = vector.shape_cast %100 : vector<8x8x128xf32> to vector<64x128xf32>
    %c14 = arith.constant 14 : index
    %c0_117 = arith.constant 0 : index
    %c0_118 = arith.constant 0 : index
    %102 = vector.load %arg5[%c14, %c0_117, %c0_118] : memref<27x128x128xf32, #tpu.memory_space<vmem>>, vector<1x128x128xf32>
    %103 = vector.shape_cast %102 : vector<1x128x128xf32> to vector<128x128xf32>
    %cst_119 = arith.constant dense<0.000000e+00> : vector<64x128xf32>
    %104 = tpu.matmul %101, %103, %cst_119 {dimension_numbers = #tpu.dot_dimension_numbers<[1], [0], [0], [1], [0, 0, 1, 1], [], []>} : vector<64x128xf32>, vector<128x128xf32>, vector<64x128xf32> -> vector<64x128xf32>
    %105 = arith.addf %98, %104 : vector<64x128xf32>
    %c0_120 = arith.constant 0 : index
    %c0_121 = arith.constant 0 : index
    %c2_122 = arith.constant 2 : index
    %c0_123 = arith.constant 0 : index
    %c0_124 = arith.constant 0 : index
    %106 = vector.load %arg3[%c0_120, %c0_121, %c2_122, %c0_123, %c0_124] : memref<1x1x10x10x128xf32, #tpu.memory_space<vmem>>, vector<1x1x8x8x128xf32>
    %107 = vector.shape_cast %106 : vector<1x1x8x8x128xf32> to vector<8x8x128xf32>
    %108 = vector.shape_cast %107 : vector<8x8x128xf32> to vector<64x128xf32>
    %c15 = arith.constant 15 : index
    %c0_125 = arith.constant 0 : index
    %c0_126 = arith.constant 0 : index
    %109 = vector.load %arg5[%c15, %c0_125, %c0_126] : memref<27x128x128xf32, #tpu.memory_space<vmem>>, vector<1x128x128xf32>
    %110 = vector.shape_cast %109 : vector<1x128x128xf32> to vector<128x128xf32>
    %cst_127 = arith.constant dense<0.000000e+00> : vector<64x128xf32>
    %111 = tpu.matmul %108, %110, %cst_127 {dimension_numbers = #tpu.dot_dimension_numbers<[1], [0], [0], [1], [0, 0, 1, 1], [], []>} : vector<64x128xf32>, vector<128x128xf32>, vector<64x128xf32> -> vector<64x128xf32>
    %112 = arith.addf %105, %111 : vector<64x128xf32>
    %c0_128 = arith.constant 0 : index
    %c0_129 = arith.constant 0 : index
    %c2_130 = arith.constant 2 : index
    %c1_131 = arith.constant 1 : index
    %c0_132 = arith.constant 0 : index
    %113 = vector.load %arg3[%c0_128, %c0_129, %c2_130, %c1_131, %c0_132] : memref<1x1x10x10x128xf32, #tpu.memory_space<vmem>>, vector<1x1x8x8x128xf32>
    %114 = vector.shape_cast %113 : vector<1x1x8x8x128xf32> to vector<8x8x128xf32>
    %115 = vector.shape_cast %114 : vector<8x8x128xf32> to vector<64x128xf32>
    %c16 = arith.constant 16 : index
    %c0_133 = arith.constant 0 : index
    %c0_134 = arith.constant 0 : index
    %116 = vector.load %arg5[%c16, %c0_133, %c0_134] : memref<27x128x128xf32, #tpu.memory_space<vmem>>, vector<1x128x128xf32>
    %117 = vector.shape_cast %116 : vector<1x128x128xf32> to vector<128x128xf32>
    %cst_135 = arith.constant dense<0.000000e+00> : vector<64x128xf32>
    %118 = tpu.matmul %115, %117, %cst_135 {dimension_numbers = #tpu.dot_dimension_numbers<[1], [0], [0], [1], [0, 0, 1, 1], [], []>} : vector<64x128xf32>, vector<128x128xf32>, vector<64x128xf32> -> vector<64x128xf32>
    %119 = arith.addf %112, %118 : vector<64x128xf32>
    %c0_136 = arith.constant 0 : index
    %c0_137 = arith.constant 0 : index
    %c2_138 = arith.constant 2 : index
    %c2_139 = arith.constant 2 : index
    %c0_140 = arith.constant 0 : index
    %120 = vector.load %arg3[%c0_136, %c0_137, %c2_138, %c2_139, %c0_140] : memref<1x1x10x10x128xf32, #tpu.memory_space<vmem>>, vector<1x1x8x8x128xf32>
    %121 = vector.shape_cast %120 : vector<1x1x8x8x128xf32> to vector<8x8x128xf32>
    %122 = vector.shape_cast %121 : vector<8x8x128xf32> to vector<64x128xf32>
    %c17 = arith.constant 17 : index
    %c0_141 = arith.constant 0 : index
    %c0_142 = arith.constant 0 : index
    %123 = vector.load %arg5[%c17, %c0_141, %c0_142] : memref<27x128x128xf32, #tpu.memory_space<vmem>>, vector<1x128x128xf32>
    %124 = vector.shape_cast %123 : vector<1x128x128xf32> to vector<128x128xf32>
    %cst_143 = arith.constant dense<0.000000e+00> : vector<64x128xf32>
    %125 = tpu.matmul %122, %124, %cst_143 {dimension_numbers = #tpu.dot_dimension_numbers<[1], [0], [0], [1], [0, 0, 1, 1], [], []>} : vector<64x128xf32>, vector<128x128xf32>, vector<64x128xf32> -> vector<64x128xf32>
    %126 = arith.addf %119, %125 : vector<64x128xf32>
    %c0_144 = arith.constant 0 : index
    %c0_145 = arith.constant 0 : index
    %c0_146 = arith.constant 0 : index
    %c0_147 = arith.constant 0 : index
    %c0_148 = arith.constant 0 : index
    %127 = vector.load %arg4[%c0_144, %c0_145, %c0_146, %c0_147, %c0_148] : memref<1x1x10x10x128xf32, #tpu.memory_space<vmem>>, vector<1x1x8x8x128xf32>
    %128 = vector.shape_cast %127 : vector<1x1x8x8x128xf32> to vector<8x8x128xf32>
    %129 = vector.shape_cast %128 : vector<8x8x128xf32> to vector<64x128xf32>
    %c18 = arith.constant 18 : index
    %c0_149 = arith.constant 0 : index
    %c0_150 = arith.constant 0 : index
    %130 = vector.load %arg5[%c18, %c0_149, %c0_150] : memref<27x128x128xf32, #tpu.memory_space<vmem>>, vector<1x128x128xf32>
    %131 = vector.shape_cast %130 : vector<1x128x128xf32> to vector<128x128xf32>
    %cst_151 = arith.constant dense<0.000000e+00> : vector<64x128xf32>
    %132 = tpu.matmul %129, %131, %cst_151 {dimension_numbers = #tpu.dot_dimension_numbers<[1], [0], [0], [1], [0, 0, 1, 1], [], []>} : vector<64x128xf32>, vector<128x128xf32>, vector<64x128xf32> -> vector<64x128xf32>
    %133 = arith.addf %126, %132 : vector<64x128xf32>
    %c0_152 = arith.constant 0 : index
    %c0_153 = arith.constant 0 : index
    %c0_154 = arith.constant 0 : index
    %c1_155 = arith.constant 1 : index
    %c0_156 = arith.constant 0 : index
    %134 = vector.load %arg4[%c0_152, %c0_153, %c0_154, %c1_155, %c0_156] : memref<1x1x10x10x128xf32, #tpu.memory_space<vmem>>, vector<1x1x8x8x128xf32>
    %135 = vector.shape_cast %134 : vector<1x1x8x8x128xf32> to vector<8x8x128xf32>
    %136 = vector.shape_cast %135 : vector<8x8x128xf32> to vector<64x128xf32>
    %c19 = arith.constant 19 : index
    %c0_157 = arith.constant 0 : index
    %c0_158 = arith.constant 0 : index
    %137 = vector.load %arg5[%c19, %c0_157, %c0_158] : memref<27x128x128xf32, #tpu.memory_space<vmem>>, vector<1x128x128xf32>
    %138 = vector.shape_cast %137 : vector<1x128x128xf32> to vector<128x128xf32>
    %cst_159 = arith.constant dense<0.000000e+00> : vector<64x128xf32>
    %139 = tpu.matmul %136, %138, %cst_159 {dimension_numbers = #tpu.dot_dimension_numbers<[1], [0], [0], [1], [0, 0, 1, 1], [], []>} : vector<64x128xf32>, vector<128x128xf32>, vector<64x128xf32> -> vector<64x128xf32>
    %140 = arith.addf %133, %139 : vector<64x128xf32>
    %c0_160 = arith.constant 0 : index
    %c0_161 = arith.constant 0 : index
    %c0_162 = arith.constant 0 : index
    %c2_163 = arith.constant 2 : index
    %c0_164 = arith.constant 0 : index
    %141 = vector.load %arg4[%c0_160, %c0_161, %c0_162, %c2_163, %c0_164] : memref<1x1x10x10x128xf32, #tpu.memory_space<vmem>>, vector<1x1x8x8x128xf32>
    %142 = vector.shape_cast %141 : vector<1x1x8x8x128xf32> to vector<8x8x128xf32>
    %143 = vector.shape_cast %142 : vector<8x8x128xf32> to vector<64x128xf32>
    %c20 = arith.constant 20 : index
    %c0_165 = arith.constant 0 : index
    %c0_166 = arith.constant 0 : index
    %144 = vector.load %arg5[%c20, %c0_165, %c0_166] : memref<27x128x128xf32, #tpu.memory_space<vmem>>, vector<1x128x128xf32>
    %145 = vector.shape_cast %144 : vector<1x128x128xf32> to vector<128x128xf32>
    %cst_167 = arith.constant dense<0.000000e+00> : vector<64x128xf32>
    %146 = tpu.matmul %143, %145, %cst_167 {dimension_numbers = #tpu.dot_dimension_numbers<[1], [0], [0], [1], [0, 0, 1, 1], [], []>} : vector<64x128xf32>, vector<128x128xf32>, vector<64x128xf32> -> vector<64x128xf32>
    %147 = arith.addf %140, %146 : vector<64x128xf32>
    %c0_168 = arith.constant 0 : index
    %c0_169 = arith.constant 0 : index
    %c1_170 = arith.constant 1 : index
    %c0_171 = arith.constant 0 : index
    %c0_172 = arith.constant 0 : index
    %148 = vector.load %arg4[%c0_168, %c0_169, %c1_170, %c0_171, %c0_172] : memref<1x1x10x10x128xf32, #tpu.memory_space<vmem>>, vector<1x1x8x8x128xf32>
    %149 = vector.shape_cast %148 : vector<1x1x8x8x128xf32> to vector<8x8x128xf32>
    %150 = vector.shape_cast %149 : vector<8x8x128xf32> to vector<64x128xf32>
    %c21 = arith.constant 21 : index
    %c0_173 = arith.constant 0 : index
    %c0_174 = arith.constant 0 : index
    %151 = vector.load %arg5[%c21, %c0_173, %c0_174] : memref<27x128x128xf32, #tpu.memory_space<vmem>>, vector<1x128x128xf32>
    %152 = vector.shape_cast %151 : vector<1x128x128xf32> to vector<128x128xf32>
    %cst_175 = arith.constant dense<0.000000e+00> : vector<64x128xf32>
    %153 = tpu.matmul %150, %152, %cst_175 {dimension_numbers = #tpu.dot_dimension_numbers<[1], [0], [0], [1], [0, 0, 1, 1], [], []>} : vector<64x128xf32>, vector<128x128xf32>, vector<64x128xf32> -> vector<64x128xf32>
    %154 = arith.addf %147, %153 : vector<64x128xf32>
    %c0_176 = arith.constant 0 : index
    %c0_177 = arith.constant 0 : index
    %c1_178 = arith.constant 1 : index
    %c1_179 = arith.constant 1 : index
    %c0_180 = arith.constant 0 : index
    %155 = vector.load %arg4[%c0_176, %c0_177, %c1_178, %c1_179, %c0_180] : memref<1x1x10x10x128xf32, #tpu.memory_space<vmem>>, vector<1x1x8x8x128xf32>
    %156 = vector.shape_cast %155 : vector<1x1x8x8x128xf32> to vector<8x8x128xf32>
    %157 = vector.shape_cast %156 : vector<8x8x128xf32> to vector<64x128xf32>
    %c22 = arith.constant 22 : index
    %c0_181 = arith.constant 0 : index
    %c0_182 = arith.constant 0 : index
    %158 = vector.load %arg5[%c22, %c0_181, %c0_182] : memref<27x128x128xf32, #tpu.memory_space<vmem>>, vector<1x128x128xf32>
    %159 = vector.shape_cast %158 : vector<1x128x128xf32> to vector<128x128xf32>
    %cst_183 = arith.constant dense<0.000000e+00> : vector<64x128xf32>
    %160 = tpu.matmul %157, %159, %cst_183 {dimension_numbers = #tpu.dot_dimension_numbers<[1], [0], [0], [1], [0, 0, 1, 1], [], []>} : vector<64x128xf32>, vector<128x128xf32>, vector<64x128xf32> -> vector<64x128xf32>
    %161 = arith.addf %154, %160 : vector<64x128xf32>
    %c0_184 = arith.constant 0 : index
    %c0_185 = arith.constant 0 : index
    %c1_186 = arith.constant 1 : index
    %c2_187 = arith.constant 2 : index
    %c0_188 = arith.constant 0 : index
    %162 = vector.load %arg4[%c0_184, %c0_185, %c1_186, %c2_187, %c0_188] : memref<1x1x10x10x128xf32, #tpu.memory_space<vmem>>, vector<1x1x8x8x128xf32>
    %163 = vector.shape_cast %162 : vector<1x1x8x8x128xf32> to vector<8x8x128xf32>
    %164 = vector.shape_cast %163 : vector<8x8x128xf32> to vector<64x128xf32>
    %c23 = arith.constant 23 : index
    %c0_189 = arith.constant 0 : index
    %c0_190 = arith.constant 0 : index
    %165 = vector.load %arg5[%c23, %c0_189, %c0_190] : memref<27x128x128xf32, #tpu.memory_space<vmem>>, vector<1x128x128xf32>
    %166 = vector.shape_cast %165 : vector<1x128x128xf32> to vector<128x128xf32>
    %cst_191 = arith.constant dense<0.000000e+00> : vector<64x128xf32>
    %167 = tpu.matmul %164, %166, %cst_191 {dimension_numbers = #tpu.dot_dimension_numbers<[1], [0], [0], [1], [0, 0, 1, 1], [], []>} : vector<64x128xf32>, vector<128x128xf32>, vector<64x128xf32> -> vector<64x128xf32>
    %168 = arith.addf %161, %167 : vector<64x128xf32>
    %c0_192 = arith.constant 0 : index
    %c0_193 = arith.constant 0 : index
    %c2_194 = arith.constant 2 : index
    %c0_195 = arith.constant 0 : index
    %c0_196 = arith.constant 0 : index
    %169 = vector.load %arg4[%c0_192, %c0_193, %c2_194, %c0_195, %c0_196] : memref<1x1x10x10x128xf32, #tpu.memory_space<vmem>>, vector<1x1x8x8x128xf32>
    %170 = vector.shape_cast %169 : vector<1x1x8x8x128xf32> to vector<8x8x128xf32>
    %171 = vector.shape_cast %170 : vector<8x8x128xf32> to vector<64x128xf32>
    %c24 = arith.constant 24 : index
    %c0_197 = arith.constant 0 : index
    %c0_198 = arith.constant 0 : index
    %172 = vector.load %arg5[%c24, %c0_197, %c0_198] : memref<27x128x128xf32, #tpu.memory_space<vmem>>, vector<1x128x128xf32>
    %173 = vector.shape_cast %172 : vector<1x128x128xf32> to vector<128x128xf32>
    %cst_199 = arith.constant dense<0.000000e+00> : vector<64x128xf32>
    %174 = tpu.matmul %171, %173, %cst_199 {dimension_numbers = #tpu.dot_dimension_numbers<[1], [0], [0], [1], [0, 0, 1, 1], [], []>} : vector<64x128xf32>, vector<128x128xf32>, vector<64x128xf32> -> vector<64x128xf32>
    %175 = arith.addf %168, %174 : vector<64x128xf32>
    %c0_200 = arith.constant 0 : index
    %c0_201 = arith.constant 0 : index
    %c2_202 = arith.constant 2 : index
    %c1_203 = arith.constant 1 : index
    %c0_204 = arith.constant 0 : index
    %176 = vector.load %arg4[%c0_200, %c0_201, %c2_202, %c1_203, %c0_204] : memref<1x1x10x10x128xf32, #tpu.memory_space<vmem>>, vector<1x1x8x8x128xf32>
    %177 = vector.shape_cast %176 : vector<1x1x8x8x128xf32> to vector<8x8x128xf32>
    %178 = vector.shape_cast %177 : vector<8x8x128xf32> to vector<64x128xf32>
    %c25 = arith.constant 25 : index
    %c0_205 = arith.constant 0 : index
    %c0_206 = arith.constant 0 : index
    %179 = vector.load %arg5[%c25, %c0_205, %c0_206] : memref<27x128x128xf32, #tpu.memory_space<vmem>>, vector<1x128x128xf32>
    %180 = vector.shape_cast %179 : vector<1x128x128xf32> to vector<128x128xf32>
    %cst_207 = arith.constant dense<0.000000e+00> : vector<64x128xf32>
    %181 = tpu.matmul %178, %180, %cst_207 {dimension_numbers = #tpu.dot_dimension_numbers<[1], [0], [0], [1], [0, 0, 1, 1], [], []>} : vector<64x128xf32>, vector<128x128xf32>, vector<64x128xf32> -> vector<64x128xf32>
    %182 = arith.addf %175, %181 : vector<64x128xf32>
    %c0_208 = arith.constant 0 : index
    %c0_209 = arith.constant 0 : index
    %c2_210 = arith.constant 2 : index
    %c2_211 = arith.constant 2 : index
    %c0_212 = arith.constant 0 : index
    %183 = vector.load %arg4[%c0_208, %c0_209, %c2_210, %c2_211, %c0_212] : memref<1x1x10x10x128xf32, #tpu.memory_space<vmem>>, vector<1x1x8x8x128xf32>
    %184 = vector.shape_cast %183 : vector<1x1x8x8x128xf32> to vector<8x8x128xf32>
    %185 = vector.shape_cast %184 : vector<8x8x128xf32> to vector<64x128xf32>
    %c26 = arith.constant 26 : index
    %c0_213 = arith.constant 0 : index
    %c0_214 = arith.constant 0 : index
    %186 = vector.load %arg5[%c26, %c0_213, %c0_214] : memref<27x128x128xf32, #tpu.memory_space<vmem>>, vector<1x128x128xf32>
    %187 = vector.shape_cast %186 : vector<1x128x128xf32> to vector<128x128xf32>
    %cst_215 = arith.constant dense<0.000000e+00> : vector<64x128xf32>
    %188 = tpu.matmul %185, %187, %cst_215 {dimension_numbers = #tpu.dot_dimension_numbers<[1], [0], [0], [1], [0, 0, 1, 1], [], []>} : vector<64x128xf32>, vector<128x128xf32>, vector<64x128xf32> -> vector<64x128xf32>
    %189 = arith.addf %182, %188 : vector<64x128xf32>
    %c0_216 = arith.constant 0 : index
    %c0_217 = arith.constant 0 : index
    %c0_218 = arith.constant 0 : index
    %c0_219 = arith.constant 0 : index
    %190 = vector.load %arg6[%c0_216, %c0_217, %c0_218, %c0_219] : memref<1x1x64x128xf32, #tpu.memory_space<vmem>>, vector<1x1x64x128xf32>
    %191 = vector.shape_cast %190 : vector<1x1x64x128xf32> to vector<64x128xf32>
    %192 = vector.shape_cast %189 : vector<64x128xf32> to vector<1x1x64x128xf32>
    tpu.vector_store %arg6[%c0_216, %c0_217, %c0_218, %c0_219], %192 {strides = array<i32>} : memref<1x1x64x128xf32, #tpu.memory_space<vmem>>, vector<1x1x64x128xf32>,
    %c0_i32 = arith.constant 0 : i32
    %193 = arith.cmpi eq, %arg1, %c0_i32 : i32
    %194 = arith.extui %193 : i1 to i32
    %c0_i32_220 = arith.constant 0 : i32
    %195 = arith.cmpi ne, %194, %c0_i32_220 : i32
    scf.if %195 {
      %cst_229 = arith.constant 0.000000e+00 : f32
      %208 = vector.broadcast %cst_229 : f32 to vector<2x128xf32>
      %c0_230 = arith.constant 0 : index
      %c0_231 = arith.constant 0 : index
      %c0_232 = arith.constant 0 : index
      %209 = vector.load %arg7[%c0_230, %c0_231, %c0_232] : memref<1x2x128xf32, #tpu.memory_space<vmem>>, vector<1x2x128xf32>
      %210 = vector.shape_cast %209 : vector<1x2x128xf32> to vector<2x128xf32>
      %211 = vector.shape_cast %208 : vector<2x128xf32> to vector<1x2x128xf32>
      tpu.vector_store %arg7[%c0_230, %c0_231, %c0_232], %211 {strides = array<i32>} : memref<1x2x128xf32, #tpu.memory_space<vmem>>, vector<1x2x128xf32>,
    } else {
    }
    %c0_221 = arith.constant 0 : index
    %c0_222 = arith.constant 0 : index
    %c0_223 = arith.constant 0 : index
    %196 = vector.load %arg7[%c0_221, %c0_222, %c0_223] : memref<1x2x128xf32, #tpu.memory_space<vmem>>, vector<1x2x128xf32>
    %197 = vector.shape_cast %196 : vector<1x2x128xf32> to vector<2x128xf32>
    %cst_224 = arith.constant dense<0.000000e+00> : vector<128xf32>
    %198 = vector.multi_reduction <add>, %189, %cst_224 [0] : vector<64x128xf32> to vector<128xf32>
    %199 = vector.shape_cast %198 : vector<128xf32> to vector<1x128xf32>
    %200 = arith.mulf %189, %189 : vector<64x128xf32>
    %cst_225 = arith.constant dense<0.000000e+00> : vector<128xf32>
    %201 = vector.multi_reduction <add>, %200, %cst_225 [0] : vector<64x128xf32> to vector<128xf32>
    %202 = vector.shape_cast %201 : vector<128xf32> to vector<1x128xf32>
    %203 = tpu.concatenate %199, %202 in 0 : vector<1x128xf32>, vector<1x128xf32> -> vector<2x128xf32>
    %204 = arith.addf %197, %203 : vector<2x128xf32>
    %c0_226 = arith.constant 0 : index
    %c0_227 = arith.constant 0 : index
    %c0_228 = arith.constant 0 : index
    %205 = vector.load %arg7[%c0_226, %c0_227, %c0_228] : memref<1x2x128xf32, #tpu.memory_space<vmem>>, vector<1x2x128xf32>
    %206 = vector.shape_cast %205 : vector<1x2x128xf32> to vector<2x128xf32>
    %207 = vector.shape_cast %204 : vector<2x128xf32> to vector<1x2x128xf32>
    tpu.vector_store %arg7[%c0_226, %c0_227, %c0_228], %207 {strides = array<i32>} : memref<1x2x128xf32, #tpu.memory_space<vmem>>, vector<1x2x128xf32>,
    return
  }
  func.func @transform_0(%arg0: i32, %arg1: i32) -> (i32, i32, i32, i32, i32) {
    %c0_i32 = arith.constant 0 : i32
    %0 = arith.addi %arg1, %c0_i32 : i32
    %c0_i32_0 = arith.constant 0 : i32
    %c0_i32_1 = arith.constant 0 : i32
    %c0_i32_2 = arith.constant 0 : i32
    %c0_i32_3 = arith.constant 0 : i32
    return %arg0, %0, %c0_i32_0, %c0_i32_1, %c0_i32_2 : i32, i32, i32, i32, i32
  }
  func.func @transform_1(%arg0: i32, %arg1: i32) -> (i32, i32, i32, i32, i32) {
    %c1_i32 = arith.constant 1 : i32
    %0 = arith.addi %arg1, %c1_i32 : i32
    %c0_i32 = arith.constant 0 : i32
    %c0_i32_0 = arith.constant 0 : i32
    %c0_i32_1 = arith.constant 0 : i32
    %c0_i32_2 = arith.constant 0 : i32
    return %arg0, %0, %c0_i32, %c0_i32_0, %c0_i32_1 : i32, i32, i32, i32, i32
  }
  func.func @transform_2(%arg0: i32, %arg1: i32) -> (i32, i32, i32, i32, i32) {
    %c2_i32 = arith.constant 2 : i32
    %0 = arith.addi %arg1, %c2_i32 : i32
    %c0_i32 = arith.constant 0 : i32
    %c0_i32_0 = arith.constant 0 : i32
    %c0_i32_1 = arith.constant 0 : i32
    %c0_i32_2 = arith.constant 0 : i32
    return %arg0, %0, %c0_i32, %c0_i32_0, %c0_i32_1 : i32, i32, i32, i32, i32
  }
  func.func @transform_3(%arg0: i32, %arg1: i32) -> (i32, i32, i32) {
    %c0_i32 = arith.constant 0 : i32
    %c0_i32_0 = arith.constant 0 : i32
    %c0_i32_1 = arith.constant 0 : i32
    %c0_i32_2 = arith.constant 0 : i32
    return %c0_i32, %c0_i32_0, %c0_i32_1 : i32, i32, i32
  }
  func.func @transform_4(%arg0: i32, %arg1: i32) -> (i32, i32, i32, i32) {
    %c0_i32 = arith.constant 0 : i32
    %c0_i32_0 = arith.constant 0 : i32
    %c0_i32_1 = arith.constant 0 : i32
    return %arg0, %arg1, %c0_i32, %c0_i32_0 : i32, i32, i32, i32
  }
  func.func @transform_5(%arg0: i32, %arg1: i32) -> (i32, i32, i32) {
    %c0_i32 = arith.constant 0 : i32
    %c0_i32_0 = arith.constant 0 : i32
    %c0_i32_1 = arith.constant 0 : i32
    return %arg0, %c0_i32, %c0_i32_0 : i32, i32, i32
  }
}

module attributes {stable_mosaic.version = 11 : i64} {
  func.func @_bn_act_kernel(%arg0: i32, %arg1: i32, %arg2: memref<1x1x64x128xf32, #tpu.memory_space<vmem>>, %arg3: memref<1x128xf32, #tpu.memory_space<vmem>>, %arg4: memref<1x128xf32, #tpu.memory_space<vmem>>, %arg5: memref<1x1x64x128xf32, #tpu.memory_space<vmem>>) attributes {dimension_semantics = [#tpu.dimension_semantics<parallel>, #tpu.dimension_semantics<parallel>], iteration_bounds = array<i64: 2, 8>, scalar_prefetch = 0 : i64, scratch_operands = 0 : i64, tpu.core_type = #tpu.core_type<tc>, window_params = [{transform_indices = @transform_0, window_bounds = array<i64: 1, 1, 64, 128>}, {pipeline_mode = #tpu.pipeline_mode<synchronous>, transform_indices = @transform_1, window_bounds = array<i64: 1, 128>}, {pipeline_mode = #tpu.pipeline_mode<synchronous>, transform_indices = @transform_2, window_bounds = array<i64: 1, 128>}, {transform_indices = @transform_3, window_bounds = array<i64: 1, 1, 64, 128>}]} {
    %c0 = arith.constant 0 : index
    %c0_0 = arith.constant 0 : index
    %c0_1 = arith.constant 0 : index
    %c0_2 = arith.constant 0 : index
    %0 = vector.load %arg2[%c0, %c0_0, %c0_1, %c0_2] : memref<1x1x64x128xf32, #tpu.memory_space<vmem>>, vector<1x1x64x128xf32>
    %1 = vector.shape_cast %0 : vector<1x1x64x128xf32> to vector<64x128xf32>
    %c0_3 = arith.constant 0 : index
    %c0_4 = arith.constant 0 : index
    %2 = vector.load %arg3[%c0_3, %c0_4] : memref<1x128xf32, #tpu.memory_space<vmem>>, vector<1x128xf32>
    %3 = vector.broadcast %2 : vector<1x128xf32> to vector<64x128xf32>
    %4 = arith.mulf %1, %3 : vector<64x128xf32>
    %c0_5 = arith.constant 0 : index
    %c0_6 = arith.constant 0 : index
    %5 = vector.load %arg4[%c0_5, %c0_6] : memref<1x128xf32, #tpu.memory_space<vmem>>, vector<1x128xf32>
    %6 = vector.broadcast %5 : vector<1x128xf32> to vector<64x128xf32>
    %7 = arith.addf %4, %6 : vector<64x128xf32>
    %cst = arith.constant 0.000000e+00 : f32
    %8 = vector.broadcast %cst : f32 to vector<64x128xf32>
    %9 = arith.maximumf %7, %8 : vector<64x128xf32>
    %c0_7 = arith.constant 0 : index
    %c0_8 = arith.constant 0 : index
    %c0_9 = arith.constant 0 : index
    %c0_10 = arith.constant 0 : index
    %10 = vector.load %arg5[%c0_7, %c0_8, %c0_9, %c0_10] : memref<1x1x64x128xf32, #tpu.memory_space<vmem>>, vector<1x1x64x128xf32>
    %11 = vector.shape_cast %10 : vector<1x1x64x128xf32> to vector<64x128xf32>
    %12 = vector.shape_cast %9 : vector<64x128xf32> to vector<1x1x64x128xf32>
    tpu.vector_store %arg5[%c0_7, %c0_8, %c0_9, %c0_10], %12 {strides = array<i32>} : memref<1x1x64x128xf32, #tpu.memory_space<vmem>>, vector<1x1x64x128xf32>,
    return
  }
  func.func @transform_0(%arg0: i32, %arg1: i32) -> (i32, i32, i32, i32) {
    %c0_i32 = arith.constant 0 : i32
    %c0_i32_0 = arith.constant 0 : i32
    %c0_i32_1 = arith.constant 0 : i32
    return %arg0, %arg1, %c0_i32, %c0_i32_0 : i32, i32, i32, i32
  }
  func.func @transform_1(%arg0: i32, %arg1: i32) -> (i32, i32) {
    %c0_i32 = arith.constant 0 : i32
    %c0_i32_0 = arith.constant 0 : i32
    %c0_i32_1 = arith.constant 0 : i32
    return %c0_i32, %c0_i32_0 : i32, i32
  }
  func.func @transform_2(%arg0: i32, %arg1: i32) -> (i32, i32) {
    %c0_i32 = arith.constant 0 : i32
    %c0_i32_0 = arith.constant 0 : i32
    %c0_i32_1 = arith.constant 0 : i32
    return %c0_i32, %c0_i32_0 : i32, i32
  }
  func.func @transform_3(%arg0: i32, %arg1: i32) -> (i32, i32, i32, i32) {
    %c0_i32 = arith.constant 0 : i32
    %c0_i32_0 = arith.constant 0 : i32
    %c0_i32_1 = arith.constant 0 : i32
    return %arg0, %arg1, %c0_i32, %c0_i32_0 : i32, i32, i32, i32
  }
}

module attributes {stable_mosaic.version = 11 : i64} {
  func.func @_bn_add_act_kernel(%arg0: i32, %arg1: i32, %arg2: memref<1x1x64x128xf32, #tpu.memory_space<vmem>>, %arg3: memref<1x128xf32, #tpu.memory_space<vmem>>, %arg4: memref<1x128xf32, #tpu.memory_space<vmem>>, %arg5: memref<1x1x64x128xf32, #tpu.memory_space<vmem>>, %arg6: memref<1x1x64x128xf32, #tpu.memory_space<vmem>>) attributes {dimension_semantics = [#tpu.dimension_semantics<parallel>, #tpu.dimension_semantics<parallel>], iteration_bounds = array<i64: 2, 8>, scalar_prefetch = 0 : i64, scratch_operands = 0 : i64, tpu.core_type = #tpu.core_type<tc>, window_params = [{transform_indices = @transform_0, window_bounds = array<i64: 1, 1, 64, 128>}, {pipeline_mode = #tpu.pipeline_mode<synchronous>, transform_indices = @transform_1, window_bounds = array<i64: 1, 128>}, {pipeline_mode = #tpu.pipeline_mode<synchronous>, transform_indices = @transform_2, window_bounds = array<i64: 1, 128>}, {transform_indices = @transform_3, window_bounds = array<i64: 1, 1, 64, 128>}, {transform_indices = @transform_4, window_bounds = array<i64: 1, 1, 64, 128>}]} {
    %c0 = arith.constant 0 : index
    %c0_0 = arith.constant 0 : index
    %c0_1 = arith.constant 0 : index
    %c0_2 = arith.constant 0 : index
    %0 = vector.load %arg2[%c0, %c0_0, %c0_1, %c0_2] : memref<1x1x64x128xf32, #tpu.memory_space<vmem>>, vector<1x1x64x128xf32>
    %1 = vector.shape_cast %0 : vector<1x1x64x128xf32> to vector<64x128xf32>
    %c0_3 = arith.constant 0 : index
    %c0_4 = arith.constant 0 : index
    %2 = vector.load %arg3[%c0_3, %c0_4] : memref<1x128xf32, #tpu.memory_space<vmem>>, vector<1x128xf32>
    %3 = vector.broadcast %2 : vector<1x128xf32> to vector<64x128xf32>
    %4 = arith.mulf %1, %3 : vector<64x128xf32>
    %c0_5 = arith.constant 0 : index
    %c0_6 = arith.constant 0 : index
    %5 = vector.load %arg4[%c0_5, %c0_6] : memref<1x128xf32, #tpu.memory_space<vmem>>, vector<1x128xf32>
    %6 = vector.broadcast %5 : vector<1x128xf32> to vector<64x128xf32>
    %7 = arith.addf %4, %6 : vector<64x128xf32>
    %c0_7 = arith.constant 0 : index
    %c0_8 = arith.constant 0 : index
    %c0_9 = arith.constant 0 : index
    %c0_10 = arith.constant 0 : index
    %8 = vector.load %arg5[%c0_7, %c0_8, %c0_9, %c0_10] : memref<1x1x64x128xf32, #tpu.memory_space<vmem>>, vector<1x1x64x128xf32>
    %9 = vector.shape_cast %8 : vector<1x1x64x128xf32> to vector<64x128xf32>
    %10 = arith.addf %7, %9 : vector<64x128xf32>
    %cst = arith.constant 0.000000e+00 : f32
    %11 = vector.broadcast %cst : f32 to vector<64x128xf32>
    %12 = arith.maximumf %10, %11 : vector<64x128xf32>
    %c0_11 = arith.constant 0 : index
    %c0_12 = arith.constant 0 : index
    %c0_13 = arith.constant 0 : index
    %c0_14 = arith.constant 0 : index
    %13 = vector.load %arg6[%c0_11, %c0_12, %c0_13, %c0_14] : memref<1x1x64x128xf32, #tpu.memory_space<vmem>>, vector<1x1x64x128xf32>
    %14 = vector.shape_cast %13 : vector<1x1x64x128xf32> to vector<64x128xf32>
    %15 = vector.shape_cast %12 : vector<64x128xf32> to vector<1x1x64x128xf32>
    tpu.vector_store %arg6[%c0_11, %c0_12, %c0_13, %c0_14], %15 {strides = array<i32>} : memref<1x1x64x128xf32, #tpu.memory_space<vmem>>, vector<1x1x64x128xf32>,
    return
  }
  func.func @transform_0(%arg0: i32, %arg1: i32) -> (i32, i32, i32, i32) {
    %c0_i32 = arith.constant 0 : i32
    %c0_i32_0 = arith.constant 0 : i32
    %c0_i32_1 = arith.constant 0 : i32
    return %arg0, %arg1, %c0_i32, %c0_i32_0 : i32, i32, i32, i32
  }
  func.func @transform_1(%arg0: i32, %arg1: i32) -> (i32, i32) {
    %c0_i32 = arith.constant 0 : i32
    %c0_i32_0 = arith.constant 0 : i32
    %c0_i32_1 = arith.constant 0 : i32
    return %c0_i32, %c0_i32_0 : i32, i32
  }
  func.func @transform_2(%arg0: i32, %arg1: i32) -> (i32, i32) {
    %c0_i32 = arith.constant 0 : i32
    %c0_i32_0 = arith.constant 0 : i32
    %c0_i32_1 = arith.constant 0 : i32
    return %c0_i32, %c0_i32_0 : i32, i32
  }
  func.func @transform_3(%arg0: i32, %arg1: i32) -> (i32, i32, i32, i32) {
    %c0_i32 = arith.constant 0 : i32
    %c0_i32_0 = arith.constant 0 : i32
    %c0_i32_1 = arith.constant 0 : i32
    return %arg0, %arg1, %c0_i32, %c0_i32_0 : i32, i32, i32, i32
  }
  func.func @transform_4(%arg0: i32, %arg1: i32) -> (i32, i32, i32, i32) {
    %c0_i32 = arith.constant 0 : i32
    %c0_i32_0 = arith.constant 0 : i32
    %c0_i32_1 = arith.constant 0 : i32
    return %arg0, %arg1, %c0_i32, %c0_i32_0 : i32, i32, i32, i32
  }
}

</mosaic_0001>

<llo_original>
// kernel: basic_block_forward.7
$region0: #{basic_block_forward.7}
  #allocation0 [shape = 'u32[]', space=smem, size = 0x4, offset = 0x4, fixed_abs, tag = 'smem constant byte address 0x4 - core index']
  #allocation1 [shape = 'u32[144,128]{1,0:T(1,128)}', space=vmem, size = 0x12000, scoped, tag = 'internal scratch']
  %s0 = inlined_call_operand.vmem [shape: f32[2,8,64,128], index: 0, kind: input, shape index: {}]
  %s1 = inlined_call_operand.vmem [shape: f32[1,128], index: 1, kind: input, shape index: {}]
  %s2 = inlined_call_operand.vmem [shape: f32[1,128], index: 2, kind: input, shape index: {}]
  %s3 = inlined_call_operand.vmem [shape: f32[2,8,64,128], index: 3, kind: input, shape index: {}]
  %s4 = inlined_call_operand.vmem [shape: f32[2,8,64,128], index: 4, kind: output, shape index: {}]
  %s5 = sld [smem:[#allocation0]]
  $region49: #{basic_block_forward.7} parent=0
    _
  %s7 = ssub.s32 1, %s5
  %s8 = scalar_select 0, %s7, %s5
  loop: start=0, step=1, limit=18
  $region2: #{basic_block_forward.7} parent=0 // loop_pre_header
    _
  $region3: #{basic_block_forward.7} parent=0 // loop_header
    %s10 = sphi 0, %s14
    %p11 = scmp.ge.s32.totalorder %s10, 18
    %s17 = sphi 0, %s29
    %s18 = sphi 0, %s25
    %s19 = sphi 0, %s17
    %s20 = sphi 0, %s18
    %s21 = sphi 0, %s19
    %s22 = sphi 0, %s20
    %s34 = sphi 0, %s36
    %s37 = sphi 0, %s34
    %s38 = sphi 0, %s37
    %s54 = sphi 0, %s38
    %s58 = sphi 0, %s58
    %s60 = sphi 0, %s58
    %s61 = sphi 0, %s60
    %s75 = sphi 0, %s61
    %s79 = sphi 0, %s79
    %s81 = sphi 0, %s79
    %s82 = sphi 0, %s81
    %s96 = sphi 0, %s82
    %s104 = sphi 0, %s106
    %s107 = sphi 0, %s104
    %s108 = sphi 0, %s107
    %s124 = sphi 0, %s108
    %s132 = sphi 0, %s134
    %s135 = sphi 0, %s132
    %s136 = sphi 0, %s135
    %s152 = sphi 0, %s136
  $region4: #{basic_block_forward.7} parent=0 // loop_header_branch
    %13 = sbr.rel (%p11) target = $region8
  $region5: #{basic_block_forward.7} parent=0 // loop_body
    %s15 = ssub.s32 %s10, 1
    %s16 = ssub.s32 %s10, 2
    %s23 = sadd.s32 1, %s18
    %p24 = scmp.ge.s32.totalorder %s23, 8
    %s25 = scalar_select %p24, 0, %s23
    %s26 = sadd.s32 1, %s17
    %s27 = scalar_select %p24, %s26, %s17
    %p28 = scmp.ge.s32.totalorder %s27, 2
    %s29 = scalar_select %p28, 0, %s27
    %s30 = ssub.s32 %s17, %s29
    %s31 = ssub.s32 %s18, %s25
    %s32 = sor.u32 %s30, %s31
    %p33 = scmp.eq.s32.totalorder %s32, 0
    %s35 = sadd.s32 %s34, 1
    %s36 = scalar_select %p33, %s34, %s35
    %p39 = pneg %p33
    %p40 = scmp.eq.s32.totalorder %s10, 15
    %p41 = por %p39, %p40
    %p42 = scmp.ne.s32.totalorder %s34, %s37
    %p43 = scmp.eq.s32.totalorder %s10, 0
    %p44 = por %p42, %p43
    %p45 = scmp.ne.s32.totalorder %s34, %s37
    %p46 = scmp.eq.s32.totalorder %s15, 15
    %p47 = por %p45, %p46
    %p48 = scmp.ne.s32.totalorder %s37, %s38
    %p49 = scmp.eq.s32.totalorder %s15, 0
    %p50 = por %p48, %p49
    %p51 = scmp.ne.s32.totalorder %s37, %s38
    %p52 = scmp.eq.s32.totalorder %s16, 15
    %p53 = por %p51, %p52
    %p55 = scmp.ne.s32.totalorder %s38, %s54
    %p56 = scmp.eq.s32.totalorder %s16, 0
    %p57 = por %p55, %p56
    %s59 = sadd.s32 %s58, 1
    %p62 = scmp.eq.s32.totalorder %s10, 15
    %p63 = scmp.ne.s32.totalorder %s58, %s60
    %p64 = scmp.eq.s32.totalorder %s10, 0
    %p65 = por %p63, %p64
    %p66 = scmp.ne.s32.totalorder %s58, %s60
    %p67 = scmp.eq.s32.totalorder %s15, 15
    %p68 = por %p66, %p67
    %p69 = scmp.ne.s32.totalorder %s60, %s61
    %p70 = scmp.eq.s32.totalorder %s15, 0
    %p71 = por %p69, %p70
    %p72 = scmp.ne.s32.totalorder %s60, %s61
    %p73 = scmp.eq.s32.totalorder %s16, 15
    %p74 = por %p72, %p73
    %p76 = scmp.ne.s32.totalorder %s61, %s75
    %p77 = scmp.eq.s32.totalorder %s16, 0
    %p78 = por %p76, %p77
    %s80 = sadd.s32 %s79, 1
    %p83 = scmp.eq.s32.totalorder %s10, 15
    %p84 = scmp.ne.s32.totalorder %s79, %s81
    %p85 = scmp.eq.s32.totalorder %s10, 0
    %p86 = por %p84, %p85
    %p87 = scmp.ne.s32.totalorder %s79, %s81
    %p88 = scmp.eq.s32.totalorder %s15, 15
    %p89 = por %p87, %p88
    %p90 = scmp.ne.s32.totalorder %s81, %s82
    %p91 = scmp.eq.s32.totalorder %s15, 0
    %p92 = por %p90, %p91
    %p93 = scmp.ne.s32.totalorder %s81, %s82
    %p94 = scmp.eq.s32.totalorder %s16, 15
    %p95 = por %p93, %p94
    %p97 = scmp.ne.s32.totalorder %s82, %s96
    %p98 = scmp.eq.s32.totalorder %s16, 0
    %p99 = por %p97, %p98
    %s100 = ssub.s32 %s17, %s29
    %s101 = ssub.s32 %s18, %s25
    %s102 = sor.u32 %s100, %s101
    %p103 = scmp.eq.s32.totalorder %s102, 0
    %s105 = sadd.s32 %s104, 1
    %s106 = scalar_select %p103, %s104, %s105
    %p109 = pneg %p103
    %p110 = scmp.eq.s32.totalorder %s10, 15
    %p111 = por %p109, %p110
    %p112 = scmp.ne.s32.totalorder %s104, %s107
    %p113 = scmp.eq.s32.totalorder %s10, 0
    %p114 = por %p112, %p113
    %p115 = scmp.ne.s32.totalorder %s104, %s107
    %p116 = scmp.eq.s32.totalorder %s15, 15
    %p117 = por %p115, %p116
    %p118 = scmp.ne.s32.totalorder %s107, %s108
    %p119 = scmp.eq.s32.totalorder %s15, 0
    %p120 = por %p118, %p119
    %p121 = scmp.ne.s32.totalorder %s107, %s108
    %p122 = scmp.eq.s32.totalorder %s16, 15
    %p123 = por %p121, %p122
    %p125 = scmp.ne.s32.totalorder %s108, %s124
    %p126 = scmp.eq.s32.totalorder %s16, 0
    %p127 = por %p125, %p126
    %s128 = ssub.s32 %s17, %s29
    %s129 = ssub.s32 %s18, %s25
    %s130 = sor.u32 %s128, %s129
    %p131 = scmp.eq.s32.totalorder %s130, 0
    %s133 = sadd.s32 %s132, 1
    %s134 = scalar_select %p131, %s132, %s133
    %p137 = pneg %p131
    %p138 = scmp.eq.s32.totalorder %s10, 15
    %p139 = por %p137, %p138
    %p140 = scmp.ne.s32.totalorder %s132, %s135
    %p141 = scmp.eq.s32.totalorder %s10, 0
    %p142 = por %p140, %p141
    %p143 = scmp.ne.s32.totalorder %s132, %s135
    %p144 = scmp.eq.s32.totalorder %s15, 15
    %p145 = por %p143, %p144
    %p146 = scmp.ne.s32.totalorder %s135, %s136
    %p147 = scmp.eq.s32.totalorder %s15, 0
    %p148 = por %p146, %p147
    %p149 = scmp.ne.s32.totalorder %s135, %s136
    %p150 = scmp.eq.s32.totalorder %s16, 15
    %p151 = por %p149, %p150
    %p153 = scmp.ne.s32.totalorder %s136, %s152
    %p154 = scmp.eq.s32.totalorder %s16, 0
    %p155 = por %p153, %p154
    %p156 = scmp.le.s32.totalorder 1, %s10
    %p157 = scmp.lt.s32.totalorder %s10, 17
    %p158 = pnand %p156, %p157
    %p159 = pneg %p158
    // Predicated region
    $region9: #{basic_block_forward.7} parent=5 // pred_check
      _
    $region10: #{basic_block_forward.7} parent=5 // pred_check_branch
      %161 = sbr.rel (%p158) target = $region12
    $region11: #{basic_block_forward.7} parent=5 // pred_region
      %s162 = ssub.s32 %s10, 1
      // Predicated region
      $region13: #{basic_block_forward.7} parent=11 // pred_check
        %p163 = pneg %p71
      $region14: #{basic_block_forward.7} parent=11 // pred_check_branch
        %165 = sbr.rel (%p163) target = $region16
      $region15: #{basic_block_forward.7} parent=11 // pred_region
        _
      $region16: #{basic_block_forward.7} parent=11 // pred_fallthru
        _
      // Predicated region
      $region17: #{basic_block_forward.7} parent=11 // pred_check
        %p166 = pneg %p92
      $region18: #{basic_block_forward.7} parent=11 // pred_check_branch
        %168 = sbr.rel (%p166) target = $region20
      $region19: #{basic_block_forward.7} parent=11 // pred_region
        _
      $region20: #{basic_block_forward.7} parent=11 // pred_fallthru
        _
    $region12: #{basic_block_forward.7} parent=5 // pred_fallthru
      _
    %p169 = scmp.lt.s32.totalorder %s10, 16
    // Predicated region
    $region21: #{basic_block_forward.7} parent=5 // pred_check
      %p170 = pneg %p169
    $region22: #{basic_block_forward.7} parent=5 // pred_check_branch
      %172 = sbr.rel (%p170) target = $region24
    $region23: #{basic_block_forward.7} parent=5 // pred_region
      // Predicated region
      $region25: #{basic_block_forward.7} parent=23 // pred_check
        %p173 = pneg %p44
      $region26: #{basic_block_forward.7} parent=23 // pred_check_branch
        %175 = sbr.rel (%p173) target = $region28
      $region27: #{basic_block_forward.7} parent=23 // pred_region
        %p176 = scmp.lt.s32.totalorder %s17, 1
        %s177 = scalar_select %p176, %s17, 1
        %p178 = scmp.lt.s32.totalorder %s18, 7
        %s179 = scalar_select %p178, %s18, 7
        %s180 = smul.addr %s179, 8
        %s181 = smul.addr %s177, 64
        %s182 = sadd.s32 %s180, %s181
        %s183 = smul.addr %s182, 8
        %s184 = scalar_lea.vmem %s0, %s183
      $region28: #{basic_block_forward.7} parent=23 // pred_fallthru
        _
      // Predicated region
      $region29: #{basic_block_forward.7} parent=23 // pred_check
        %p185 = pneg %p114
      $region30: #{basic_block_forward.7} parent=23 // pred_check_branch
        %187 = sbr.rel (%p185) target = $region32
      $region31: #{basic_block_forward.7} parent=23 // pred_region
        %p188 = scmp.lt.s32.totalorder %s17, 1
        %s189 = scalar_select %p188, %s17, 1
        %p190 = scmp.lt.s32.totalorder %s18, 7
        %s191 = scalar_select %p190, %s18, 7
        %s192 = smul.addr %s191, 8
        %s193 = smul.addr %s189, 64
        %s194 = sadd.s32 %s192, %s193
        %s195 = smul.addr %s194, 8
        %s196 = scalar_lea.vmem %s3, %s195
      $region32: #{basic_block_forward.7} parent=23 // pred_fallthru
        _
    $region24: #{basic_block_forward.7} parent=5 // pred_fallthru
      _
    %p197 = scmp.le.s32.totalorder 1, %s10
    %p198 = scmp.lt.s32.totalorder %s10, 17
    %p199 = pnand %p197, %p198
    %p200 = pneg %p199
    // Predicated region
    $region33: #{basic_block_forward.7} parent=5 // pred_check
      _
    $region34: #{basic_block_forward.7} parent=5 // pred_check_branch
      %202 = sbr.rel (%p199) target = $region36
    $region35: #{basic_block_forward.7} parent=5 // pred_region
      %s203 = ssub.s32 %s10, 1
      %p204 = scmp.lt.s32.totalorder %s19, 1
      %s205 = scalar_select %p204, %s19, 1
      %p206 = scmp.lt.s32.totalorder %s20, 7
      %s207 = scalar_select %p206, %s20, 7
      %s208 = smul.addr %s207, 8
      %s209 = smul.addr %s205, 64
      %s210 = sadd.s32 %s208, %s209
      %s211 = smul.addr %s210, 8
      %s212 = scalar_lea.vmem %s0, %s211
      %p213 = pneg %p50
      %p214 = pneg %p47
      %p215 = pneg %p71
      %p216 = pneg %p68
      %p217 = pneg %p92
      %p218 = pneg %p89
      %p219 = scmp.lt.s32.totalorder %s19, 1
      %s220 = scalar_select %p219, %s19, 1
      %p221 = scmp.lt.s32.totalorder %s20, 7
      %s222 = scalar_select %p221, %s20, 7
      %s223 = smul.addr %s222, 8
      %s224 = smul.addr %s220, 64
      %s225 = sadd.s32 %s223, %s224
      %s226 = smul.addr %s225, 8
      %s227 = scalar_lea.vmem %s3, %s226
      %p228 = pneg %p120
      %p229 = pneg %p117
      %p230 = pneg %p148
      %p231 = pneg %p145
      %p232 = scmp.lt.s32.totalorder %s19, 1
      %s233 = scalar_select %p232, %s19, 1
      %p234 = scmp.lt.s32.totalorder %s20, 7
      %s235 = scalar_select %p234, %s20, 7
      %s236 = smul.addr %s235, 8
      %s237 = smul.addr %s233, 64
      %s238 = sadd.s32 %s236, %s237
      %s239 = smul.addr %s238, 8
      %s240 = scalar_lea.vmem %s4, %s239
      %p241 = scmp.lt.s32.totalorder %s19, 1
      %s242 = scalar_select %p241, %s19, 1
      %p243 = scmp.lt.s32.totalorder %s20, 7
      %s244 = scalar_select %p243, %s20, 7
      %s245 = smul.addr %s244, 8
      %s246 = smul.addr %s242, 64
      %s247 = sadd.s32 %s245, %s246
      %s248 = smul.addr %s247, 8
      %s249 = scalar_lea.vmem %s0, %s248
      %p250 = scmp.lt.s32.totalorder %s19, 1
      %s251 = scalar_select %p250, %s19, 1
      %p252 = scmp.lt.s32.totalorder %s20, 7
      %s253 = scalar_select %p252, %s20, 7
      %s254 = smul.addr %s253, 8
      %s255 = smul.addr %s251, 64
      %s256 = sadd.s32 %s254, %s255
      %s257 = smul.addr %s256, 8
      %s258 = scalar_lea.vmem %s3, %s257
      %p259 = scmp.lt.s32.totalorder %s19, 1
      %s260 = scalar_select %p259, %s19, 1
      %p261 = scmp.lt.s32.totalorder %s20, 7
      %s262 = scalar_select %p261, %s20, 7
      %s263 = smul.addr %s262, 8
      %s264 = smul.addr %s260, 64
      %s265 = sadd.s32 %s263, %s264
      %s266 = smul.addr %s265, 8
      %s267 = scalar_lea.vmem %s4, %s266
      %v268 = vld [vmem:[%s249] sm:$0xff]
      %v269 = vld [vmem:[%s249 + $0x8] sm:$0xff]
      %v270 = vld [vmem:[%s249 + $0x10] sm:$0xff]
      %v271 = vld [vmem:[%s249 + $0x18] sm:$0xff]
      %v272 = vld [vmem:[%s249 + $0x20] sm:$0xff]
      %v273 = vld [vmem:[%s249 + $0x28] sm:$0xff]
      %v274 = vld [vmem:[%s249 + $0x30] sm:$0xff]
      %v275 = vld [vmem:[%s249 + $0x38] sm:$0xff]
      %v276 = vld [vmem:[%s1] sm:$0x1]
      %v278 = vlaneseq
      %v279 = vshrl.u32 %v278, 7
      %v280 = vsub.s32 0, %v279
      %v281 = vrot.slane %v276, %v280
      %v283 = vmul.f32 %v268, %v281
      %v284 = vmul.f32 %v269, %v281
      %v285 = vmul.f32 %v270, %v281
      %v286 = vmul.f32 %v271, %v281
      %v287 = vmul.f32 %v272, %v281
      %v288 = vmul.f32 %v273, %v281
      %v289 = vmul.f32 %v274, %v281
      %v290 = vmul.f32 %v275, %v281
      %v291 = vld [vmem:[%s2] sm:$0x1]
      %v293 = vlaneseq
      %v294 = vshrl.u32 %v293, 7
      %v295 = vsub.s32 0, %v294
      %v296 = vrot.slane %v291, %v295
      %v298 = vadd.f32 %v283, %v296
      %v299 = vadd.f32 %v284, %v296
      %v300 = vadd.f32 %v285, %v296
      %v301 = vadd.f32 %v286, %v296
      %v302 = vadd.f32 %v287, %v296
      %v303 = vadd.f32 %v288, %v296
      %v304 = vadd.f32 %v289, %v296
      %v305 = vadd.f32 %v290, %v296
      %v306 = vld [vmem:[%s258] sm:$0xff]
      %v307 = vld [vmem:[%s258 + $0x8] sm:$0xff]
      %v308 = vld [vmem:[%s258 + $0x10] sm:$0xff]
      %v309 = vld [vmem:[%s258 + $0x18] sm:$0xff]
      %v310 = vld [vmem:[%s258 + $0x20] sm:$0xff]
      %v311 = vld [vmem:[%s258 + $0x28] sm:$0xff]
      %v312 = vld [vmem:[%s258 + $0x30] sm:$0xff]
      %v313 = vld [vmem:[%s258 + $0x38] sm:$0xff]
      %v314 = vadd.f32 %v298, %v306
      %v315 = vadd.f32 %v299, %v307
      %v316 = vadd.f32 %v300, %v308
      %v317 = vadd.f32 %v301, %v309
      %v318 = vadd.f32 %v302, %v310
      %v319 = vadd.f32 %v303, %v311
      %v320 = vadd.f32 %v304, %v312
      %v321 = vadd.f32 %v305, %v313
      %v322 = vmax.f32 %v314, 0.0
      %v323 = vmax.f32 %v315, 0.0
      %v324 = vmax.f32 %v316, 0.0
      %v325 = vmax.f32 %v317, 0.0
      %v326 = vmax.f32 %v318, 0.0
      %v327 = vmax.f32 %v319, 0.0
      %v328 = vmax.f32 %v320, 0.0
      %v329 = vmax.f32 %v321, 0.0
      %330 = vst [vmem:[%s267] sm:$0xff] %v322
      %331 = vst [vmem:[%s267 + $0x8] sm:$0xff] %v323
      %332 = vst [vmem:[%s267 + $0x10] sm:$0xff] %v324
      %333 = vst [vmem:[%s267 + $0x18] sm:$0xff] %v325
      %334 = vst [vmem:[%s267 + $0x20] sm:$0xff] %v326
      %335 = vst [vmem:[%s267 + $0x28] sm:$0xff] %v327
      %336 = vst [vmem:[%s267 + $0x30] sm:$0xff] %v328
      %337 = vst [vmem:[%s267 + $0x38] sm:$0xff] %v329
      %p338 = scmp.lt.s32.totalorder %s19, 1
      %s339 = scalar_select %p338, %s19, 1
      %p340 = scmp.lt.s32.totalorder %s20, 7
      %s341 = scalar_select %p340, %s20, 7
      %s342 = smul.addr %s341, 8
      %s343 = smul.addr %s339, 64
      %s344 = sadd.s32 %s342, %s343
      %s345 = smul.addr %s344, 8
      %s346 = scalar_lea.vmem %s4, %s345
      // Predicated region
      $region37: #{basic_block_forward.7} parent=35 // pred_check
        %p347 = pneg %p145
      $region38: #{basic_block_forward.7} parent=35 // pred_check_branch
        %349 = sbr.rel (%p347) target = $region40
      $region39: #{basic_block_forward.7} parent=35 // pred_region
        _
      $region40: #{basic_block_forward.7} parent=35 // pred_fallthru
        _
    $region36: #{basic_block_forward.7} parent=5 // pred_fallthru
      _
    %p350 = scmp.le.s32.totalorder 2, %s10
    // Predicated region
    $region41: #{basic_block_forward.7} parent=5 // pred_check
      %p351 = pneg %p350
    $region42: #{basic_block_forward.7} parent=5 // pred_check_branch
      %353 = sbr.rel (%p351) target = $region44
    $region43: #{basic_block_forward.7} parent=5 // pred_region
      %s354 = ssub.s32 %s10, 2
      // Predicated region
      $region45: #{basic_block_forward.7} parent=43 // pred_check
        %p355 = pneg %p151
      $region46: #{basic_block_forward.7} parent=43 // pred_check_branch
        %357 = sbr.rel (%p355) target = $region48
      $region47: #{basic_block_forward.7} parent=43 // pred_region
        %p358 = scmp.lt.s32.totalorder %s21, 1
        %s359 = scalar_select %p358, %s21, 1
        %p360 = scmp.lt.s32.totalorder %s22, 7
        %s361 = scalar_select %p360, %s22, 7
        %s362 = smul.addr %s361, 8
        %s363 = smul.addr %s359, 64
        %s364 = sadd.s32 %s362, %s363
        %s365 = smul.addr %s364, 8
        %s366 = scalar_lea.vmem %s4, %s365
      $region48: #{basic_block_forward.7} parent=43 // pred_fallthru
        _
    $region44: #{basic_block_forward.7} parent=5 // pred_fallthru
      _
  $region6: #{basic_block_forward.7} parent=0 // loop_footer
    %s14 = sadd.s32 1, %s10
  $region7: #{basic_block_forward.7} parent=0 // loop_footer_branch
    %9 = sbr.rel target = $region3
  $region8: #{basic_block_forward.7} parent=0 // loop_exit
    _

// kernel: basic_block_forward.5
$region0: #{basic_block_forward.5}
  #allocation0 [shape = 'u32[]', space=smem, size = 0x4, offset = 0x4, fixed_abs, tag = 'smem constant byte address 0x4 - core index']
  #allocation1 [shape = 'u32[144,128]{1,0:T(1,128)}', space=vmem, size = 0x12000, scoped, tag = 'internal scratch']
  %s0 = inlined_call_operand.vmem [shape: f32[2,8,64,128], index: 0, kind: input, shape index: {}]
  %s1 = inlined_call_operand.vmem [shape: f32[1,128], index: 1, kind: input, shape index: {}]
  %s2 = inlined_call_operand.vmem [shape: f32[1,128], index: 2, kind: input, shape index: {}]
  %s3 = inlined_call_operand.vmem [shape: f32[2,8,64,128], index: 3, kind: output, shape index: {}]
  %s4 = sld [smem:[#allocation0]]
  $region45: #{basic_block_forward.5} parent=0
    _
  %s6 = ssub.s32 1, %s4
  %s7 = scalar_select 0, %s6, %s4
  loop: start=0, step=1, limit=18
  $region2: #{basic_block_forward.5} parent=0 // loop_pre_header
    _
  $region3: #{basic_block_forward.5} parent=0 // loop_header
    %s9 = sphi 0, %s13
    %p10 = scmp.ge.s32.totalorder %s9, 18
    %s16 = sphi 0, %s28
    %s17 = sphi 0, %s24
    %s18 = sphi 0, %s16
    %s19 = sphi 0, %s17
    %s20 = sphi 0, %s18
    %s21 = sphi 0, %s19
    %s33 = sphi 0, %s35
    %s36 = sphi 0, %s33
    %s37 = sphi 0, %s36
    %s53 = sphi 0, %s37
    %s57 = sphi 0, %s57
    %s59 = sphi 0, %s57
    %s60 = sphi 0, %s59
    %s74 = sphi 0, %s60
    %s78 = sphi 0, %s78
    %s80 = sphi 0, %s78
    %s81 = sphi 0, %s80
    %s95 = sphi 0, %s81
    %s103 = sphi 0, %s105
    %s106 = sphi 0, %s103
    %s107 = sphi 0, %s106
    %s123 = sphi 0, %s107
  $region4: #{basic_block_forward.5} parent=0 // loop_header_branch
    %12 = sbr.rel (%p10) target = $region8
  $region5: #{basic_block_forward.5} parent=0 // loop_body
    %s14 = ssub.s32 %s9, 1
    %s15 = ssub.s32 %s9, 2
    %s22 = sadd.s32 1, %s17
    %p23 = scmp.ge.s32.totalorder %s22, 8
    %s24 = scalar_select %p23, 0, %s22
    %s25 = sadd.s32 1, %s16
    %s26 = scalar_select %p23, %s25, %s16
    %p27 = scmp.ge.s32.totalorder %s26, 2
    %s28 = scalar_select %p27, 0, %s26
    %s29 = ssub.s32 %s16, %s28
    %s30 = ssub.s32 %s17, %s24
    %s31 = sor.u32 %s29, %s30
    %p32 = scmp.eq.s32.totalorder %s31, 0
    %s34 = sadd.s32 %s33, 1
    %s35 = scalar_select %p32, %s33, %s34
    %p38 = pneg %p32
    %p39 = scmp.eq.s32.totalorder %s9, 15
    %p40 = por %p38, %p39
    %p41 = scmp.ne.s32.totalorder %s33, %s36
    %p42 = scmp.eq.s32.totalorder %s9, 0
    %p43 = por %p41, %p42
    %p44 = scmp.ne.s32.totalorder %s33, %s36
    %p45 = scmp.eq.s32.totalorder %s14, 15
    %p46 = por %p44, %p45
    %p47 = scmp.ne.s32.totalorder %s36, %s37
    %p48 = scmp.eq.s32.totalorder %s14, 0
    %p49 = por %p47, %p48
    %p50 = scmp.ne.s32.totalorder %s36, %s37
    %p51 = scmp.eq.s32.totalorder %s15, 15
    %p52 = por %p50, %p51
    %p54 = scmp.ne.s32.totalorder %s37, %s53
    %p55 = scmp.eq.s32.totalorder %s15, 0
    %p56 = por %p54, %p55
    %s58 = sadd.s32 %s57, 1
    %p61 = scmp.eq.s32.totalorder %s9, 15
    %p62 = scmp.ne.s32.totalorder %s57, %s59
    %p63 = scmp.eq.s32.totalorder %s9, 0
    %p64 = por %p62, %p63
    %p65 = scmp.ne.s32.totalorder %s57, %s59
    %p66 = scmp.eq.s32.totalorder %s14, 15
    %p67 = por %p65, %p66
    %p68 = scmp.ne.s32.totalorder %s59, %s60
    %p69 = scmp.eq.s32.totalorder %s14, 0
    %p70 = por %p68, %p69
    %p71 = scmp.ne.s32.totalorder %s59, %s60
    %p72 = scmp.eq.s32.totalorder %s15, 15
    %p73 = por %p71, %p72
    %p75 = scmp.ne.s32.totalorder %s60, %s74
    %p76 = scmp.eq.s32.totalorder %s15, 0
    %p77 = por %p75, %p76
    %s79 = sadd.s32 %s78, 1
    %p82 = scmp.eq.s32.totalorder %s9, 15
    %p83 = scmp.ne.s32.totalorder %s78, %s80
    %p84 = scmp.eq.s32.totalorder %s9, 0
    %p85 = por %p83, %p84
    %p86 = scmp.ne.s32.totalorder %s78, %s80
    %p87 = scmp.eq.s32.totalorder %s14, 15
    %p88 = por %p86, %p87
    %p89 = scmp.ne.s32.totalorder %s80, %s81
    %p90 = scmp.eq.s32.totalorder %s14, 0
    %p91 = por %p89, %p90
    %p92 = scmp.ne.s32.totalorder %s80, %s81
    %p93 = scmp.eq.s32.totalorder %s15, 15
    %p94 = por %p92, %p93
    %p96 = scmp.ne.s32.totalorder %s81, %s95
    %p97 = scmp.eq.s32.totalorder %s15, 0
    %p98 = por %p96, %p97
    %s99 = ssub.s32 %s16, %s28
    %s100 = ssub.s32 %s17, %s24
    %s101 = sor.u32 %s99, %s100
    %p102 = scmp.eq.s32.totalorder %s101, 0
    %s104 = sadd.s32 %s103, 1
    %s105 = scalar_select %p102, %s103, %s104
    %p108 = pneg %p102
    %p109 = scmp.eq.s32.totalorder %s9, 15
    %p110 = por %p108, %p109
    %p111 = scmp.ne.s32.totalorder %s103, %s106
    %p112 = scmp.eq.s32.totalorder %s9, 0
    %p113 = por %p111, %p112
    %p114 = scmp.ne.s32.totalorder %s103, %s106
    %p115 = scmp.eq.s32.totalorder %s14, 15
    %p116 = por %p114, %p115
    %p117 = scmp.ne.s32.totalorder %s106, %s107
    %p118 = scmp.eq.s32.totalorder %s14, 0
    %p119 = por %p117, %p118
    %p120 = scmp.ne.s32.totalorder %s106, %s107
    %p121 = scmp.eq.s32.totalorder %s15, 15
    %p122 = por %p120, %p121
    %p124 = scmp.ne.s32.totalorder %s107, %s123
    %p125 = scmp.eq.s32.totalorder %s15, 0
    %p126 = por %p124, %p125
    %p127 = scmp.le.s32.totalorder 1, %s9
    %p128 = scmp.lt.s32.totalorder %s9, 17
    %p129 = pnand %p127, %p128
    %p130 = pneg %p129
    // Predicated region
    $region9: #{basic_block_forward.5} parent=5 // pred_check
      _
    $region10: #{basic_block_forward.5} parent=5 // pred_check_branch
      %132 = sbr.rel (%p129) target = $region12
    $region11: #{basic_block_forward.5} parent=5 // pred_region
      %s133 = ssub.s32 %s9, 1
      // Predicated region
      $region13: #{basic_block_forward.5} parent=11 // pred_check
        %p134 = pneg %p70
      $region14: #{basic_block_forward.5} parent=11 // pred_check_branch
        %136 = sbr.rel (%p134) target = $region16
      $region15: #{basic_block_forward.5} parent=11 // pred_region
        _
      $region16: #{basic_block_forward.5} parent=11 // pred_fallthru
        _
      // Predicated region
      $region17: #{basic_block_forward.5} parent=11 // pred_check
        %p137 = pneg %p91
      $region18: #{basic_block_forward.5} parent=11 // pred_check_branch
        %139 = sbr.rel (%p137) target = $region20
      $region19: #{basic_block_forward.5} parent=11 // pred_region
        _
      $region20: #{basic_block_forward.5} parent=11 // pred_fallthru
        _
    $region12: #{basic_block_forward.5} parent=5 // pred_fallthru
      _
    %p140 = scmp.lt.s32.totalorder %s9, 16
    // Predicated region
    $region21: #{basic_block_forward.5} parent=5 // pred_check
      %p141 = pneg %p140
    $region22: #{basic_block_forward.5} parent=5 // pred_check_branch
      %143 = sbr.rel (%p141) target = $region24
    $region23: #{basic_block_forward.5} parent=5 // pred_region
      // Predicated region
      $region25: #{basic_block_forward.5} parent=23 // pred_check
        %p144 = pneg %p43
      $region26: #{basic_block_forward.5} parent=23 // pred_check_branch
        %146 = sbr.rel (%p144) target = $region28
      $region27: #{basic_block_forward.5} parent=23 // pred_region
        %p147 = scmp.lt.s32.totalorder %s16, 1
        %s148 = scalar_select %p147, %s16, 1
        %p149 = scmp.lt.s32.totalorder %s17, 7
        %s150 = scalar_select %p149, %s17, 7
        %s151 = smul.addr %s150, 8
        %s152 = smul.addr %s148, 64
        %s153 = sadd.s32 %s151, %s152
        %s154 = smul.addr %s153, 8
        %s155 = scalar_lea.vmem %s0, %s154
      $region28: #{basic_block_forward.5} parent=23 // pred_fallthru
        _
    $region24: #{basic_block_forward.5} parent=5 // pred_fallthru
      _
    %p156 = scmp.le.s32.totalorder 1, %s9
    %p157 = scmp.lt.s32.totalorder %s9, 17
    %p158 = pnand %p156, %p157
    %p159 = pneg %p158
    // Predicated region
    $region29: #{basic_block_forward.5} parent=5 // pred_check
      _
    $region30: #{basic_block_forward.5} parent=5 // pred_check_branch
      %161 = sbr.rel (%p158) target = $region32
    $region31: #{basic_block_forward.5} parent=5 // pred_region
      %s162 = ssub.s32 %s9, 1
      %p163 = scmp.lt.s32.totalorder %s18, 1
      %s164 = scalar_select %p163, %s18, 1
      %p165 = scmp.lt.s32.totalorder %s19, 7
      %s166 = scalar_select %p165, %s19, 7
      %s167 = smul.addr %s166, 8
      %s168 = smul.addr %s164, 64
      %s169 = sadd.s32 %s167, %s168
      %s170 = smul.addr %s169, 8
      %s171 = scalar_lea.vmem %s0, %s170
      %p172 = pneg %p49
      %p173 = pneg %p46
      %p174 = pneg %p70
      %p175 = pneg %p67
      %p176 = pneg %p91
      %p177 = pneg %p88
      %p178 = pneg %p119
      %p179 = pneg %p116
      %p180 = scmp.lt.s32.totalorder %s18, 1
      %s181 = scalar_select %p180, %s18, 1
      %p182 = scmp.lt.s32.totalorder %s19, 7
      %s183 = scalar_select %p182, %s19, 7
      %s184 = smul.addr %s183, 8
      %s185 = smul.addr %s181, 64
      %s186 = sadd.s32 %s184, %s185
      %s187 = smul.addr %s186, 8
      %s188 = scalar_lea.vmem %s3, %s187
      %p189 = scmp.lt.s32.totalorder %s18, 1
      %s190 = scalar_select %p189, %s18, 1
      %p191 = scmp.lt.s32.totalorder %s19, 7
      %s192 = scalar_select %p191, %s19, 7
      %s193 = smul.addr %s192, 8
      %s194 = smul.addr %s190, 64
      %s195 = sadd.s32 %s193, %s194
      %s196 = smul.addr %s195, 8
      %s197 = scalar_lea.vmem %s0, %s196
      %p198 = scmp.lt.s32.totalorder %s18, 1
      %s199 = scalar_select %p198, %s18, 1
      %p200 = scmp.lt.s32.totalorder %s19, 7
      %s201 = scalar_select %p200, %s19, 7
      %s202 = smul.addr %s201, 8
      %s203 = smul.addr %s199, 64
      %s204 = sadd.s32 %s202, %s203
      %s205 = smul.addr %s204, 8
      %s206 = scalar_lea.vmem %s3, %s205
      %v207 = vld [vmem:[%s197] sm:$0xff]
      %v208 = vld [vmem:[%s197 + $0x8] sm:$0xff]
      %v209 = vld [vmem:[%s197 + $0x10] sm:$0xff]
      %v210 = vld [vmem:[%s197 + $0x18] sm:$0xff]
      %v211 = vld [vmem:[%s197 + $0x20] sm:$0xff]
      %v212 = vld [vmem:[%s197 + $0x28] sm:$0xff]
      %v213 = vld [vmem:[%s197 + $0x30] sm:$0xff]
      %v214 = vld [vmem:[%s197 + $0x38] sm:$0xff]
      %v215 = vld [vmem:[%s1] sm:$0x1]
      %v217 = vlaneseq
      %v218 = vshrl.u32 %v217, 7
      %v219 = vsub.s32 0, %v218
      %v220 = vrot.slane %v215, %v219
      %v222 = vmul.f32 %v207, %v220
      %v223 = vmul.f32 %v208, %v220
      %v224 = vmul.f32 %v209, %v220
      %v225 = vmul.f32 %v210, %v220
      %v226 = vmul.f32 %v211, %v220
      %v227 = vmul.f32 %v212, %v220
      %v228 = vmul.f32 %v213, %v220
      %v229 = vmul.f32 %v214, %v220
      %v230 = vld [vmem:[%s2] sm:$0x1]
      %v232 = vlaneseq
      %v233 = vshrl.u32 %v232, 7
      %v234 = vsub.s32 0, %v233
      %v235 = vrot.slane %v230, %v234
      %v237 = vadd.f32 %v222, %v235
      %v238 = vadd.f32 %v223, %v235
      %v239 = vadd.f32 %v224, %v235
      %v240 = vadd.f32 %v225, %v235
      %v241 = vadd.f32 %v226, %v235
      %v242 = vadd.f32 %v227, %v235
      %v243 = vadd.f32 %v228, %v235
      %v244 = vadd.f32 %v229, %v235
      %v245 = vmax.f32 %v237, 0.0
      %v246 = vmax.f32 %v238, 0.0
      %v247 = vmax.f32 %v239, 0.0
      %v248 = vmax.f32 %v240, 0.0
      %v249 = vmax.f32 %v241, 0.0
      %v250 = vmax.f32 %v242, 0.0
      %v251 = vmax.f32 %v243, 0.0
      %v252 = vmax.f32 %v244, 0.0
      %253 = vst [vmem:[%s206] sm:$0xff] %v245
      %254 = vst [vmem:[%s206 + $0x8] sm:$0xff] %v246
      %255 = vst [vmem:[%s206 + $0x10] sm:$0xff] %v247
      %256 = vst [vmem:[%s206 + $0x18] sm:$0xff] %v248
      %257 = vst [vmem:[%s206 + $0x20] sm:$0xff] %v249
      %258 = vst [vmem:[%s206 + $0x28] sm:$0xff] %v250
      %259 = vst [vmem:[%s206 + $0x30] sm:$0xff] %v251
      %260 = vst [vmem:[%s206 + $0x38] sm:$0xff] %v252
      %p261 = scmp.lt.s32.totalorder %s18, 1
      %s262 = scalar_select %p261, %s18, 1
      %p263 = scmp.lt.s32.totalorder %s19, 7
      %s264 = scalar_select %p263, %s19, 7
      %s265 = smul.addr %s264, 8
      %s266 = smul.addr %s262, 64
      %s267 = sadd.s32 %s265, %s266
      %s268 = smul.addr %s267, 8
      %s269 = scalar_lea.vmem %s3, %s268
      // Predicated region
      $region33: #{basic_block_forward.5} parent=31 // pred_check
        %p270 = pneg %p116
      $region34: #{basic_block_forward.5} parent=31 // pred_check_branch
        %272 = sbr.rel (%p270) target = $region36
      $region35: #{basic_block_forward.5} parent=31 // pred_region
        _
      $region36: #{basic_block_forward.5} parent=31 // pred_fallthru
        _
    $region32: #{basic_block_forward.5} parent=5 // pred_fallthru
      _
    %p273 = scmp.le.s32.totalorder 2, %s9
    // Predicated region
    $region37: #{basic_block_forward.5} parent=5 // pred_check
      %p274 = pneg %p273
    $region38: #{basic_block_forward.5} parent=5 // pred_check_branch
      %276 = sbr.rel (%p274) target = $region40
    $region39: #{basic_block_forward.5} parent=5 // pred_region
      %s277 = ssub.s32 %s9, 2
      // Predicated region
      $region41: #{basic_block_forward.5} parent=39 // pred_check
        %p278 = pneg %p122
      $region42: #{basic_block_forward.5} parent=39 // pred_check_branch
        %280 = sbr.rel (%p278) target = $region44
      $region43: #{basic_block_forward.5} parent=39 // pred_region
        %p281 = scmp.lt.s32.totalorder %s20, 1
        %s282 = scalar_select %p281, %s20, 1
        %p283 = scmp.lt.s32.totalorder %s21, 7
        %s284 = scalar_select %p283, %s21, 7
        %s285 = smul.addr %s284, 8
        %s286 = smul.addr %s282, 64
        %s287 = sadd.s32 %s285, %s286
        %s288 = smul.addr %s287, 8
        %s289 = scalar_lea.vmem %s3, %s288
      $region44: #{basic_block_forward.5} parent=39 // pred_fallthru
        _
    $region40: #{basic_block_forward.5} parent=5 // pred_fallthru
      _
  $region6: #{basic_block_forward.5} parent=0 // loop_footer
    %s13 = sadd.s32 1, %s9
  $region7: #{basic_block_forward.5} parent=0 // loop_footer_branch
    %8 = sbr.rel target = $region3
  $region8: #{basic_block_forward.5} parent=0 // loop_exit
    _

// kernel: basic_block_forward.4
$region0: #{basic_block_forward.4}
  #allocation0 [shape = 'u32[]', space=smem, size = 0x4, offset = 0x4, fixed_abs, tag = 'smem constant byte address 0x4 - core index']
  #allocation1 [shape = 'u32[144,128]{1,0:T(1,128)}', space=vmem, size = 0x12000, scoped, tag = 'internal scratch']
  %s0 = inlined_call_operand.vmem [shape: f32[2,10,10,10,128], index: 0, kind: input, shape index: {}, may-alias: {0,1,2}]
  %s1 = inlined_call_operand.vmem [shape: f32[2,10,10,10,128], index: 1, kind: input, shape index: {}, may-alias: {0,1,2}]
  %s2 = inlined_call_operand.vmem [shape: f32[2,10,10,10,128], index: 2, kind: input, shape index: {}, may-alias: {0,1,2}]
  %s3 = inlined_call_operand.vmem [shape: f32[27,128,128], index: 3, kind: input, shape index: {}]
  %s4 = inlined_call_operand.vmem [shape: f32[2,8,64,128], index: 4, kind: output, shape index: {0}]
  %s5 = inlined_call_operand.vmem [shape: f32[2,2,128], index: 5, kind: output, shape index: {1}]
  %6 = xla_tuple %s4, %s5
  %s7 = sld [smem:[#allocation0]]
  $region61: #{basic_block_forward.4} parent=0
    _
  %s9 = ssub.s32 1, %s7
  %s10 = scalar_select 0, %s9, %s7
  loop: start=0, step=1, limit=18
  $region2: #{basic_block_forward.4} parent=0 // loop_pre_header
    _
  $region3: #{basic_block_forward.4} parent=0 // loop_header
    %s12 = sphi 0, %s16
    %p13 = scmp.ge.s32.totalorder %s12, 18
    %s19 = sphi 0, %s31
    %s20 = sphi 0, %s27
    %s21 = sphi 0, %s19
    %s22 = sphi 0, %s20
    %s23 = sphi 0, %s21
    %s24 = sphi 0, %s22
    %s36 = sphi 0, %s38
    %s39 = sphi 0, %s36
    %s40 = sphi 0, %s39
    %s56 = sphi 0, %s40
    %s66 = sphi 0, %s68
    %s69 = sphi 0, %s66
    %s70 = sphi 0, %s69
    %s86 = sphi 0, %s70
    %s96 = sphi 0, %s98
    %s99 = sphi 0, %s96
    %s100 = sphi 0, %s99
    %s116 = sphi 0, %s100
    %s120 = sphi 0, %s120
    %s122 = sphi 0, %s120
    %s123 = sphi 0, %s122
    %s137 = sphi 0, %s123
    %s145 = sphi 0, %s147
    %s148 = sphi 0, %s145
    %s149 = sphi 0, %s148
    %s165 = sphi 0, %s149
    %s171 = sphi 0, %s173
    %s174 = sphi 0, %s171
    %s175 = sphi 0, %s174
    %s191 = sphi 0, %s175
  $region4: #{basic_block_forward.4} parent=0 // loop_header_branch
    %15 = sbr.rel (%p13) target = $region8
  $region5: #{basic_block_forward.4} parent=0 // loop_body
    %s17 = ssub.s32 %s12, 1
    %s18 = ssub.s32 %s12, 2
    %s25 = sadd.s32 1, %s20
    %p26 = scmp.ge.s32.totalorder %s25, 8
    %s27 = scalar_select %p26, 0, %s25
    %s28 = sadd.s32 1, %s19
    %s29 = scalar_select %p26, %s28, %s19
    %p30 = scmp.ge.s32.totalorder %s29, 2
    %s31 = scalar_select %p30, 0, %s29
    %s32 = ssub.s32 %s19, %s31
    %s33 = ssub.s32 %s20, %s27
    %s34 = sor.u32 %s32, %s33
    %p35 = scmp.eq.s32.totalorder %s34, 0
    %s37 = sadd.s32 %s36, 1
    %s38 = scalar_select %p35, %s36, %s37
    %p41 = pneg %p35
    %p42 = scmp.eq.s32.totalorder %s12, 15
    %p43 = por %p41, %p42
    %p44 = scmp.ne.s32.totalorder %s36, %s39
    %p45 = scmp.eq.s32.totalorder %s12, 0
    %p46 = por %p44, %p45
    %p47 = scmp.ne.s32.totalorder %s36, %s39
    %p48 = scmp.eq.s32.totalorder %s17, 15
    %p49 = por %p47, %p48
    %p50 = scmp.ne.s32.totalorder %s39, %s40
    %p51 = scmp.eq.s32.totalorder %s17, 0
    %p52 = por %p50, %p51
    %p53 = scmp.ne.s32.totalorder %s39, %s40
    %p54 = scmp.eq.s32.totalorder %s18, 15
    %p55 = por %p53, %p54
    %p57 = scmp.ne.s32.totalorder %s40, %s56
    %p58 = scmp.eq.s32.totalorder %s18, 0
    %p59 = por %p57, %p58
    %s60 = sadd.s32 %s20, 1
    %s61 = sadd.s32 %s27, 1
    %s62 = ssub.s32 %s19, %s31
    %s63 = ssub.s32 %s60, %s61
    %s64 = sor.u32 %s62, %s63
    %p65 = scmp.eq.s32.totalorder %s64, 0
    %s67 = sadd.s32 %s66, 1
    %s68 = scalar_select %p65, %s66, %s67
    %p71 = pneg %p65
    %p72 = scmp.eq.s32.totalorder %s12, 15
    %p73 = por %p71, %p72
    %p74 = scmp.ne.s32.totalorder %s66, %s69
    %p75 = scmp.eq.s32.totalorder %s12, 0
    %p76 = por %p74, %p75
    %p77 = scmp.ne.s32.totalorder %s66, %s69
    %p78 = scmp.eq.s32.totalorder %s17, 15
    %p79 = por %p77, %p78
    %p80 = scmp.ne.s32.totalorder %s69, %s70
    %p81 = scmp.eq.s32.totalorder %s17, 0
    %p82 = por %p80, %p81
    %p83 = scmp.ne.s32.totalorder %s69, %s70
    %p84 = scmp.eq.s32.totalorder %s18, 15
    %p85 = por %p83, %p84
    %p87 = scmp.ne.s32.totalorder %s70, %s86
    %p88 = scmp.eq.s32.totalorder %s18, 0
    %p89 = por %p87, %p88
    %s90 = sadd.s32 %s20, 2
    %s91 = sadd.s32 %s27, 2
    %s92 = ssub.s32 %s19, %s31
    %s93 = ssub.s32 %s90, %s91
    %s94 = sor.u32 %s92, %s93
    %p95 = scmp.eq.s32.totalorder %s94, 0
    %s97 = sadd.s32 %s96, 1
    %s98 = scalar_select %p95, %s96, %s97
    %p101 = pneg %p95
    %p102 = scmp.eq.s32.totalorder %s12, 15
    %p103 = por %p101, %p102
    %p104 = scmp.ne.s32.totalorder %s96, %s99
    %p105 = scmp.eq.s32.totalorder %s12, 0
    %p106 = por %p104, %p105
    %p107 = scmp.ne.s32.totalorder %s96, %s99
    %p108 = scmp.eq.s32.totalorder %s17, 15
    %p109 = por %p107, %p108
    %p110 = scmp.ne.s32.totalorder %s99, %s100
    %p111 = scmp.eq.s32.totalorder %s17, 0
    %p112 = por %p110, %p111
    %p113 = scmp.ne.s32.totalorder %s99, %s100
    %p114 = scmp.eq.s32.totalorder %s18, 15
    %p115 = por %p113, %p114
    %p117 = scmp.ne.s32.totalorder %s100, %s116
    %p118 = scmp.eq.s32.totalorder %s18, 0
    %p119 = por %p117, %p118
    %s121 = sadd.s32 %s120, 1
    %p124 = scmp.eq.s32.totalorder %s12, 15
    %p125 = scmp.ne.s32.totalorder %s120, %s122
    %p126 = scmp.eq.s32.totalorder %s12, 0
    %p127 = por %p125, %p126
    %p128 = scmp.ne.s32.totalorder %s120, %s122
    %p129 = scmp.eq.s32.totalorder %s17, 15
    %p130 = por %p128, %p129
    %p131 = scmp.ne.s32.totalorder %s122, %s123
    %p132 = scmp.eq.s32.totalorder %s17, 0
    %p133 = por %p131, %p132
    %p134 = scmp.ne.s32.totalorder %s122, %s123
    %p135 = scmp.eq.s32.totalorder %s18, 15
    %p136 = por %p134, %p135
    %p138 = scmp.ne.s32.totalorder %s123, %s137
    %p139 = scmp.eq.s32.totalorder %s18, 0
    %p140 = por %p138, %p139
    %s141 = ssub.s32 %s19, %s31
    %s142 = ssub.s32 %s20, %s27
    %s143 = sor.u32 %s141, %s142
    %p144 = scmp.eq.s32.totalorder %s143, 0
    %s146 = sadd.s32 %s145, 1
    %s147 = scalar_select %p144, %s145, %s146
    %p150 = pneg %p144
    %p151 = scmp.eq.s32.totalorder %s12, 15
    %p152 = por %p150, %p151
    %p153 = scmp.ne.s32.totalorder %s145, %s148
    %p154 = scmp.eq.s32.totalorder %s12, 0
    %p155 = por %p153, %p154
    %p156 = scmp.ne.s32.totalorder %s145, %s148
    %p157 = scmp.eq.s32.totalorder %s17, 15
    %p158 = por %p156, %p157
    %p159 = scmp.ne.s32.totalorder %s148, %s149
    %p160 = scmp.eq.s32.totalorder %s17, 0
    %p161 = por %p159, %p160
    %p162 = scmp.ne.s32.totalorder %s148, %s149
    %p163 = scmp.eq.s32.totalorder %s18, 15
    %p164 = por %p162, %p163
    %p166 = scmp.ne.s32.totalorder %s149, %s165
    %p167 = scmp.eq.s32.totalorder %s18, 0
    %p168 = por %p166, %p167
    %s169 = ssub.s32 %s19, %s31
    %p170 = scmp.eq.s32.totalorder %s169, 0
    %s172 = sadd.s32 %s171, 1
    %s173 = scalar_select %p170, %s171, %s172
    %p176 = pneg %p170
    %p177 = scmp.eq.s32.totalorder %s12, 15
    %p178 = por %p176, %p177
    %p179 = scmp.ne.s32.totalorder %s171, %s174
    %p180 = scmp.eq.s32.totalorder %s12, 0
    %p181 = por %p179, %p180
    %p182 = scmp.ne.s32.totalorder %s171, %s174
    %p183 = scmp.eq.s32.totalorder %s17, 15
    %p184 = por %p182, %p183
    %p185 = scmp.ne.s32.totalorder %s174, %s175
    %p186 = scmp.eq.s32.totalorder %s17, 0
    %p187 = por %p185, %p186
    %p188 = scmp.ne.s32.totalorder %s174, %s175
    %p189 = scmp.eq.s32.totalorder %s18, 15
    %p190 = por %p188, %p189
    %p192 = scmp.ne.s32.totalorder %s175, %s191
    %p193 = scmp.eq.s32.totalorder %s18, 0
    %p194 = por %p192, %p193
    %p195 = scmp.le.s32.totalorder 1, %s12
    %p196 = scmp.lt.s32.totalorder %s12, 17
    %p197 = pnand %p195, %p196
    %p198 = pneg %p197
    // Predicated region
    $region9: #{basic_block_forward.4} parent=5 // pred_check
      _
    $region10: #{basic_block_forward.4} parent=5 // pred_check_branch
      %200 = sbr.rel (%p197) target = $region12
    $region11: #{basic_block_forward.4} parent=5 // pred_region
      %s201 = ssub.s32 %s12, 1
      // Predicated region
      $region13: #{basic_block_forward.4} parent=11 // pred_check
        %p202 = pneg %p133
      $region14: #{basic_block_forward.4} parent=11 // pred_check_branch
        %204 = sbr.rel (%p202) target = $region16
      $region15: #{basic_block_forward.4} parent=11 // pred_region
        _
      $region16: #{basic_block_forward.4} parent=11 // pred_fallthru
        _
    $region12: #{basic_block_forward.4} parent=5 // pred_fallthru
      _
    %p205 = scmp.lt.s32.totalorder %s12, 16
    // Predicated region
    $region17: #{basic_block_forward.4} parent=5 // pred_check
      %p206 = pneg %p205
    $region18: #{basic_block_forward.4} parent=5 // pred_check_branch
      %208 = sbr.rel (%p206) target = $region20
    $region19: #{basic_block_forward.4} parent=5 // pred_region
      // Predicated region
      $region21: #{basic_block_forward.4} parent=19 // pred_check
        %p209 = pneg %p46
      $region22: #{basic_block_forward.4} parent=19 // pred_check_branch
        %211 = sbr.rel (%p209) target = $region24
      $region23: #{basic_block_forward.4} parent=19 // pred_region
        %p212 = scmp.lt.s32.totalorder %s19, 1
        %s213 = scalar_select %p212, %s19, 1
        %p214 = scmp.lt.s32.totalorder %s20, 9
        %s215 = scalar_select %p214, %s20, 9
        %s216 = smul.addr %s215, 20
        %s217 = smul.addr %s213, 200
        %s218 = sadd.s32 %s216, %s217
        %s219 = smul.addr %s218, 8
        %s220 = scalar_lea.vmem %s0, %s219
      $region24: #{basic_block_forward.4} parent=19 // pred_fallthru
        _
      // Predicated region
      $region25: #{basic_block_forward.4} parent=19 // pred_check
        %p221 = pneg %p76
      $region26: #{basic_block_forward.4} parent=19 // pred_check_branch
        %223 = sbr.rel (%p221) target = $region28
      $region27: #{basic_block_forward.4} parent=19 // pred_region
        %s224 = sadd.s32 %s20, 1
        %p225 = scmp.lt.s32.totalorder %s19, 1
        %s226 = scalar_select %p225, %s19, 1
        %p227 = scmp.lt.s32.totalorder %s224, 9
        %s228 = scalar_select %p227, %s224, 9
        %s229 = smul.addr %s228, 20
        %s230 = smul.addr %s226, 200
        %s231 = sadd.s32 %s229, %s230
        %s232 = smul.addr %s231, 8
        %s233 = scalar_lea.vmem %s1, %s232
        %s234 = sadd.s32 %s20, 1
      $region28: #{basic_block_forward.4} parent=19 // pred_fallthru
        _
      // Predicated region
      $region29: #{basic_block_forward.4} parent=19 // pred_check
        %p235 = pneg %p106
      $region30: #{basic_block_forward.4} parent=19 // pred_check_branch
        %237 = sbr.rel (%p235) target = $region32
      $region31: #{basic_block_forward.4} parent=19 // pred_region
        %s238 = sadd.s32 %s20, 2
        %p239 = scmp.lt.s32.totalorder %s19, 1
        %s240 = scalar_select %p239, %s19, 1
        %p241 = scmp.lt.s32.totalorder %s238, 9
        %s242 = scalar_select %p241, %s238, 9
        %s243 = smul.addr %s242, 20
        %s244 = smul.addr %s240, 200
        %s245 = sadd.s32 %s243, %s244
        %s246 = smul.addr %s245, 8
        %s247 = scalar_lea.vmem %s2, %s246
        %s248 = sadd.s32 %s20, 2
      $region32: #{basic_block_forward.4} parent=19 // pred_fallthru
        _
    $region20: #{basic_block_forward.4} parent=5 // pred_fallthru
      _
    %p249 = scmp.le.s32.totalorder 1, %s12
    %p250 = scmp.lt.s32.totalorder %s12, 17
    %p251 = pnand %p249, %p250
    %p252 = pneg %p251
    // Predicated region
    $region33: #{basic_block_forward.4} parent=5 // pred_check
      _
    $region34: #{basic_block_forward.4} parent=5 // pred_check_branch
      %254 = sbr.rel (%p251) target = $region36
    $region35: #{basic_block_forward.4} parent=5 // pred_region
      %s255 = ssub.s32 %s12, 1
      %p256 = scmp.lt.s32.totalorder %s21, 1
      %s257 = scalar_select %p256, %s21, 1
      %p258 = scmp.lt.s32.totalorder %s22, 9
      %s259 = scalar_select %p258, %s22, 9
      %s260 = smul.addr %s259, 20
      %s261 = smul.addr %s257, 200
      %s262 = sadd.s32 %s260, %s261
      %s263 = smul.addr %s262, 8
      %s264 = scalar_lea.vmem %s0, %s263
      %p265 = pneg %p52
      %p266 = pneg %p49
      %s267 = sadd.s32 %s22, 1
      %p268 = scmp.lt.s32.totalorder %s21, 1
      %s269 = scalar_select %p268, %s21, 1
      %p270 = scmp.lt.s32.totalorder %s267, 9
      %s271 = scalar_select %p270, %s267, 9
      %s272 = smul.addr %s271, 20
      %s273 = smul.addr %s269, 200
      %s274 = sadd.s32 %s272, %s273
      %s275 = smul.addr %s274, 8
      %s276 = scalar_lea.vmem %s1, %s275
      %p277 = pneg %p82
      %p278 = pneg %p79
      %s279 = sadd.s32 %s22, 2
      %p280 = scmp.lt.s32.totalorder %s21, 1
      %s281 = scalar_select %p280, %s21, 1
      %p282 = scmp.lt.s32.totalorder %s279, 9
      %s283 = scalar_select %p282, %s279, 9
      %s284 = smul.addr %s283, 20
      %s285 = smul.addr %s281, 200
      %s286 = sadd.s32 %s284, %s285
      %s287 = smul.addr %s286, 8
      %s288 = scalar_lea.vmem %s2, %s287
      %p289 = pneg %p112
      %p290 = pneg %p109
      %p291 = pneg %p133
      %p292 = pneg %p130
      %p293 = pneg %p161
      %p294 = pneg %p158
      %p295 = scmp.lt.s32.totalorder %s21, 1
      %s296 = scalar_select %p295, %s21, 1
      %p297 = scmp.lt.s32.totalorder %s22, 7
      %s298 = scalar_select %p297, %s22, 7
      %s299 = smul.addr %s298, 8
      %s300 = smul.addr %s296, 64
      %s301 = sadd.s32 %s299, %s300
      %s302 = smul.addr %s301, 8
      %s303 = scalar_lea.vmem %s4, %s302
      %p304 = pneg %p187
      %p305 = pneg %p184
      %p306 = scmp.lt.s32.totalorder %s21, 1
      %s307 = scalar_select %p306, %s21, 1
      %s308 = smul.addr %s307, 2
      %s309 = scalar_lea.vmem %s5, %s308
      %p310 = scmp.lt.s32.totalorder %s21, 1
      %s311 = scalar_select %p310, %s21, 1
      %p312 = scmp.lt.s32.totalorder %s22, 9
      %s313 = scalar_select %p312, %s22, 9
      %s314 = smul.addr %s313, 20
      %s315 = smul.addr %s311, 200
      %s316 = sadd.s32 %s314, %s315
      %s317 = smul.addr %s316, 8
      %s318 = scalar_lea.vmem %s0, %s317
      %s319 = sadd.s32 %s22, 1
      %p320 = scmp.lt.s32.totalorder %s21, 1
      %s321 = scalar_select %p320, %s21, 1
      %p322 = scmp.lt.s32.totalorder %s319, 9
      %s323 = scalar_select %p322, %s319, 9
      %s324 = smul.addr %s323, 20
      %s325 = smul.addr %s321, 200
      %s326 = sadd.s32 %s324, %s325
      %s327 = smul.addr %s326, 8
      %s328 = scalar_lea.vmem %s1, %s327
      %s329 = sadd.s32 %s22, 1
      %s330 = sadd.s32 %s22, 2
      %p331 = scmp.lt.s32.totalorder %s21, 1
      %s332 = scalar_select %p331, %s21, 1
      %p333 = scmp.lt.s32.totalorder %s330, 9
      %s334 = scalar_select %p333, %s330, 9
      %s335 = smul.addr %s334, 20
      %s336 = smul.addr %s332, 200
      %s337 = sadd.s32 %s335, %s336
      %s338 = smul.addr %s337, 8
      %s339 = scalar_lea.vmem %s2, %s338
      %s340 = sadd.s32 %s22, 2
      %p341 = scmp.lt.s32.totalorder %s21, 1
      %s342 = scalar_select %p341, %s21, 1
      %p343 = scmp.lt.s32.totalorder %s22, 7
      %s344 = scalar_select %p343, %s22, 7
      %s345 = smul.addr %s344, 8
      %s346 = smul.addr %s342, 64
      %s347 = sadd.s32 %s345, %s346
      %s348 = smul.addr %s347, 8
      %s349 = scalar_lea.vmem %s4, %s348
      %p350 = scmp.lt.s32.totalorder %s21, 1
      %s351 = scalar_select %p350, %s21, 1
      %s352 = smul.addr %s351, 2
      %s353 = scalar_lea.vmem %s5, %s352
      %v354 = vld [vmem:[%s318] sm:$0xff]
      %v355 = vld [vmem:[%s318 + $0x10] sm:$0xff]
      %v356 = vld [vmem:[%s318 + $0x20] sm:$0xff]
      %v357 = vld [vmem:[%s318 + $0x30] sm:$0xff]
      %v358 = vld [vmem:[%s318 + $0x40] sm:$0xff]
      %v359 = vld [vmem:[%s318 + $0x50] sm:$0xff]
      %v360 = vld [vmem:[%s318 + $0x60] sm:$0xff]
      %v361 = vld [vmem:[%s318 + $0x70] sm:$0xff]
      %v362 = vld [vmem:[%s3] sm:$0xff]
      %v363 = vld [vmem:[%s3 + $0x8] sm:$0xff]
      %v364 = vld [vmem:[%s3 + $0x10] sm:$0xff]
      %v365 = vld [vmem:[%s3 + $0x18] sm:$0xff]
      %v366 = vld [vmem:[%s3 + $0x20] sm:$0xff]
      %v367 = vld [vmem:[%s3 + $0x28] sm:$0xff]
      %v368 = vld [vmem:[%s3 + $0x30] sm:$0xff]
      %v369 = vld [vmem:[%s3 + $0x38] sm:$0xff]
      %v370 = vld [vmem:[%s3 + $0x40] sm:$0xff]
      %v371 = vld [vmem:[%s3 + $0x48] sm:$0xff]
      %v372 = vld [vmem:[%s3 + $0x50] sm:$0xff]
      %v373 = vld [vmem:[%s3 + $0x58] sm:$0xff]
      %v374 = vld [vmem:[%s3 + $0x60] sm:$0xff]
      %v375 = vld [vmem:[%s3 + $0x68] sm:$0xff]
      %v376 = vld [vmem:[%s3 + $0x70] sm:$0xff]
      %v377 = vld [vmem:[%s3 + $0x78] sm:$0xff]
      %v378 = vld [vmem:[%s318 + $0x1] sm:$0xff]
      %v379 = vld [vmem:[%s318 + $0x11] sm:$0xff]
      %v380 = vld [vmem:[%s318 + $0x21] sm:$0xff]
      %v381 = vld [vmem:[%s318 + $0x31] sm:$0xff]
      %v382 = vld [vmem:[%s318 + $0x41] sm:$0xff]
      %v383 = vld [vmem:[%s318 + $0x51] sm:$0xff]
      %v384 = vld [vmem:[%s318 + $0x61] sm:$0xff]
      %v385 = vld [vmem:[%s318 + $0x71] sm:$0xff]
      %s386 = scalar_lea.vmem %s3, 128
      %v387 = vld [vmem:[%s386] sm:$0xff]
      %v388 = vld [vmem:[%s386 + $0x8] sm:$0xff]
      %v389 = vld [vmem:[%s386 + $0x10] sm:$0xff]
      %v390 = vld [vmem:[%s386 + $0x18] sm:$0xff]
      %v391 = vld [vmem:[%s386 + $0x20] sm:$0xff]
      %v392 = vld [vmem:[%s386 + $0x28] sm:$0xff]
      %v393 = vld [vmem:[%s386 + $0x30] sm:$0xff]
      %v394 = vld [vmem:[%s386 + $0x38] sm:$0xff]
      %v395 = vld [vmem:[%s386 + $0x40] sm:$0xff]
      %v396 = vld [vmem:[%s386 + $0x48] sm:$0xff]
      %v397 = vld [vmem:[%s386 + $0x50] sm:$0xff]
      %v398 = vld [vmem:[%s386 + $0x58] sm:$0xff]
      %v399 = vld [vmem:[%s386 + $0x60] sm:$0xff]
      %v400 = vld [vmem:[%s386 + $0x68] sm:$0xff]
      %v401 = vld [vmem:[%s386 + $0x70] sm:$0xff]
      %v402 = vld [vmem:[%s386 + $0x78] sm:$0xff]
      %403 = vmatprep.subr.mxu0 0.0
      %404 = vmatpush1.msra.mxu0 %v387
      %405 = vmatprep.subr.mxu0 0.0
      %406 = vmatpush1.msra.mxu0 %v388
      %407 = vmatprep.subr.mxu0 0.0
      %408 = vmatpush1.msra.mxu0 %v389
      %409 = vmatprep.subr.mxu0 0.0
      %410 = vmatpush1.msra.mxu0 %v390
      %411 = vmatprep.subr.mxu0 0.0
      %412 = vmatpush1.msra.mxu0 %v391
      %413 = vmatprep.subr.mxu0 0.0
      %414 = vmatpush1.msra.mxu0 %v392
      %415 = vmatprep.subr.mxu0 0.0
      %416 = vmatpush1.msra.mxu0 %v393
      %417 = vmatprep.subr.mxu0 0.0
      %418 = vmatpush1.msra.mxu0 %v394
      %419 = vmatprep.subr.mxu0 0.0
      %420 = vmatpush1.msra.mxu0 %v395
      %421 = vmatprep.subr.mxu0 0.0
      %422 = vmatpush1.msra.mxu0 %v396
      %423 = vmatprep.subr.mxu0 0.0
      %424 = vmatpush1.msra.mxu0 %v397
      %425 = vmatprep.subr.mxu0 0.0
      %426 = vmatpush1.msra.mxu0 %v398
      %427 = vmatprep.subr.mxu0 0.0
      %428 = vmatpush1.msra.mxu0 %v399
      %429 = vmatprep.subr.mxu0 0.0
      %430 = vmatpush1.msra.mxu0 %v400
      %431 = vmatprep.subr.mxu0 0.0
      %432 = vmatpush1.msra.mxu0 %v401
      %433 = vmatprep.subr.mxu0 0.0
      %434 = vmatpush1.msra.mxu0 %v402
      %435 = vmatprep.subr.mxu0 0.0
      %436 = vmatpush1.msra.mxu0 0.0
      %437 = vmatprep.subr.mxu0 0.0
      %438 = vmatpush1.msra.mxu0 0.0
      %439 = vmatprep.subr.mxu0 0.0
      %440 = vmatpush1.msra.mxu0 0.0
      %441 = vmatprep.subr.mxu0 0.0
      %442 = vmatpush1.msra.mxu0 0.0
      %443 = vmatprep.subr.mxu0 0.0
      %444 = vmatpush1.msra.mxu0 0.0
      %445 = vmatprep.subr.mxu0 0.0
      %446 = vmatpush1.msra.mxu0 0.0
      %447 = vmatprep.subr.mxu0 0.0
      %448 = vmatpush1.msra.mxu0 0.0
      %449 = vmatprep.subr.mxu0 0.0
      %450 = vmatpush1.msra.mxu0 0.0
      %451 = vmatprep.subr.mxu0 0.0
      %452 = vmatpush1.msra.mxu0 0.0
      %453 = vmatprep.subr.mxu0 0.0
      %454 = vmatpush1.msra.mxu0 0.0
      %455 = vmatprep.subr.mxu0 0.0
      %456 = vmatpush1.msra.mxu0 0.0
      %457 = vmatprep.subr.mxu0 0.0
      %458 = vmatpush1.msra.mxu0 0.0
      %459 = vmatprep.subr.mxu0 0.0
      %460 = vmatpush1.msra.mxu0 0.0
      %461 = vmatprep.subr.mxu0 0.0
      %462 = vmatpush1.msra.mxu0 0.0
      %463 = vmatprep.subr.mxu0 0.0
      %464 = vmatpush1.msra.mxu0 0.0
      %465 = vmatprep.subr.mxu0 0.0
      %466 = vmatpush1.msra.mxu0 0.0
      %467 = vmatprep.mubr.f32.mxu0 0.0
      %468 = vmatmul.mubr.f32.gmra.mrb[0].mxu0 %v378
      %v469 = vpop.f32.mrb[0].mxu0
      %v470 = vadd.f32 0.0, %v469
      %v471 = vpop.f32.mrb[0].mxu0
      %472 = vmatprep.mubr.f32.mxu0 0.0
      %473 = vmatmul.mubr.f32.gmra.mrb[0].mxu0 %v379
      %v474 = vpop.f32.mrb[0].mxu0
      %v475 = vadd.f32 0.0, %v474
      %v476 = vpop.f32.mrb[0].mxu0
      %477 = vmatprep.mubr.f32.mxu0 0.0
      %478 = vmatmul.mubr.f32.gmra.mrb[0].mxu0 %v380
      %v479 = vpop.f32.mrb[0].mxu0
      %v480 = vadd.f32 0.0, %v479
      %v481 = vpop.f32.mrb[0].mxu0
      %482 = vmatprep.mubr.f32.mxu0 0.0
      %483 = vmatmul.mubr.f32.gmra.mrb[0].mxu0 %v381
      %v484 = vpop.f32.mrb[0].mxu0
      %v485 = vadd.f32 0.0, %v484
      %v486 = vpop.f32.mrb[0].mxu0
      %487 = vmatprep.mubr.f32.mxu0 0.0
      %488 = vmatmul.mubr.f32.gmra.mrb[0].mxu0 %v382
      %v489 = vpop.f32.mrb[0].mxu0
      %v490 = vadd.f32 0.0, %v489
      %v491 = vpop.f32.mrb[0].mxu0
      %492 = vmatprep.mubr.f32.mxu0 0.0
      %493 = vmatmul.mubr.f32.gmra.mrb[0].mxu0 %v383
      %v494 = vpop.f32.mrb[0].mxu0
      %v495 = vadd.f32 0.0, %v494
      %v496 = vpop.f32.mrb[0].mxu0
      %497 = vmatprep.mubr.f32.mxu0 0.0
      %498 = vmatmul.mubr.f32.gmra.mrb[0].mxu0 %v384
      %v499 = vpop.f32.mrb[0].mxu0
      %v500 = vadd.f32 0.0, %v499
      %v501 = vpop.f32.mrb[0].mxu0
      %502 = vmatprep.mubr.f32.mxu0 0.0
      %503 = vmatmul.mubr.f32.gmra.mrb[0].mxu0 %v385
      %v504 = vpop.f32.mrb[0].mxu0
      %v505 = vadd.f32 0.0, %v504
      %v506 = vpop.f32.mrb[0].mxu0
      %507 = vdwg.mxu0
      %508 = vmatprep.subr.mxu0 0.0
      %509 = vmatpush1.msra.mxu0 %v362
      %510 = vmatprep.subr.mxu0 0.0
      %511 = vmatpush1.msra.mxu0 %v363
      %512 = vmatprep.subr.mxu0 0.0
      %513 = vmatpush1.msra.mxu0 %v364
      %514 = vmatprep.subr.mxu0 0.0
      %515 = vmatpush1.msra.mxu0 %v365
      %516 = vmatprep.subr.mxu0 0.0
      %517 = vmatpush1.msra.mxu0 %v366
      %518 = vmatprep.subr.mxu0 0.0
      %519 = vmatpush1.msra.mxu0 %v367
      %520 = vmatprep.subr.mxu0 0.0
      %521 = vmatpush1.msra.mxu0 %v368
      %522 = vmatprep.subr.mxu0 0.0
      %523 = vmatpush1.msra.mxu0 %v369
      %524 = vmatprep.subr.mxu0 0.0
      %525 = vmatpush1.msra.mxu0 %v370
      %526 = vmatprep.subr.mxu0 0.0
      %527 = vmatpush1.msra.mxu0 %v371
      %528 = vmatprep.subr.mxu0 0.0
      %529 = vmatpush1.msra.mxu0 %v372
      %530 = vmatprep.subr.mxu0 0.0
      %531 = vmatpush1.msra.mxu0 %v373
      %532 = vmatprep.subr.mxu0 0.0
      %533 = vmatpush1.msra.mxu0 %v374
      %534 = vmatprep.subr.mxu0 0.0
      %535 = vmatpush1.msra.mxu0 %v375
      %536 = vmatprep.subr.mxu0 0.0
      %537 = vmatpush1.msra.mxu0 %v376
      %538 = vmatprep.subr.mxu0 0.0
      %539 = vmatpush1.msra.mxu0 %v377
      %540 = vmatprep.subr.mxu0 0.0
      %541 = vmatpush1.msra.mxu0 0.0
      %542 = vmatprep.subr.mxu0 0.0
      %543 = vmatpush1.msra.mxu0 0.0
      %544 = vmatprep.subr.mxu0 0.0
      %545 = vmatpush1.msra.mxu0 0.0
      %546 = vmatprep.subr.mxu0 0.0
      %547 = vmatpush1.msra.mxu0 0.0
      %548 = vmatprep.subr.mxu0 0.0
      %549 = vmatpush1.msra.mxu0 0.0
      %550 = vmatprep.subr.mxu0 0.0
      %551 = vmatpush1.msra.mxu0 0.0
      %552 = vmatprep.subr.mxu0 0.0
      %553 = vmatpush1.msra.mxu0 0.0
      %554 = vmatprep.subr.mxu0 0.0
      %555 = vmatpush1.msra.mxu0 0.0
      %556 = vmatprep.subr.mxu0 0.0
      %557 = vmatpush1.msra.mxu0 0.0
      %558 = vmatprep.subr.mxu0 0.0
      %559 = vmatpush1.msra.mxu0 0.0
      %560 = vmatprep.subr.mxu0 0.0
      %561 = vmatpush1.msra.mxu0 0.0
      %562 = vmatprep.subr.mxu0 0.0
      %563 = vmatpush1.msra.mxu0 0.0
      %564 = vmatprep.subr.mxu0 0.0
      %565 = vmatpush1.msra.mxu0 0.0
      %566 = vmatprep.subr.mxu0 0.0
      %567 = vmatpush1.msra.mxu0 0.0
      %568 = vmatprep.subr.mxu0 0.0
      %569 = vmatpush1.msra.mxu0 0.0
      %570 = vmatprep.subr.mxu0 0.0
      %571 = vmatpush1.msra.mxu0 0.0
      %572 = vmatprep.mubr.f32.mxu0 0.0
      %573 = vmatmul.mubr.f32.gmra.mrb[0].mxu0 %v354
      %v574 = vpop.f32.mrb[0].mxu0
      %v575 = vadd.f32 %v470, %v574
      %v576 = vpop.f32.mrb[0].mxu0
      %577 = vmatprep.mubr.f32.mxu0 0.0
      %578 = vmatmul.mubr.f32.gmra.mrb[0].mxu0 %v355
      %v579 = vpop.f32.mrb[0].mxu0
      %v580 = vadd.f32 %v475, %v579
      %v581 = vpop.f32.mrb[0].mxu0
      %582 = vmatprep.mubr.f32.mxu0 0.0
      %583 = vmatmul.mubr.f32.gmra.mrb[0].mxu0 %v356
      %v584 = vpop.f32.mrb[0].mxu0
      %v585 = vadd.f32 %v480, %v584
      %v586 = vpop.f32.mrb[0].mxu0
      %587 = vmatprep.mubr.f32.mxu0 0.0
      %588 = vmatmul.mubr.f32.gmra.mrb[0].mxu0 %v357
      %v589 = vpop.f32.mrb[0].mxu0
      %v590 = vadd.f32 %v485, %v589
      %v591 = vpop.f32.mrb[0].mxu0
      %592 = vmatprep.mubr.f32.mxu0 0.0
      %593 = vmatmul.mubr.f32.gmra.mrb[0].mxu0 %v358
      %v594 = vpop.f32.mrb[0].mxu0
      %v595 = vadd.f32 %v490, %v594
      %v596 = vpop.f32.mrb[0].mxu0
      %597 = vmatprep.mubr.f32.mxu0 0.0
      %598 = vmatmul.mubr.f32.gmra.mrb[0].mxu0 %v359
      %v599 = vpop.f32.mrb[0].mxu0
      %v600 = vadd.f32 %v495, %v599
      %v601 = vpop.f32.mrb[0].mxu0
      %602 = vmatprep.mubr.f32.mxu0 0.0
      %603 = vmatmul.mubr.f32.gmra.mrb[0].mxu0 %v360
      %v604 = vpop.f32.mrb[0].mxu0
      %v605 = vadd.f32 %v500, %v604
      %v606 = vpop.f32.mrb[0].mxu0
      %607 = vmatprep.mubr.f32.mxu0 0.0
      %608 = vmatmul.mubr.f32.gmra.mrb[0].mxu0 %v361
      %v609 = vpop.f32.mrb[0].mxu0
      %v610 = vadd.f32 %v505, %v609
      %v611 = vpop.f32.mrb[0].mxu0
      %612 = vdwg.mxu0
      %v613 = vld [vmem:[%s318 + $0x2] sm:$0xff]
      %v614 = vld [vmem:[%s318 + $0x12] sm:$0xff]
      %v615 = vld [vmem:[%s318 + $0x22] sm:$0xff]
      %v616 = vld [vmem:[%s318 + $0x32] sm:$0xff]
      %v617 = vld [vmem:[%s318 + $0x42] sm:$0xff]
      %v618 = vld [vmem:[%s318 + $0x52] sm:$0xff]
      %v619 = vld [vmem:[%s318 + $0x62] sm:$0xff]
      %v620 = vld [vmem:[%s318 + $0x72] sm:$0xff]
      %s621 = scalar_lea.vmem %s3, 256
      %v622 = vld [vmem:[%s621] sm:$0xff]
      %v623 = vld [vmem:[%s621 + $0x8] sm:$0xff]
      %v624 = vld [vmem:[%s621 + $0x10] sm:$0xff]
      %v625 = vld [vmem:[%s621 + $0x18] sm:$0xff]
      %v626 = vld [vmem:[%s621 + $0x20] sm:$0xff]
      %v627 = vld [vmem:[%s621 + $0x28] sm:$0xff]
      %v628 = vld [vmem:[%s621 + $0x30] sm:$0xff]
      %v629 = vld [vmem:[%s621 + $0x38] sm:$0xff]
      %v630 = vld [vmem:[%s621 + $0x40] sm:$0xff]
      %v631 = vld [vmem:[%s621 + $0x48] sm:$0xff]
      %v632 = vld [vmem:[%s621 + $0x50] sm:$0xff]
      %v633 = vld [vmem:[%s621 + $0x58] sm:$0xff]
      %v634 = vld [vmem:[%s621 + $0x60] sm:$0xff]
      %v635 = vld [vmem:[%s621 + $0x68] sm:$0xff]
      %v636 = vld [vmem:[%s621 + $0x70] sm:$0xff]
      %v637 = vld [vmem:[%s621 + $0x78] sm:$0xff]
      %638 = vmatprep.subr.mxu0 0.0
      %639 = vmatpush1.msra.mxu0 %v622
      %640 = vmatprep.subr.mxu0 0.0
      %641 = vmatpush1.msra.mxu0 %v623
      %642 = vmatprep.subr.mxu0 0.0
      %643 = vmatpush1.msra.mxu0 %v624
      %644 = vmatprep.subr.mxu0 0.0
      %645 = vmatpush1.msra.mxu0 %v625
      %646 = vmatprep.subr.mxu0 0.0
      %647 = vmatpush1.msra.mxu0 %v626
      %648 = vmatprep.subr.mxu0 0.0
      %649 = vmatpush1.msra.mxu0 %v627
      %650 = vmatprep.subr.mxu0 0.0
      %651 = vmatpush1.msra.mxu0 %v628
      %652 = vmatprep.subr.mxu0 0.0
      %653 = vmatpush1.msra.mxu0 %v629
      %654 = vmatprep.subr.mxu0 0.0
      %655 = vmatpush1.msra.mxu0 %v630
      %656 = vmatprep.subr.mxu0 0.0
      %657 = vmatpush1.msra.mxu0 %v631
      %658 = vmatprep.subr.mxu0 0.0
      %659 = vmatpush1.msra.mxu0 %v632
      %660 = vmatprep.subr.mxu0 0.0
      %661 = vmatpush1.msra.mxu0 %v633
      %662 = vmatprep.subr.mxu0 0.0
      %663 = vmatpush1.msra.mxu0 %v634
      %664 = vmatprep.subr.mxu0 0.0
      %665 = vmatpush1.msra.mxu0 %v635
      %666 = vmatprep.subr.mxu0 0.0
      %667 = vmatpush1.msra.mxu0 %v636
      %668 = vmatprep.subr.mxu0 0.0
      %669 = vmatpush1.msra.mxu0 %v637
      %670 = vmatprep.subr.mxu0 0.0
      %671 = vmatpush1.msra.mxu0 0.0
      %672 = vmatprep.subr.mxu0 0.0
      %673 = vmatpush1.msra.mxu0 0.0
      %674 = vmatprep.subr.mxu0 0.0
      %675 = vmatpush1.msra.mxu0 0.0
      %676 = vmatprep.subr.mxu0 0.0
      %677 = vmatpush1.msra.mxu0 0.0
      %678 = vmatprep.subr.mxu0 0.0
      %679 = vmatpush1.msra.mxu0 0.0
      %680 = vmatprep.subr.mxu0 0.0
      %681 = vmatpush1.msra.mxu0 0.0
      %682 = vmatprep.subr.mxu0 0.0
      %683 = vmatpush1.msra.mxu0 0.0
      %684 = vmatprep.subr.mxu0 0.0
      %685 = vmatpush1.msra.mxu0 0.0
      %686 = vmatprep.subr.mxu0 0.0
      %687 = vmatpush1.msra.mxu0 0.0
      %688 = vmatprep.subr.mxu0 0.0
      %689 = vmatpush1.msra.mxu0 0.0
      %690 = vmatprep.subr.mxu0 0.0
      %691 = vmatpush1.msra.mxu0 0.0
      %692 = vmatprep.subr.mxu0 0.0
      %693 = vmatpush1.msra.mxu0 0.0
      %694 = vmatprep.subr.mxu0 0.0
      %695 = vmatpush1.msra.mxu0 0.0
      %696 = vmatprep.subr.mxu0 0.0
      %697 = vmatpush1.msra.mxu0 0.0
      %698 = vmatprep.subr.mxu0 0.0
      %699 = vmatpush1.msra.mxu0 0.0
      %700 = vmatprep.subr.mxu0 0.0
      %701 = vmatpush1.msra.mxu0 0.0
      %702 = vmatprep.mubr.f32.mxu0 0.0
      %703 = vmatmul.mubr.f32.gmra.mrb[0].mxu0 %v613
      %v704 = vpop.f32.mrb[0].mxu0
      %v705 = vadd.f32 0.0, %v704
      %v706 = vpop.f32.mrb[0].mxu0
      %707 = vmatprep.mubr.f32.mxu0 0.0
      %708 = vmatmul.mubr.f32.gmra.mrb[0].mxu0 %v614
      %v709 = vpop.f32.mrb[0].mxu0
      %v710 = vadd.f32 0.0, %v709
      %v711 = vpop.f32.mrb[0].mxu0
      %712 = vmatprep.mubr.f32.mxu0 0.0
      %713 = vmatmul.mubr.f32.gmra.mrb[0].mxu0 %v615
      %v714 = vpop.f32.mrb[0].mxu0
      %v715 = vadd.f32 0.0, %v714
      %v716 = vpop.f32.mrb[0].mxu0
      %717 = vmatprep.mubr.f32.mxu0 0.0
      %718 = vmatmul.mubr.f32.gmra.mrb[0].mxu0 %v616
      %v719 = vpop.f32.mrb[0].mxu0
      %v720 = vadd.f32 0.0, %v719
      %v721 = vpop.f32.mrb[0].mxu0
      %722 = vmatprep.mubr.f32.mxu0 0.0
      %723 = vmatmul.mubr.f32.gmra.mrb[0].mxu0 %v617
      %v724 = vpop.f32.mrb[0].mxu0
      %v725 = vadd.f32 0.0, %v724
      %v726 = vpop.f32.mrb[0].mxu0
      %727 = vmatprep.mubr.f32.mxu0 0.0
      %728 = vmatmul.mubr.f32.gmra.mrb[0].mxu0 %v618
      %v729 = vpop.f32.mrb[0].mxu0
      %v730 = vadd.f32 0.0, %v729
      %v731 = vpop.f32.mrb[0].mxu0
      %732 = vmatprep.mubr.f32.mxu0 0.0
      %733 = vmatmul.mubr.f32.gmra.mrb[0].mxu0 %v619
      %v734 = vpop.f32.mrb[0].mxu0
      %v735 = vadd.f32 0.0, %v734
      %v736 = vpop.f32.mrb[0].mxu0
      %737 = vmatprep.mubr.f32.mxu0 0.0
      %738 = vmatmul.mubr.f32.gmra.mrb[0].mxu0 %v620
      %v739 = vpop.f32.mrb[0].mxu0
      %v740 = vadd.f32 0.0, %v739
      %v741 = vpop.f32.mrb[0].mxu0
      %742 = vdwg.mxu0
      %v743 = vadd.f32 %v575, %v705
      %v744 = vadd.f32 %v580, %v710
      %v745 = vadd.f32 %v585, %v715
      %v746 = vadd.f32 %v590, %v720
      %v747 = vadd.f32 %v595, %v725
      %v748 = vadd.f32 %v600, %v730
      %v749 = vadd.f32 %v605, %v735
      %v750 = vadd.f32 %v610, %v740
      %s751 = scalar_lea.vmem %s318, 16
      %v752 = vld [vmem:[%s751] sm:$0xff]
      %v753 = vld [vmem:[%s751 + $0x10] sm:$0xff]
      %v754 = vld [vmem:[%s751 + $0x20] sm:$0xff]
      %v755 = vld [vmem:[%s751 + $0x30] sm:$0xff]
      %v756 = vld [vmem:[%s751 + $0x40] sm:$0xff]
      %v757 = vld [vmem:[%s751 + $0x50] sm:$0xff]
      %v758 = vld [vmem:[%s751 + $0x60] sm:$0xff]
      %v759 = vld [vmem:[%s751 + $0x70] sm:$0xff]
      %s760 = scalar_lea.vmem %s3, 384
      %v761 = vld [vmem:[%s760] sm:$0xff]
      %v762 = vld [vmem:[%s760 + $0x8] sm:$0xff]
      %v763 = vld [vmem:[%s760 + $0x10] sm:$0xff]
      %v764 = vld [vmem:[%s760 + $0x18] sm:$0xff]
      %v765 = vld [vmem:[%s760 + $0x20] sm:$0xff]
      %v766 = vld [vmem:[%s760 + $0x28] sm:$0xff]
      %v767 = vld [vmem:[%s760 + $0x30] sm:$0xff]
      %v768 = vld [vmem:[%s760 + $0x38] sm:$0xff]
      %v769 = vld [vmem:[%s760 + $0x40] sm:$0xff]
      %v770 = vld [vmem:[%s760 + $0x48] sm:$0xff]
      %v771 = vld [vmem:[%s760 + $0x50] sm:$0xff]
      %v772 = vld [vmem:[%s760 + $0x58] sm:$0xff]
      %v773 = vld [vmem:[%s760 + $0x60] sm:$0xff]
      %v774 = vld [vmem:[%s760 + $0x68] sm:$0xff]
      %v775 = vld [vmem:[%s760 + $0x70] sm:$0xff]
      %v776 = vld [vmem:[%s760 + $0x78] sm:$0xff]
      %777 = vmatprep.subr.mxu0 0.0
      %778 = vmatpush1.msra.mxu0 %v761
      %779 = vmatprep.subr.mxu0 0.0
      %780 = vmatpush1.msra.mxu0 %v762
      %781 = vmatprep.subr.mxu0 0.0
      %782 = vmatpush1.msra.mxu0 %v763
      %783 = vmatprep.subr.mxu0 0.0
      %784 = vmatpush1.msra.mxu0 %v764
      %785 = vmatprep.subr.mxu0 0.0
      %786 = vmatpush1.msra.mxu0 %v765
      %787 = vmatprep.subr.mxu0 0.0
      %788 = vmatpush1.msra.mxu0 %v766
      %789 = vmatprep.subr.mxu0 0.0
      %790 = vmatpush1.msra.mxu0 %v767
      %791 = vmatprep.subr.mxu0 0.0
      %792 = vmatpush1.msra.mxu0 %v768
      %793 = vmatprep.subr.mxu0 0.0
      %794 = vmatpush1.msra.mxu0 %v769
      %795 = vmatprep.subr.mxu0 0.0
      %796 = vmatpush1.msra.mxu0 %v770
      %797 = vmatprep.subr.mxu0 0.0
      %798 = vmatpush1.msra.mxu0 %v771
      %799 = vmatprep.subr.mxu0 0.0
      %800 = vmatpush1.msra.mxu0 %v772
      %801 = vmatprep.subr.mxu0 0.0
      %802 = vmatpush1.msra.mxu0 %v773
      %803 = vmatprep.subr.mxu0 0.0
      %804 = vmatpush1.msra.mxu0 %v774
      %805 = vmatprep.subr.mxu0 0.0
      %806 = vmatpush1.msra.mxu0 %v775
      %807 = vmatprep.subr.mxu0 0.0
      %808 = vmatpush1.msra.mxu0 %v776
      %809 = vmatprep.subr.mxu0 0.0
      %810 = vmatpush1.msra.mxu0 0.0
      %811 = vmatprep.subr.mxu0 0.0
      %812 = vmatpush1.msra.mxu0 0.0
      %813 = vmatprep.subr.mxu0 0.0
      %814 = vmatpush1.msra.mxu0 0.0
      %815 = vmatprep.subr.mxu0 0.0
      %816 = vmatpush1.msra.mxu0 0.0
      %817 = vmatprep.subr.mxu0 0.0
      %818 = vmatpush1.msra.mxu0 0.0
      %819 = vmatprep.subr.mxu0 0.0
      %820 = vmatpush1.msra.mxu0 0.0
      %821 = vmatprep.subr.mxu0 0.0
      %822 = vmatpush1.msra.mxu0 0.0
      %823 = vmatprep.subr.mxu0 0.0
      %824 = vmatpush1.msra.mxu0 0.0
      %825 = vmatprep.subr.mxu0 0.0
      %826 = vmatpush1.msra.mxu0 0.0
      %827 = vmatprep.subr.mxu0 0.0
      %828 = vmatpush1.msra.mxu0 0.0
      %829 = vmatprep.subr.mxu0 0.0
      %830 = vmatpush1.msra.mxu0 0.0
      %831 = vmatprep.subr.mxu0 0.0
      %832 = vmatpush1.msra.mxu0 0.0
      %833 = vmatprep.subr.mxu0 0.0
      %834 = vmatpush1.msra.mxu0 0.0
      %835 = vmatprep.subr.mxu0 0.0
      %836 = vmatpush1.msra.mxu0 0.0
      %837 = vmatprep.subr.mxu0 0.0
      %838 = vmatpush1.msra.mxu0 0.0
      %839 = vmatprep.subr.mxu0 0.0
      %840 = vmatpush1.msra.mxu0 0.0
      %841 = vmatprep.mubr.f32.mxu0 0.0
      %842 = vmatmul.mubr.f32.gmra.mrb[0].mxu0 %v752
      %v843 = vpop.f32.mrb[0].mxu0
      %v844 = vadd.f32 0.0, %v843
      %v845 = vpop.f32.mrb[0].mxu0
      %846 = vmatprep.mubr.f32.mxu0 0.0
      %847 = vmatmul.mubr.f32.gmra.mrb[0].mxu0 %v753
      %v848 = vpop.f32.mrb[0].mxu0
      %v849 = vadd.f32 0.0, %v848
      %v850 = vpop.f32.mrb[0].mxu0
      %851 = vmatprep.mubr.f32.mxu0 0.0
      %852 = vmatmul.mubr.f32.gmra.mrb[0].mxu0 %v754
      %v853 = vpop.f32.mrb[0].mxu0
      %v854 = vadd.f32 0.0, %v853
      %v855 = vpop.f32.mrb[0].mxu0
      %856 = vmatprep.mubr.f32.mxu0 0.0
      %857 = vmatmul.mubr.f32.gmra.mrb[0].mxu0 %v755
      %v858 = vpop.f32.mrb[0].mxu0
      %v859 = vadd.f32 0.0, %v858
      %v860 = vpop.f32.mrb[0].mxu0
      %861 = vmatprep.mubr.f32.mxu0 0.0
      %862 = vmatmul.mubr.f32.gmra.mrb[0].mxu0 %v756
      %v863 = vpop.f32.mrb[0].mxu0
      %v864 = vadd.f32 0.0, %v863
      %v865 = vpop.f32.mrb[0].mxu0
      %866 = vmatprep.mubr.f32.mxu0 0.0
      %867 = vmatmul.mubr.f32.gmra.mrb[0].mxu0 %v757
      %v868 = vpop.f32.mrb[0].mxu0
      %v869 = vadd.f32 0.0, %v868
      %v870 = vpop.f32.mrb[0].mxu0
      %871 = vmatprep.mubr.f32.mxu0 0.0
      %872 = vmatmul.mubr.f32.gmra.mrb[0].mxu0 %v758
      %v873 = vpop.f32.mrb[0].mxu0
      %v874 = vadd.f32 0.0, %v873
      %v875 = vpop.f32.mrb[0].mxu0
      %876 = vmatprep.mubr.f32.mxu0 0.0
      %877 = vmatmul.mubr.f32.gmra.mrb[0].mxu0 %v759
      %v878 = vpop.f32.mrb[0].mxu0
      %v879 = vadd.f32 0.0, %v878
      %v880 = vpop.f32.mrb[0].mxu0
      %881 = vdwg.mxu0
      %v882 = vadd.f32 %v743, %v844
      %v883 = vadd.f32 %v744, %v849
      %v884 = vadd.f32 %v745, %v854
      %v885 = vadd.f32 %v746, %v859
      %v886 = vadd.f32 %v747, %v864
      %v887 = vadd.f32 %v748, %v869
      %v888 = vadd.f32 %v749, %v874
      %v889 = vadd.f32 %v750, %v879
      %v890 = vld [vmem:[%s751 + $0x1] sm:$0xff]
      %v891 = vld [vmem:[%s751 + $0x11] sm:$0xff]
      %v892 = vld [vmem:[%s751 + $0x21] sm:$0xff]
      %v893 = vld [vmem:[%s751 + $0x31] sm:$0xff]
      %v894 = vld [vmem:[%s751 + $0x41] sm:$0xff]
      %v895 = vld [vmem:[%s751 + $0x51] sm:$0xff]
      %v896 = vld [vmem:[%s751 + $0x61] sm:$0xff]
      %v897 = vld [vmem:[%s751 + $0x71] sm:$0xff]
      %s898 = scalar_lea.vmem %s3, 512
      %v899 = vld [vmem:[%s898] sm:$0xff]
      %v900 = vld [vmem:[%s898 + $0x8] sm:$0xff]
      %v901 = vld [vmem:[%s898 + $0x10] sm:$0xff]
      %v902 = vld [vmem:[%s898 + $0x18] sm:$0xff]
      %v903 = vld [vmem:[%s898 + $0x20] sm:$0xff]
      %v904 = vld [vmem:[%s898 + $0x28] sm:$0xff]
      %v905 = vld [vmem:[%s898 + $0x30] sm:$0xff]
      %v906 = vld [vmem:[%s898 + $0x38] sm:$0xff]
      %v907 = vld [vmem:[%s898 + $0x40] sm:$0xff]
      %v908 = vld [vmem:[%s898 + $0x48] sm:$0xff]
      %v909 = vld [vmem:[%s898 + $0x50] sm:$0xff]
      %v910 = vld [vmem:[%s898 + $0x58] sm:$0xff]
      %v911 = vld [vmem:[%s898 + $0x60] sm:$0xff]
      %v912 = vld [vmem:[%s898 + $0x68] sm:$0xff]
      %v913 = vld [vmem:[%s898 + $0x70] sm:$0xff]
      %v914 = vld [vmem:[%s898 + $0x78] sm:$0xff]
      %915 = vmatprep.subr.mxu0 0.0
      %916 = vmatpush1.msra.mxu0 %v899
      %917 = vmatprep.subr.mxu0 0.0
      %918 = vmatpush1.msra.mxu0 %v900
      %919 = vmatprep.subr.mxu0 0.0
      %920 = vmatpush1.msra.mxu0 %v901
      %921 = vmatprep.subr.mxu0 0.0
      %922 = vmatpush1.msra.mxu0 %v902
      %923 = vmatprep.subr.mxu0 0.0
      %924 = vmatpush1.msra.mxu0 %v903
      %925 = vmatprep.subr.mxu0 0.0
      %926 = vmatpush1.msra.mxu0 %v904
      %927 = vmatprep.subr.mxu0 0.0
      %928 = vmatpush1.msra.mxu0 %v905
      %929 = vmatprep.subr.mxu0 0.0
      %930 = vmatpush1.msra.mxu0 %v906
      %931 = vmatprep.subr.mxu0 0.0
      %932 = vmatpush1.msra.mxu0 %v907
      %933 = vmatprep.subr.mxu0 0.0
      %934 = vmatpush1.msra.mxu0 %v908
      %935 = vmatprep.subr.mxu0 0.0
      %936 = vmatpush1.msra.mxu0 %v909
      %937 = vmatprep.subr.mxu0 0.0
      %938 = vmatpush1.msra.mxu0 %v910
      %939 = vmatprep.subr.mxu0 0.0
      %940 = vmatpush1.msra.mxu0 %v911
      %941 = vmatprep.subr.mxu0 0.0
      %942 = vmatpush1.msra.mxu0 %v912
      %943 = vmatprep.subr.mxu0 0.0
      %944 = vmatpush1.msra.mxu0 %v913
      %945 = vmatprep.subr.mxu0 0.0
      %946 = vmatpush1.msra.mxu0 %v914
      %947 = vmatprep.subr.mxu0 0.0
      %948 = vmatpush1.msra.mxu0 0.0
      %949 = vmatprep.subr.mxu0 0.0
      %950 = vmatpush1.msra.mxu0 0.0
      %951 = vmatprep.subr.mxu0 0.0
      %952 = vmatpush1.msra.mxu0 0.0
      %953 = vmatprep.subr.mxu0 0.0
      %954 = vmatpush1.msra.mxu0 0.0
      %955 = vmatprep.subr.mxu0 0.0
      %956 = vmatpush1.msra.mxu0 0.0
      %957 = vmatprep.subr.mxu0 0.0
      %958 = vmatpush1.msra.mxu0 0.0
      %959 = vmatprep.subr.mxu0 0.0
      %960 = vmatpush1.msra.mxu0 0.0
      %961 = vmatprep.subr.mxu0 0.0
      %962 = vmatpush1.msra.mxu0 0.0
      %963 = vmatprep.subr.mxu0 0.0
      %964 = vmatpush1.msra.mxu0 0.0
      %965 = vmatprep.subr.mxu0 0.0
      %966 = vmatpush1.msra.mxu0 0.0
      %967 = vmatprep.subr.mxu0 0.0
      %968 = vmatpush1.msra.mxu0 0.0
      %969 = vmatprep.subr.mxu0 0.0
      %970 = vmatpush1.msra.mxu0 0.0
      %971 = vmatprep.subr.mxu0 0.0
      %972 = vmatpush1.msra.mxu0 0.0
      %973 = vmatprep.subr.mxu0 0.0
      %974 = vmatpush1.msra.mxu0 0.0
      %975 = vmatprep.subr.mxu0 0.0
      %976 = vmatpush1.msra.mxu0 0.0
      %977 = vmatprep.subr.mxu0 0.0
      %978 = vmatpush1.msra.mxu0 0.0
      %979 = vmatprep.mubr.f32.mxu0 0.0
      %980 = vmatmul.mubr.f32.gmra.mrb[0].mxu0 %v890
      %v981 = vpop.f32.mrb[0].mxu0
      %v982 = vadd.f32 0.0, %v981
      %v983 = vpop.f32.mrb[0].mxu0
      %984 = vmatprep.mubr.f32.mxu0 0.0
      %985 = vmatmul.mubr.f32.gmra.mrb[0].mxu0 %v891
      %v986 = vpop.f32.mrb[0].mxu0
      %v987 = vadd.f32 0.0, %v986
      %v988 = vpop.f32.mrb[0].mxu0
      %989 = vmatprep.mubr.f32.mxu0 0.0
      %990 = vmatmul.mubr.f32.gmra.mrb[0].mxu0 %v892
      %v991 = vpop.f32.mrb[0].mxu0
      %v992 = vadd.f32 0.0, %v991
      %v993 = vpop.f32.mrb[0].mxu0
      %994 = vmatprep.mubr.f32.mxu0 0.0
      %995 = vmatmul.mubr.f32.gmra.mrb[0].mxu0 %v893
      %v996 = vpop.f32.mrb[0].mxu0
      %v997 = vadd.f32 0.0, %v996
      %v998 = vpop.f32.mrb[0].mxu0
      %999 = vmatprep.mubr.f32.mxu0 0.0
      %1000 = vmatmul.mubr.f32.gmra.mrb[0].mxu0 %v894
      %v1001 = vpop.f32.mrb[0].mxu0
      %v1002 = vadd.f32 0.0, %v1001
      %v1003 = vpop.f32.mrb[0].mxu0
      %1004 = vmatprep.mubr.f32.mxu0 0.0
      %1005 = vmatmul.mubr.f32.gmra.mrb[0].mxu0 %v895
      %v1006 = vpop.f32.mrb[0].mxu0
      %v1007 = vadd.f32 0.0, %v1006
      %v1008 = vpop.f32.mrb[0].mxu0
      %1009 = vmatprep.mubr.f32.mxu0 0.0
      %1010 = vmatmul.mubr.f32.gmra.mrb[0].mxu0 %v896
      %v1011 = vpop.f32.mrb[0].mxu0
      %v1012 = vadd.f32 0.0, %v1011
      %v1013 = vpop.f32.mrb[0].mxu0
      %1014 = vmatprep.mubr.f32.mxu0 0.0
      %1015 = vmatmul.mubr.f32.gmra.mrb[0].mxu0 %v897
      %v1016 = vpop.f32.mrb[0].mxu0
      %v1017 = vadd.f32 0.0, %v1016
      %v1018 = vpop.f32.mrb[0].mxu0
      %1019 = vdwg.mxu0
      %v1020 = vadd.f32 %v882, %v982
      %v1021 = vadd.f32 %v883, %v987
      %v1022 = vadd.f32 %v884, %v992
      %v1023 = vadd.f32 %v885, %v997
      %v1024 = vadd.f32 %v886, %v1002
      %v1025 = vadd.f32 %v887, %v1007
      %v1026 = vadd.f32 %v888, %v1012
      %v1027 = vadd.f32 %v889, %v1017
      %v1028 = vld [vmem:[%s751 + $0x2] sm:$0xff]
      %v1029 = vld [vmem:[%s751 + $0x12] sm:$0xff]
      %v1030 = vld [vmem:[%s751 + $0x22] sm:$0xff]
      %v1031 = vld [vmem:[%s751 + $0x32] sm:$0xff]
      %v1032 = vld [vmem:[%s751 + $0x42] sm:$0xff]
      %v1033 = vld [vmem:[%s751 + $0x52] sm:$0xff]
      %v1034 = vld [vmem:[%s751 + $0x62] sm:$0xff]
      %v1035 = vld [vmem:[%s751 + $0x72] sm:$0xff]
      %s1036 = scalar_lea.vmem %s3, 640
      %v1037 = vld [vmem:[%s1036] sm:$0xff]
      %v1038 = vld [vmem:[%s1036 + $0x8] sm:$0xff]
      %v1039 = vld [vmem:[%s1036 + $0x10] sm:$0xff]
      %v1040 = vld [vmem:[%s1036 + $0x18] sm:$0xff]
      %v1041 = vld [vmem:[%s1036 + $0x20] sm:$0xff]
      %v1042 = vld [vmem:[%s1036 + $0x28] sm:$0xff]
      %v1043 = vld [vmem:[%s1036 + $0x30] sm:$0xff]
      %v1044 = vld [vmem:[%s1036 + $0x38] sm:$0xff]
      %v1045 = vld [vmem:[%s1036 + $0x40] sm:$0xff]
      %v1046 = vld [vmem:[%s1036 + $0x48] sm:$0xff]
      %v1047 = vld [vmem:[%s1036 + $0x50] sm:$0xff]
      %v1048 = vld [vmem:[%s1036 + $0x58] sm:$0xff]
      %v1049 = vld [vmem:[%s1036 + $0x60] sm:$0xff]
      %v1050 = vld [vmem:[%s1036 + $0x68] sm:$0xff]
      %v1051 = vld [vmem:[%s1036 + $0x70] sm:$0xff]
      %v1052 = vld [vmem:[%s1036 + $0x78] sm:$0xff]
      %1053 = vmatprep.subr.mxu0 0.0
      %1054 = vmatpush1.msra.mxu0 %v1037
      %1055 = vmatprep.subr.mxu0 0.0
      %1056 = vmatpush1.msra.mxu0 %v1038
      %1057 = vmatprep.subr.mxu0 0.0
      %1058 = vmatpush1.msra.mxu0 %v1039
      %1059 = vmatprep.subr.mxu0 0.0
      %1060 = vmatpush1.msra.mxu0 %v1040
      %1061 = vmatprep.subr.mxu0 0.0
      %1062 = vmatpush1.msra.mxu0 %v1041
      %1063 = vmatprep.subr.mxu0 0.0
      %1064 = vmatpush1.msra.mxu0 %v1042
      %1065 = vmatprep.subr.mxu0 0.0
      %1066 = vmatpush1.msra.mxu0 %v1043
      %1067 = vmatprep.subr.mxu0 0.0
      %1068 = vmatpush1.msra.mxu0 %v1044
      %1069 = vmatprep.subr.mxu0 0.0
      %1070 = vmatpush1.msra.mxu0 %v1045
      %1071 = vmatprep.subr.mxu0 0.0
      %1072 = vmatpush1.msra.mxu0 %v1046
      %1073 = vmatprep.subr.mxu0 0.0
      %1074 = vmatpush1.msra.mxu0 %v1047
      %1075 = vmatprep.subr.mxu0 0.0
      %1076 = vmatpush1.msra.mxu0 %v1048
      %1077 = vmatprep.subr.mxu0 0.0
      %1078 = vmatpush1.msra.mxu0 %v1049
      %1079 = vmatprep.subr.mxu0 0.0
      %1080 = vmatpush1.msra.mxu0 %v1050
      %1081 = vmatprep.subr.mxu0 0.0
      %1082 = vmatpush1.msra.mxu0 %v1051
      %1083 = vmatprep.subr.mxu0 0.0
      %1084 = vmatpush1.msra.mxu0 %v1052
      %1085 = vmatprep.subr.mxu0 0.0
      %1086 = vmatpush1.msra.mxu0 0.0
      %1087 = vmatprep.subr.mxu0 0.0
      %1088 = vmatpush1.msra.mxu0 0.0
      %1089 = vmatprep.subr.mxu0 0.0
      %1090 = vmatpush1.msra.mxu0 0.0
      %1091 = vmatprep.subr.mxu0 0.0
      %1092 = vmatpush1.msra.mxu0 0.0
      %1093 = vmatprep.subr.mxu0 0.0
      %1094 = vmatpush1.msra.mxu0 0.0
      %1095 = vmatprep.subr.mxu0 0.0
      %1096 = vmatpush1.msra.mxu0 0.0
      %1097 = vmatprep.subr.mxu0 0.0
      %1098 = vmatpush1.msra.mxu0 0.0
      %1099 = vmatprep.subr.mxu0 0.0
      %1100 = vmatpush1.msra.mxu0 0.0
      %1101 = vmatprep.subr.mxu0 0.0
      %1102 = vmatpush1.msra.mxu0 0.0
      %1103 = vmatprep.subr.mxu0 0.0
      %1104 = vmatpush1.msra.mxu0 0.0
      %1105 = vmatprep.subr.mxu0 0.0
      %1106 = vmatpush1.msra.mxu0 0.0
      %1107 = vmatprep.subr.mxu0 0.0
      %1108 = vmatpush1.msra.mxu0 0.0
      %1109 = vmatprep.subr.mxu0 0.0
      %1110 = vmatpush1.msra.mxu0 0.0
      %1111 = vmatprep.subr.mxu0 0.0
      %1112 = vmatpush1.msra.mxu0 0.0
      %1113 = vmatprep.subr.mxu0 0.0
      %1114 = vmatpush1.msra.mxu0 0.0
      %1115 = vmatprep.subr.mxu0 0.0
      %1116 = vmatpush1.msra.mxu0 0.0
      %1117 = vmatprep.mubr.f32.mxu0 0.0
      %1118 = vmatmul.mubr.f32.gmra.mrb[0].mxu0 %v1028
      %v1119 = vpop.f32.mrb[0].mxu0
      %v1120 = vadd.f32 0.0, %v1119
      %v1121 = vpop.f32.mrb[0].mxu0
      %1122 = vmatprep.mubr.f32.mxu0 0.0
      %1123 = vmatmul.mubr.f32.gmra.mrb[0].mxu0 %v1029
      %v1124 = vpop.f32.mrb[0].mxu0
      %v1125 = vadd.f32 0.0, %v1124
      %v1126 = vpop.f32.mrb[0].mxu0
      %1127 = vmatprep.mubr.f32.mxu0 0.0
      %1128 = vmatmul.mubr.f32.gmra.mrb[0].mxu0 %v1030
      %v1129 = vpop.f32.mrb[0].mxu0
      %v1130 = vadd.f32 0.0, %v1129
      %v1131 = vpop.f32.mrb[0].mxu0
      %1132 = vmatprep.mubr.f32.mxu0 0.0
      %1133 = vmatmul.mubr.f32.gmra.mrb[0].mxu0 %v1031
      %v1134 = vpop.f32.mrb[0].mxu0
      %v1135 = vadd.f32 0.0, %v1134
      %v1136 = vpop.f32.mrb[0].mxu0
      %1137 = vmatprep.mubr.f32.mxu0 0.0
      %1138 = vmatmul.mubr.f32.gmra.mrb[0].mxu0 %v1032
      %v1139 = vpop.f32.mrb[0].mxu0
      %v1140 = vadd.f32 0.0, %v1139
      %v1141 = vpop.f32.mrb[0].mxu0
      %1142 = vmatprep.mubr.f32.mxu0 0.0
      %1143 = vmatmul.mubr.f32.gmra.mrb[0].mxu0 %v1033
      %v1144 = vpop.f32.mrb[0].mxu0
      %v1145 = vadd.f32 0.0, %v1144
      %v1146 = vpop.f32.mrb[0].mxu0
      %1147 = vmatprep.mubr.f32.mxu0 0.0
      %1148 = vmatmul.mubr.f32.gmra.mrb[0].mxu0 %v1034
      %v1149 = vpop.f32.mrb[0].mxu0
      %v1150 = vadd.f32 0.0, %v1149
      %v1151 = vpop.f32.mrb[0].mxu0
      %1152 = vmatprep.mubr.f32.mxu0 0.0
      %1153 = vmatmul.mubr.f32.gmra.mrb[0].mxu0 %v1035
      %v1154 = vpop.f32.mrb[0].mxu0
      %v1155 = vadd.f32 0.0, %v1154
      %v1156 = vpop.f32.mrb[0].mxu0
      %1157 = vdwg.mxu0
      %v1158 = vadd.f32 %v1020, %v1120
      %v1159 = vadd.f32 %v1021, %v1125
      %v1160 = vadd.f32 %v1022, %v1130
      %v1161 = vadd.f32 %v1023, %v1135
      %v1162 = vadd.f32 %v1024, %v1140
      %v1163 = vadd.f32 %v1025, %v1145
      %v1164 = vadd.f32 %v1026, %v1150
      %v1165 = vadd.f32 %v1027, %v1155
      %s1166 = scalar_lea.vmem %s318, 32
      %v1167 = vld [vmem:[%s1166] sm:$0xff]
      %v1168 = vld [vmem:[%s1166 + $0x10] sm:$0xff]
      %v1169 = vld [vmem:[%s1166 + $0x20] sm:$0xff]
      %v1170 = vld [vmem:[%s1166 + $0x30] sm:$0xff]
      %v1171 = vld [vmem:[%s1166 + $0x40] sm:$0xff]
      %v1172 = vld [vmem:[%s1166 + $0x50] sm:$0xff]
      %v1173 = vld [vmem:[%s1166 + $0x60] sm:$0xff]
      %v1174 = vld [vmem:[%s1166 + $0x70] sm:$0xff]
      %s1175 = scalar_lea.vmem %s3, 768
      %v1176 = vld [vmem:[%s1175] sm:$0xff]
      %v1177 = vld [vmem:[%s1175 + $0x8] sm:$0xff]
      %v1178 = vld [vmem:[%s1175 + $0x10] sm:$0xff]
      %v1179 = vld [vmem:[%s1175 + $0x18] sm:$0xff]
      %v1180 = vld [vmem:[%s1175 + $0x20] sm:$0xff]
      %v1181 = vld [vmem:[%s1175 + $0x28] sm:$0xff]
      %v1182 = vld [vmem:[%s1175 + $0x30] sm:$0xff]
      %v1183 = vld [vmem:[%s1175 + $0x38] sm:$0xff]
      %v1184 = vld [vmem:[%s1175 + $0x40] sm:$0xff]
      %v1185 = vld [vmem:[%s1175 + $0x48] sm:$0xff]
      %v1186 = vld [vmem:[%s1175 + $0x50] sm:$0xff]
      %v1187 = vld [vmem:[%s1175 + $0x58] sm:$0xff]
      %v1188 = vld [vmem:[%s1175 + $0x60] sm:$0xff]
      %v1189 = vld [vmem:[%s1175 + $0x68] sm:$0xff]
      %v1190 = vld [vmem:[%s1175 + $0x70] sm:$0xff]
      %v1191 = vld [vmem:[%s1175 + $0x78] sm:$0xff]
      %1192 = vmatprep.subr.mxu0 0.0
      %1193 = vmatpush1.msra.mxu0 %v1176
      %1194 = vmatprep.subr.mxu0 0.0
      %1195 = vmatpush1.msra.mxu0 %v1177
      %1196 = vmatprep.subr.mxu0 0.0
      %1197 = vmatpush1.msra.mxu0 %v1178
      %1198 = vmatprep.subr.mxu0 0.0
      %1199 = vmatpush1.msra.mxu0 %v1179
      %1200 = vmatprep.subr.mxu0 0.0
      %1201 = vmatpush1.msra.mxu0 %v1180
      %1202 = vmatprep.subr.mxu0 0.0
      %1203 = vmatpush1.msra.mxu0 %v1181
      %1204 = vmatprep.subr.mxu0 0.0
      %1205 = vmatpush1.msra.mxu0 %v1182
      %1206 = vmatprep.subr.mxu0 0.0
      %1207 = vmatpush1.msra.mxu0 %v1183
      %1208 = vmatprep.subr.mxu0 0.0
      %1209 = vmatpush1.msra.mxu0 %v1184
      %1210 = vmatprep.subr.mxu0 0.0
      %1211 = vmatpush1.msra.mxu0 %v1185
      %1212 = vmatprep.subr.mxu0 0.0
      %1213 = vmatpush1.msra.mxu0 %v1186
      %1214 = vmatprep.subr.mxu0 0.0
      %1215 = vmatpush1.msra.mxu0 %v1187
      %1216 = vmatprep.subr.mxu0 0.0
      %1217 = vmatpush1.msra.mxu0 %v1188
      %1218 = vmatprep.subr.mxu0 0.0
      %1219 = vmatpush1.msra.mxu0 %v1189
      %1220 = vmatprep.subr.mxu0 0.0
      %1221 = vmatpush1.msra.mxu0 %v1190
      %1222 = vmatprep.subr.mxu0 0.0
      %1223 = vmatpush1.msra.mxu0 %v1191
      %1224 = vmatprep.subr.mxu0 0.0
      %1225 = vmatpush1.msra.mxu0 0.0
      %1226 = vmatprep.subr.mxu0 0.0
      %1227 = vmatpush1.msra.mxu0 0.0
      %1228 = vmatprep.subr.mxu0 0.0
      %1229 = vmatpush1.msra.mxu0 0.0
      %1230 = vmatprep.subr.mxu0 0.0
      %1231 = vmatpush1.msra.mxu0 0.0
      %1232 = vmatprep.subr.mxu0 0.0
      %1233 = vmatpush1.msra.mxu0 0.0
      %1234 = vmatprep.subr.mxu0 0.0
      %1235 = vmatpush1.msra.mxu0 0.0
      %1236 = vmatprep.subr.mxu0 0.0
      %1237 = vmatpush1.msra.mxu0 0.0
      %1238 = vmatprep.subr.mxu0 0.0
      %1239 = vmatpush1.msra.mxu0 0.0
      %1240 = vmatprep.subr.mxu0 0.0
      %1241 = vmatpush1.msra.mxu0 0.0
      %1242 = vmatprep.subr.mxu0 0.0
      %1243 = vmatpush1.msra.mxu0 0.0
      %1244 = vmatprep.subr.mxu0 0.0
      %1245 = vmatpush1.msra.mxu0 0.0
      %1246 = vmatprep.subr.mxu0 0.0
      %1247 = vmatpush1.msra.mxu0 0.0
      %1248 = vmatprep.subr.mxu0 0.0
      %1249 = vmatpush1.msra.mxu0 0.0
      %1250 = vmatprep.subr.mxu0 0.0
      %1251 = vmatpush1.msra.mxu0 0.0
      %1252 = vmatprep.subr.mxu0 0.0
      %1253 = vmatpush1.msra.mxu0 0.0
      %1254 = vmatprep.subr.mxu0 0.0
      %1255 = vmatpush1.msra.mxu0 0.0
      %1256 = vmatprep.mubr.f32.mxu0 0.0
      %1257 = vmatmul.mubr.f32.gmra.mrb[0].mxu0 %v1167
      %v1258 = vpop.f32.mrb[0].mxu0
      %v1259 = vadd.f32 0.0, %v1258
      %v1260 = vpop.f32.mrb[0].mxu0
      %1261 = vmatprep.mubr.f32.mxu0 0.0
      %1262 = vmatmul.mubr.f32.gmra.mrb[0].mxu0 %v1168
      %v1263 = vpop.f32.mrb[0].mxu0
      %v1264 = vadd.f32 0.0, %v1263
      %v1265 = vpop.f32.mrb[0].mxu0
      %1266 = vmatprep.mubr.f32.mxu0 0.0
      %1267 = vmatmul.mubr.f32.gmra.mrb[0].mxu0 %v1169
      %v1268 = vpop.f32.mrb[0].mxu0
      %v1269 = vadd.f32 0.0, %v1268
      %v1270 = vpop.f32.mrb[0].mxu0
      %1271 = vmatprep.mubr.f32.mxu0 0.0
      %1272 = vmatmul.mubr.f32.gmra.mrb[0].mxu0 %v1170
      %v1273 = vpop.f32.mrb[0].mxu0
      %v1274 = vadd.f32 0.0, %v1273
      %v1275 = vpop.f32.mrb[0].mxu0
      %1276 = vmatprep.mubr.f32.mxu0 0.0
      %1277 = vmatmul.mubr.f32.gmra.mrb[0].mxu0 %v1171
      %v1278 = vpop.f32.mrb[0].mxu0
      %v1279 = vadd.f32 0.0, %v1278
      %v1280 = vpop.f32.mrb[0].mxu0
      %1281 = vmatprep.mubr.f32.mxu0 0.0
      %1282 = vmatmul.mubr.f32.gmra.mrb[0].mxu0 %v1172
      %v1283 = vpop.f32.mrb[0].mxu0
      %v1284 = vadd.f32 0.0, %v1283
      %v1285 = vpop.f32.mrb[0].mxu0
      %1286 = vmatprep.mubr.f32.mxu0 0.0
      %1287 = vmatmul.mubr.f32.gmra.mrb[0].mxu0 %v1173
      %v1288 = vpop.f32.mrb[0].mxu0
      %v1289 = vadd.f32 0.0, %v1288
      %v1290 = vpop.f32.mrb[0].mxu0
      %1291 = vmatprep.mubr.f32.mxu0 0.0
      %1292 = vmatmul.mubr.f32.gmra.mrb[0].mxu0 %v1174
      %v1293 = vpop.f32.mrb[0].mxu0
      %v1294 = vadd.f32 0.0, %v1293
      %v1295 = vpop.f32.mrb[0].mxu0
      %1296 = vdwg.mxu0
      %v1297 = vadd.f32 %v1158, %v1259
      %v1298 = vadd.f32 %v1159, %v1264
      %v1299 = vadd.f32 %v1160, %v1269
      %v1300 = vadd.f32 %v1161, %v1274
      %v1301 = vadd.f32 %v1162, %v1279
      %v1302 = vadd.f32 %v1163, %v1284
      %v1303 = vadd.f32 %v1164, %v1289
      %v1304 = vadd.f32 %v1165, %v1294
      %v1305 = vld [vmem:[%s1166 + $0x1] sm:$0xff]
      %v1306 = vld [vmem:[%s1166 + $0x11] sm:$0xff]
      %v1307 = vld [vmem:[%s1166 + $0x21] sm:$0xff]
      %v1308 = vld [vmem:[%s1166 + $0x31] sm:$0xff]
      %v1309 = vld [vmem:[%s1166 + $0x41] sm:$0xff]
      %v1310 = vld [vmem:[%s1166 + $0x51] sm:$0xff]
      %v1311 = vld [vmem:[%s1166 + $0x61] sm:$0xff]
      %v1312 = vld [vmem:[%s1166 + $0x71] sm:$0xff]
      %s1313 = scalar_lea.vmem %s3, 896
      %v1314 = vld [vmem:[%s1313] sm:$0xff]
      %v1315 = vld [vmem:[%s1313 + $0x8] sm:$0xff]
      %v1316 = vld [vmem:[%s1313 + $0x10] sm:$0xff]
      %v1317 = vld [vmem:[%s1313 + $0x18] sm:$0xff]
      %v1318 = vld [vmem:[%s1313 + $0x20] sm:$0xff]
      %v1319 = vld [vmem:[%s1313 + $0x28] sm:$0xff]
      %v1320 = vld [vmem:[%s1313 + $0x30] sm:$0xff]
      %v1321 = vld [vmem:[%s1313 + $0x38] sm:$0xff]
      %v1322 = vld [vmem:[%s1313 + $0x40] sm:$0xff]
      %v1323 = vld [vmem:[%s1313 + $0x48] sm:$0xff]
      %v1324 = vld [vmem:[%s1313 + $0x50] sm:$0xff]
      %v1325 = vld [vmem:[%s1313 + $0x58] sm:$0xff]
      %v1326 = vld [vmem:[%s1313 + $0x60] sm:$0xff]
      %v1327 = vld [vmem:[%s1313 + $0x68] sm:$0xff]
      %v1328 = vld [vmem:[%s1313 + $0x70] sm:$0xff]
      %v1329 = vld [vmem:[%s1313 + $0x78] sm:$0xff]
      %1330 = vmatprep.subr.mxu0 0.0
      %1331 = vmatpush1.msra.mxu0 %v1314
      %1332 = vmatprep.subr.mxu0 0.0
      %1333 = vmatpush1.msra.mxu0 %v1315
      %1334 = vmatprep.subr.mxu0 0.0
      %1335 = vmatpush1.msra.mxu0 %v1316
      %1336 = vmatprep.subr.mxu0 0.0
      %1337 = vmatpush1.msra.mxu0 %v1317
      %1338 = vmatprep.subr.mxu0 0.0
      %1339 = vmatpush1.msra.mxu0 %v1318
      %1340 = vmatprep.subr.mxu0 0.0
      %1341 = vmatpush1.msra.mxu0 %v1319
      %1342 = vmatprep.subr.mxu0 0.0
      %1343 = vmatpush1.msra.mxu0 %v1320
      %1344 = vmatprep.subr.mxu0 0.0
      %1345 = vmatpush1.msra.mxu0 %v1321
      %1346 = vmatprep.subr.mxu0 0.0
      %1347 = vmatpush1.msra.mxu0 %v1322
      %1348 = vmatprep.subr.mxu0 0.0
      %1349 = vmatpush1.msra.mxu0 %v1323
      %1350 = vmatprep.subr.mxu0 0.0
      %1351 = vmatpush1.msra.mxu0 %v1324
      %1352 = vmatprep.subr.mxu0 0.0
      %1353 = vmatpush1.msra.mxu0 %v1325
      %1354 = vmatprep.subr.mxu0 0.0
      %1355 = vmatpush1.msra.mxu0 %v1326
      %1356 = vmatprep.subr.mxu0 0.0
      %1357 = vmatpush1.msra.mxu0 %v1327
      %1358 = vmatprep.subr.mxu0 0.0
      %1359 = vmatpush1.msra.mxu0 %v1328
      %1360 = vmatprep.subr.mxu0 0.0
      %1361 = vmatpush1.msra.mxu0 %v1329
      %1362 = vmatprep.subr.mxu0 0.0
      %1363 = vmatpush1.msra.mxu0 0.0
      %1364 = vmatprep.subr.mxu0 0.0
      %1365 = vmatpush1.msra.mxu0 0.0
      %1366 = vmatprep.subr.mxu0 0.0
      %1367 = vmatpush1.msra.mxu0 0.0
      %1368 = vmatprep.subr.mxu0 0.0
      %1369 = vmatpush1.msra.mxu0 0.0
      %1370 = vmatprep.subr.mxu0 0.0
      %1371 = vmatpush1.msra.mxu0 0.0
      %1372 = vmatprep.subr.mxu0 0.0
      %1373 = vmatpush1.msra.mxu0 0.0
      %1374 = vmatprep.subr.mxu0 0.0
      %1375 = vmatpush1.msra.mxu0 0.0
      %1376 = vmatprep.subr.mxu0 0.0
      %1377 = vmatpush1.msra.mxu0 0.0
      %1378 = vmatprep.subr.mxu0 0.0
      %1379 = vmatpush1.msra.mxu0 0.0
      %1380 = vmatprep.subr.mxu0 0.0
      %1381 = vmatpush1.msra.mxu0 0.0
      %1382 = vmatprep.subr.mxu0 0.0
      %1383 = vmatpush1.msra.mxu0 0.0
      %1384 = vmatprep.subr.mxu0 0.0
      %1385 = vmatpush1.msra.mxu0 0.0
      %1386 = vmatprep.subr.mxu0 0.0
      %1387 = vmatpush1.msra.mxu0 0.0
      %1388 = vmatprep.subr.mxu0 0.0
      %1389 = vmatpush1.msra.mxu0 0.0
      %1390 = vmatprep.subr.mxu0 0.0
      %1391 = vmatpush1.msra.mxu0 0.0
      %1392 = vmatprep.subr.mxu0 0.0
      %1393 = vmatpush1.msra.mxu0 0.0
      %1394 = vmatprep.mubr.f32.mxu0 0.0
      %1395 = vmatmul.mubr.f32.gmra.mrb[0].mxu0 %v1305
      %v1396 = vpop.f32.mrb[0].mxu0
      %v1397 = vadd.f32 0.0, %v1396
      %v1398 = vpop.f32.mrb[0].mxu0
      %1399 = vmatprep.mubr.f32.mxu0 0.0
      %1400 = vmatmul.mubr.f32.gmra.mrb[0].mxu0 %v1306
      %v1401 = vpop.f32.mrb[0].mxu0
      %v1402 = vadd.f32 0.0, %v1401
      %v1403 = vpop.f32.mrb[0].mxu0
      %1404 = vmatprep.mubr.f32.mxu0 0.0
      %1405 = vmatmul.mubr.f32.gmra.mrb[0].mxu0 %v1307
      %v1406 = vpop.f32.mrb[0].mxu0
      %v1407 = vadd.f32 0.0, %v1406
      %v1408 = vpop.f32.mrb[0].mxu0
      %1409 = vmatprep.mubr.f32.mxu0 0.0
      %1410 = vmatmul.mubr.f32.gmra.mrb[0].mxu0 %v1308
      %v1411 = vpop.f32.mrb[0].mxu0
      %v1412 = vadd.f32 0.0, %v1411
      %v1413 = vpop.f32.mrb[0].mxu0
      %1414 = vmatprep.mubr.f32.mxu0 0.0
      %1415 = vmatmul.mubr.f32.gmra.mrb[0].mxu0 %v1309
      %v1416 = vpop.f32.mrb[0].mxu0
      %v1417 = vadd.f32 0.0, %v1416
      %v1418 = vpop.f32.mrb[0].mxu0
      %1419 = vmatprep.mubr.f32.mxu0 0.0
      %1420 = vmatmul.mubr.f32.gmra.mrb[0].mxu0 %v1310
      %v1421 = vpop.f32.mrb[0].mxu0
      %v1422 = vadd.f32 0.0, %v1421
      %v1423 = vpop.f32.mrb[0].mxu0
      %1424 = vmatprep.mubr.f32.mxu0 0.0
      %1425 = vmatmul.mubr.f32.gmra.mrb[0].mxu0 %v1311
      %v1426 = vpop.f32.mrb[0].mxu0
      %v1427 = vadd.f32 0.0, %v1426
      %v1428 = vpop.f32.mrb[0].mxu0
      %1429 = vmatprep.mubr.f32.mxu0 0.0
      %1430 = vmatmul.mubr.f32.gmra.mrb[0].mxu0 %v1312
      %v1431 = vpop.f32.mrb[0].mxu0
      %v1432 = vadd.f32 0.0, %v1431
      %v1433 = vpop.f32.mrb[0].mxu0
      %1434 = vdwg.mxu0
      %v1435 = vadd.f32 %v1297, %v1397
      %v1436 = vadd.f32 %v1298, %v1402
      %v1437 = vadd.f32 %v1299, %v1407
      %v1438 = vadd.f32 %v1300, %v1412
      %v1439 = vadd.f32 %v1301, %v1417
      %v1440 = vadd.f32 %v1302, %v1422
      %v1441 = vadd.f32 %v1303, %v1427
      %v1442 = vadd.f32 %v1304, %v1432
      %v1443 = vld [vmem:[%s1166 + $0x2] sm:$0xff]
      %v1444 = vld [vmem:[%s1166 + $0x12] sm:$0xff]
      %v1445 = vld [vmem:[%s1166 + $0x22] sm:$0xff]
      %v1446 = vld [vmem:[%s1166 + $0x32] sm:$0xff]
      %v1447 = vld [vmem:[%s1166 + $0x42] sm:$0xff]
      %v1448 = vld [vmem:[%s1166 + $0x52] sm:$0xff]
      %v1449 = vld [vmem:[%s1166 + $0x62] sm:$0xff]
      %v1450 = vld [vmem:[%s1166 + $0x72] sm:$0xff]
      %s1451 = scalar_lea.vmem %s3, 1024
      %v1452 = vld [vmem:[%s1451] sm:$0xff]
      %v1453 = vld [vmem:[%s1451 + $0x8] sm:$0xff]
      %v1454 = vld [vmem:[%s1451 + $0x10] sm:$0xff]
      %v1455 = vld [vmem:[%s1451 + $0x18] sm:$0xff]
      %v1456 = vld [vmem:[%s1451 + $0x20] sm:$0xff]
      %v1457 = vld [vmem:[%s1451 + $0x28] sm:$0xff]
      %v1458 = vld [vmem:[%s1451 + $0x30] sm:$0xff]
      %v1459 = vld [vmem:[%s1451 + $0x38] sm:$0xff]
      %v1460 = vld [vmem:[%s1451 + $0x40] sm:$0xff]
      %v1461 = vld [vmem:[%s1451 + $0x48] sm:$0xff]
      %v1462 = vld [vmem:[%s1451 + $0x50] sm:$0xff]
      %v1463 = vld [vmem:[%s1451 + $0x58] sm:$0xff]
      %v1464 = vld [vmem:[%s1451 + $0x60] sm:$0xff]
      %v1465 = vld [vmem:[%s1451 + $0x68] sm:$0xff]
      %v1466 = vld [vmem:[%s1451 + $0x70] sm:$0xff]
      %v1467 = vld [vmem:[%s1451 + $0x78] sm:$0xff]
      %1468 = vmatprep.subr.mxu0 0.0
      %1469 = vmatpush1.msra.mxu0 %v1452
      %1470 = vmatprep.subr.mxu0 0.0
      %1471 = vmatpush1.msra.mxu0 %v1453
      %1472 = vmatprep.subr.mxu0 0.0
      %1473 = vmatpush1.msra.mxu0 %v1454
      %1474 = vmatprep.subr.mxu0 0.0
      %1475 = vmatpush1.msra.mxu0 %v1455
      %1476 = vmatprep.subr.mxu0 0.0
      %1477 = vmatpush1.msra.mxu0 %v1456
      %1478 = vmatprep.subr.mxu0 0.0
      %1479 = vmatpush1.msra.mxu0 %v1457
      %1480 = vmatprep.subr.mxu0 0.0
      %1481 = vmatpush1.msra.mxu0 %v1458
      %1482 = vmatprep.subr.mxu0 0.0
      %1483 = vmatpush1.msra.mxu0 %v1459
      %1484 = vmatprep.subr.mxu0 0.0
      %1485 = vmatpush1.msra.mxu0 %v1460
      %1486 = vmatprep.subr.mxu0 0.0
      %1487 = vmatpush1.msra.mxu0 %v1461
      %1488 = vmatprep.subr.mxu0 0.0
      %1489 = vmatpush1.msra.mxu0 %v1462
      %1490 = vmatprep.subr.mxu0 0.0
      %1491 = vmatpush1.msra.mxu0 %v1463
      %1492 = vmatprep.subr.mxu0 0.0
      %1493 = vmatpush1.msra.mxu0 %v1464
      %1494 = vmatprep.subr.mxu0 0.0
      %1495 = vmatpush1.msra.mxu0 %v1465
      %1496 = vmatprep.subr.mxu0 0.0
      %1497 = vmatpush1.msra.mxu0 %v1466
      %1498 = vmatprep.subr.mxu0 0.0
      %1499 = vmatpush1.msra.mxu0 %v1467
      %1500 = vmatprep.subr.mxu0 0.0
      %1501 = vmatpush1.msra.mxu0 0.0
      %1502 = vmatprep.subr.mxu0 0.0
      %1503 = vmatpush1.msra.mxu0 0.0
      %1504 = vmatprep.subr.mxu0 0.0
      %1505 = vmatpush1.msra.mxu0 0.0
      %1506 = vmatprep.subr.mxu0 0.0
      %1507 = vmatpush1.msra.mxu0 0.0
      %1508 = vmatprep.subr.mxu0 0.0
      %1509 = vmatpush1.msra.mxu0 0.0
      %1510 = vmatprep.subr.mxu0 0.0
      %1511 = vmatpush1.msra.mxu0 0.0
      %1512 = vmatprep.subr.mxu0 0.0
      %1513 = vmatpush1.msra.mxu0 0.0
      %1514 = vmatprep.subr.mxu0 0.0
      %1515 = vmatpush1.msra.mxu0 0.0
      %1516 = vmatprep.subr.mxu0 0.0
      %1517 = vmatpush1.msra.mxu0 0.0
      %1518 = vmatprep.subr.mxu0 0.0
      %1519 = vmatpush1.msra.mxu0 0.0
      %1520 = vmatprep.subr.mxu0 0.0
      %1521 = vmatpush1.msra.mxu0 0.0
      %1522 = vmatprep.subr.mxu0 0.0
      %1523 = vmatpush1.msra.mxu0 0.0
      %1524 = vmatprep.subr.mxu0 0.0
      %1525 = vmatpush1.msra.mxu0 0.0
      %1526 = vmatprep.subr.mxu0 0.0
      %1527 = vmatpush1.msra.mxu0 0.0
      %1528 = vmatprep.subr.mxu0 0.0
      %1529 = vmatpush1.msra.mxu0 0.0
      %1530 = vmatprep.subr.mxu0 0.0
      %1531 = vmatpush1.msra.mxu0 0.0
      %1532 = vmatprep.mubr.f32.mxu0 0.0
      %1533 = vmatmul.mubr.f32.gmra.mrb[0].mxu0 %v1443
      %v1534 = vpop.f32.mrb[0].mxu0
      %v1535 = vadd.f32 0.0, %v1534
      %v1536 = vpop.f32.mrb[0].mxu0
      %1537 = vmatprep.mubr.f32.mxu0 0.0
      %1538 = vmatmul.mubr.f32.gmra.mrb[0].mxu0 %v1444
      %v1539 = vpop.f32.mrb[0].mxu0
      %v1540 = vadd.f32 0.0, %v1539
      %v1541 = vpop.f32.mrb[0].mxu0
      %1542 = vmatprep.mubr.f32.mxu0 0.0
      %1543 = vmatmul.mubr.f32.gmra.mrb[0].mxu0 %v1445
      %v1544 = vpop.f32.mrb[0].mxu0
      %v1545 = vadd.f32 0.0, %v1544
      %v1546 = vpop.f32.mrb[0].mxu0
      %1547 = vmatprep.mubr.f32.mxu0 0.0
      %1548 = vmatmul.mubr.f32.gmra.mrb[0].mxu0 %v1446
      %v1549 = vpop.f32.mrb[0].mxu0
      %v1550 = vadd.f32 0.0, %v1549
      %v1551 = vpop.f32.mrb[0].mxu0
      %1552 = vmatprep.mubr.f32.mxu0 0.0
      %1553 = vmatmul.mubr.f32.gmra.mrb[0].mxu0 %v1447
      %v1554 = vpop.f32.mrb[0].mxu0
      %v1555 = vadd.f32 0.0, %v1554
      %v1556 = vpop.f32.mrb[0].mxu0
      %1557 = vmatprep.mubr.f32.mxu0 0.0
      %1558 = vmatmul.mubr.f32.gmra.mrb[0].mxu0 %v1448
      %v1559 = vpop.f32.mrb[0].mxu0
      %v1560 = vadd.f32 0.0, %v1559
      %v1561 = vpop.f32.mrb[0].mxu0
      %1562 = vmatprep.mubr.f32.mxu0 0.0
      %1563 = vmatmul.mubr.f32.gmra.mrb[0].mxu0 %v1449
      %v1564 = vpop.f32.mrb[0].mxu0
      %v1565 = vadd.f32 0.0, %v1564
      %v1566 = vpop.f32.mrb[0].mxu0
      %1567 = vmatprep.mubr.f32.mxu0 0.0
      %1568 = vmatmul.mubr.f32.gmra.mrb[0].mxu0 %v1450
      %v1569 = vpop.f32.mrb[0].mxu0
      %v1570 = vadd.f32 0.0, %v1569
      %v1571 = vpop.f32.mrb[0].mxu0
      %1572 = vdwg.mxu0
      %v1573 = vadd.f32 %v1435, %v1535
      %v1574 = vadd.f32 %v1436, %v1540
      %v1575 = vadd.f32 %v1437, %v1545
      %v1576 = vadd.f32 %v1438, %v1550
      %v1577 = vadd.f32 %v1439, %v1555
      %v1578 = vadd.f32 %v1440, %v1560
      %v1579 = vadd.f32 %v1441, %v1565
      %v1580 = vadd.f32 %v1442, %v1570
      %v1581 = vld [vmem:[%s328] sm:$0xff]
      %v1582 = vld [vmem:[%s328 + $0x10] sm:$0xff]
      %v1583 = vld [vmem:[%s328 + $0x20] sm:$0xff]
      %v1584 = vld [vmem:[%s328 + $0x30] sm:$0xff]
      %v1585 = vld [vmem:[%s328 + $0x40] sm:$0xff]
      %v1586 = vld [vmem:[%s328 + $0x50] sm:$0xff]
      %v1587 = vld [vmem:[%s328 + $0x60] sm:$0xff]
      %v1588 = vld [vmem:[%s328 + $0x70] sm:$0xff]
      %s1589 = scalar_lea.vmem %s3, 1152
      %v1590 = vld [vmem:[%s1589] sm:$0xff]
      %v1591 = vld [vmem:[%s1589 + $0x8] sm:$0xff]
      %v1592 = vld [vmem:[%s1589 + $0x10] sm:$0xff]
      %v1593 = vld [vmem:[%s1589 + $0x18] sm:$0xff]
      %v1594 = vld [vmem:[%s1589 + $0x20] sm:$0xff]
      %v1595 = vld [vmem:[%s1589 + $0x28] sm:$0xff]
      %v1596 = vld [vmem:[%s1589 + $0x30] sm:$0xff]
      %v1597 = vld [vmem:[%s1589 + $0x38] sm:$0xff]
      %v1598 = vld [vmem:[%s1589 + $0x40] sm:$0xff]
      %v1599 = vld [vmem:[%s1589 + $0x48] sm:$0xff]
      %v1600 = vld [vmem:[%s1589 + $0x50] sm:$0xff]
      %v1601 = vld [vmem:[%s1589 + $0x58] sm:$0xff]
      %v1602 = vld [vmem:[%s1589 + $0x60] sm:$0xff]
      %v1603 = vld [vmem:[%s1589 + $0x68] sm:$0xff]
      %v1604 = vld [vmem:[%s1589 + $0x70] sm:$0xff]
      %v1605 = vld [vmem:[%s1589 + $0x78] sm:$0xff]
      %1606 = vmatprep.subr.mxu0 0.0
      %1607 = vmatpush1.msra.mxu0 %v1590
      %1608 = vmatprep.subr.mxu0 0.0
      %1609 = vmatpush1.msra.mxu0 %v1591
      %1610 = vmatprep.subr.mxu0 0.0
      %1611 = vmatpush1.msra.mxu0 %v1592
      %1612 = vmatprep.subr.mxu0 0.0
      %1613 = vmatpush1.msra.mxu0 %v1593
      %1614 = vmatprep.subr.mxu0 0.0
      %1615 = vmatpush1.msra.mxu0 %v1594
      %1616 = vmatprep.subr.mxu0 0.0
      %1617 = vmatpush1.msra.mxu0 %v1595
      %1618 = vmatprep.subr.mxu0 0.0
      %1619 = vmatpush1.msra.mxu0 %v1596
      %1620 = vmatprep.subr.mxu0 0.0
      %1621 = vmatpush1.msra.mxu0 %v1597
      %1622 = vmatprep.subr.mxu0 0.0
      %1623 = vmatpush1.msra.mxu0 %v1598
      %1624 = vmatprep.subr.mxu0 0.0
      %1625 = vmatpush1.msra.mxu0 %v1599
      %1626 = vmatprep.subr.mxu0 0.0
      %1627 = vmatpush1.msra.mxu0 %v1600
      %1628 = vmatprep.subr.mxu0 0.0
      %1629 = vmatpush1.msra.mxu0 %v1601
      %1630 = vmatprep.subr.mxu0 0.0
      %1631 = vmatpush1.msra.mxu0 %v1602
      %1632 = vmatprep.subr.mxu0 0.0
      %1633 = vmatpush1.msra.mxu0 %v1603
      %1634 = vmatprep.subr.mxu0 0.0
      %1635 = vmatpush1.msra.mxu0 %v1604
      %1636 = vmatprep.subr.mxu0 0.0
      %1637 = vmatpush1.msra.mxu0 %v1605
      %1638 = vmatprep.subr.mxu0 0.0
      %1639 = vmatpush1.msra.mxu0 0.0
      %1640 = vmatprep.subr.mxu0 0.0
      %1641 = vmatpush1.msra.mxu0 0.0
      %1642 = vmatprep.subr.mxu0 0.0
      %1643 = vmatpush1.msra.mxu0 0.0
      %1644 = vmatprep.subr.mxu0 0.0
      %1645 = vmatpush1.msra.mxu0 0.0
      %1646 = vmatprep.subr.mxu0 0.0
      %1647 = vmatpush1.msra.mxu0 0.0
      %1648 = vmatprep.subr.mxu0 0.0
      %1649 = vmatpush1.msra.mxu0 0.0
      %1650 = vmatprep.subr.mxu0 0.0
      %1651 = vmatpush1.msra.mxu0 0.0
      %1652 = vmatprep.subr.mxu0 0.0
      %1653 = vmatpush1.msra.mxu0 0.0
      %1654 = vmatprep.subr.mxu0 0.0
      %1655 = vmatpush1.msra.mxu0 0.0
      %1656 = vmatprep.subr.mxu0 0.0
      %1657 = vmatpush1.msra.mxu0 0.0
      %1658 = vmatprep.subr.mxu0 0.0
      %1659 = vmatpush1.msra.mxu0 0.0
      %1660 = vmatprep.subr.mxu0 0.0
      %1661 = vmatpush1.msra.mxu0 0.0
      %1662 = vmatprep.subr.mxu0 0.0
      %1663 = vmatpush1.msra.mxu0 0.0
      %1664 = vmatprep.subr.mxu0 0.0
      %1665 = vmatpush1.msra.mxu0 0.0
      %1666 = vmatprep.subr.mxu0 0.0
      %1667 = vmatpush1.msra.mxu0 0.0
      %1668 = vmatprep.subr.mxu0 0.0
      %1669 = vmatpush1.msra.mxu0 0.0
      %1670 = vmatprep.mubr.f32.mxu0 0.0
      %1671 = vmatmul.mubr.f32.gmra.mrb[0].mxu0 %v1581
      %v1672 = vpop.f32.mrb[0].mxu0
      %v1673 = vadd.f32 0.0, %v1672
      %v1674 = vpop.f32.mrb[0].mxu0
      %1675 = vmatprep.mubr.f32.mxu0 0.0
      %1676 = vmatmul.mubr.f32.gmra.mrb[0].mxu0 %v1582
      %v1677 = vpop.f32.mrb[0].mxu0
      %v1678 = vadd.f32 0.0, %v1677
      %v1679 = vpop.f32.mrb[0].mxu0
      %1680 = vmatprep.mubr.f32.mxu0 0.0
      %1681 = vmatmul.mubr.f32.gmra.mrb[0].mxu0 %v1583
      %v1682 = vpop.f32.mrb[0].mxu0
      %v1683 = vadd.f32 0.0, %v1682
      %v1684 = vpop.f32.mrb[0].mxu0
      %1685 = vmatprep.mubr.f32.mxu0 0.0
      %1686 = vmatmul.mubr.f32.gmra.mrb[0].mxu0 %v1584
      %v1687 = vpop.f32.mrb[0].mxu0
      %v1688 = vadd.f32 0.0, %v1687
      %v1689 = vpop.f32.mrb[0].mxu0
      %1690 = vmatprep.mubr.f32.mxu0 0.0
      %1691 = vmatmul.mubr.f32.gmra.mrb[0].mxu0 %v1585
      %v1692 = vpop.f32.mrb[0].mxu0
      %v1693 = vadd.f32 0.0, %v1692
      %v1694 = vpop.f32.mrb[0].mxu0
      %1695 = vmatprep.mubr.f32.mxu0 0.0
      %1696 = vmatmul.mubr.f32.gmra.mrb[0].mxu0 %v1586
      %v1697 = vpop.f32.mrb[0].mxu0
      %v1698 = vadd.f32 0.0, %v1697
      %v1699 = vpop.f32.mrb[0].mxu0
      %1700 = vmatprep.mubr.f32.mxu0 0.0
      %1701 = vmatmul.mubr.f32.gmra.mrb[0].mxu0 %v1587
      %v1702 = vpop.f32.mrb[0].mxu0
      %v1703 = vadd.f32 0.0, %v1702
      %v1704 = vpop.f32.mrb[0].mxu0
      %1705 = vmatprep.mubr.f32.mxu0 0.0
      %1706 = vmatmul.mubr.f32.gmra.mrb[0].mxu0 %v1588
      %v1707 = vpop.f32.mrb[0].mxu0
      %v1708 = vadd.f32 0.0, %v1707
      %v1709 = vpop.f32.mrb[0].mxu0
      %1710 = vdwg.mxu0
      %v1711 = vadd.f32 %v1573, %v1673
      %v1712 = vadd.f32 %v1574, %v1678
      %v1713 = vadd.f32 %v1575, %v1683
      %v1714 = vadd.f32 %v1576, %v1688
      %v1715 = vadd.f32 %v1577, %v1693
      %v1716 = vadd.f32 %v1578, %v1698
      %v1717 = vadd.f32 %v1579, %v1703
      %v1718 = vadd.f32 %v1580, %v1708
      %v1719 = vld [vmem:[%s328 + $0x1] sm:$0xff]
      %v1720 = vld [vmem:[%s328 + $0x11] sm:$0xff]
      %v1721 = vld [vmem:[%s328 + $0x21] sm:$0xff]
      %v1722 = vld [vmem:[%s328 + $0x31] sm:$0xff]
      %v1723 = vld [vmem:[%s328 + $0x41] sm:$0xff]
      %v1724 = vld [vmem:[%s328 + $0x51] sm:$0xff]
      %v1725 = vld [vmem:[%s328 + $0x61] sm:$0xff]
      %v1726 = vld [vmem:[%s328 + $0x71] sm:$0xff]
      %s1727 = scalar_lea.vmem %s3, 1280
      %v1728 = vld [vmem:[%s1727] sm:$0xff]
      %v1729 = vld [vmem:[%s1727 + $0x8] sm:$0xff]
      %v1730 = vld [vmem:[%s1727 + $0x10] sm:$0xff]
      %v1731 = vld [vmem:[%s1727 + $0x18] sm:$0xff]
      %v1732 = vld [vmem:[%s1727 + $0x20] sm:$0xff]
      %v1733 = vld [vmem:[%s1727 + $0x28] sm:$0xff]
      %v1734 = vld [vmem:[%s1727 + $0x30] sm:$0xff]
      %v1735 = vld [vmem:[%s1727 + $0x38] sm:$0xff]
      %v1736 = vld [vmem:[%s1727 + $0x40] sm:$0xff]
      %v1737 = vld [vmem:[%s1727 + $0x48] sm:$0xff]
      %v1738 = vld [vmem:[%s1727 + $0x50] sm:$0xff]
      %v1739 = vld [vmem:[%s1727 + $0x58] sm:$0xff]
      %v1740 = vld [vmem:[%s1727 + $0x60] sm:$0xff]
      %v1741 = vld [vmem:[%s1727 + $0x68] sm:$0xff]
      %v1742 = vld [vmem:[%s1727 + $0x70] sm:$0xff]
      %v1743 = vld [vmem:[%s1727 + $0x78] sm:$0xff]
      %1744 = vmatprep.subr.mxu0 0.0
      %1745 = vmatpush1.msra.mxu0 %v1728
      %1746 = vmatprep.subr.mxu0 0.0
      %1747 = vmatpush1.msra.mxu0 %v1729
      %1748 = vmatprep.subr.mxu0 0.0
      %1749 = vmatpush1.msra.mxu0 %v1730
      %1750 = vmatprep.subr.mxu0 0.0
      %1751 = vmatpush1.msra.mxu0 %v1731
      %1752 = vmatprep.subr.mxu0 0.0
      %1753 = vmatpush1.msra.mxu0 %v1732
      %1754 = vmatprep.subr.mxu0 0.0
      %1755 = vmatpush1.msra.mxu0 %v1733
      %1756 = vmatprep.subr.mxu0 0.0
      %1757 = vmatpush1.msra.mxu0 %v1734
      %1758 = vmatprep.subr.mxu0 0.0
      %1759 = vmatpush1.msra.mxu0 %v1735
      %1760 = vmatprep.subr.mxu0 0.0
      %1761 = vmatpush1.msra.mxu0 %v1736
      %1762 = vmatprep.subr.mxu0 0.0
      %1763 = vmatpush1.msra.mxu0 %v1737
      %1764 = vmatprep.subr.mxu0 0.0
      %1765 = vmatpush1.msra.mxu0 %v1738
      %1766 = vmatprep.subr.mxu0 0.0
      %1767 = vmatpush1.msra.mxu0 %v1739
      %1768 = vmatprep.subr.mxu0 0.0
      %1769 = vmatpush1.msra.mxu0 %v1740
      %1770 = vmatprep.subr.mxu0 0.0
      %1771 = vmatpush1.msra.mxu0 %v1741
      %1772 = vmatprep.subr.mxu0 0.0
      %1773 = vmatpush1.msra.mxu0 %v1742
      %1774 = vmatprep.subr.mxu0 0.0
      %1775 = vmatpush1.msra.mxu0 %v1743
      %1776 = vmatprep.subr.mxu0 0.0
      %1777 = vmatpush1.msra.mxu0 0.0
      %1778 = vmatprep.subr.mxu0 0.0
      %1779 = vmatpush1.msra.mxu0 0.0
      %1780 = vmatprep.subr.mxu0 0.0
      %1781 = vmatpush1.msra.mxu0 0.0
      %1782 = vmatprep.subr.mxu0 0.0
      %1783 = vmatpush1.msra.mxu0 0.0
      %1784 = vmatprep.subr.mxu0 0.0
      %1785 = vmatpush1.msra.mxu0 0.0
      %1786 = vmatprep.subr.mxu0 0.0
      %1787 = vmatpush1.msra.mxu0 0.0
      %1788 = vmatprep.subr.mxu0 0.0
      %1789 = vmatpush1.msra.mxu0 0.0
      %1790 = vmatprep.subr.mxu0 0.0
      %1791 = vmatpush1.msra.mxu0 0.0
      %1792 = vmatprep.subr.mxu0 0.0
      %1793 = vmatpush1.msra.mxu0 0.0
      %1794 = vmatprep.subr.mxu0 0.0
      %1795 = vmatpush1.msra.mxu0 0.0
      %1796 = vmatprep.subr.mxu0 0.0
      %1797 = vmatpush1.msra.mxu0 0.0
      %1798 = vmatprep.subr.mxu0 0.0
      %1799 = vmatpush1.msra.mxu0 0.0
      %1800 = vmatprep.subr.mxu0 0.0
      %1801 = vmatpush1.msra.mxu0 0.0
      %1802 = vmatprep.subr.mxu0 0.0
      %1803 = vmatpush1.msra.mxu0 0.0
      %1804 = vmatprep.subr.mxu0 0.0
      %1805 = vmatpush1.msra.mxu0 0.0
      %1806 = vmatprep.subr.mxu0 0.0
      %1807 = vmatpush1.msra.mxu0 0.0
      %1808 = vmatprep.mubr.f32.mxu0 0.0
      %1809 = vmatmul.mubr.f32.gmra.mrb[0].mxu0 %v1719
      %v1810 = vpop.f32.mrb[0].mxu0
      %v1811 = vadd.f32 0.0, %v1810
      %v1812 = vpop.f32.mrb[0].mxu0
      %1813 = vmatprep.mubr.f32.mxu0 0.0
      %1814 = vmatmul.mubr.f32.gmra.mrb[0].mxu0 %v1720
      %v1815 = vpop.f32.mrb[0].mxu0
      %v1816 = vadd.f32 0.0, %v1815
      %v1817 = vpop.f32.mrb[0].mxu0
      %1818 = vmatprep.mubr.f32.mxu0 0.0
      %1819 = vmatmul.mubr.f32.gmra.mrb[0].mxu0 %v1721
      %v1820 = vpop.f32.mrb[0].mxu0
      %v1821 = vadd.f32 0.0, %v1820
      %v1822 = vpop.f32.mrb[0].mxu0
      %1823 = vmatprep.mubr.f32.mxu0 0.0
      %1824 = vmatmul.mubr.f32.gmra.mrb[0].mxu0 %v1722
      %v1825 = vpop.f32.mrb[0].mxu0
      %v1826 = vadd.f32 0.0, %v1825
      %v1827 = vpop.f32.mrb[0].mxu0
      %1828 = vmatprep.mubr.f32.mxu0 0.0
      %1829 = vmatmul.mubr.f32.gmra.mrb[0].mxu0 %v1723
      %v1830 = vpop.f32.mrb[0].mxu0
      %v1831 = vadd.f32 0.0, %v1830
      %v1832 = vpop.f32.mrb[0].mxu0
      %1833 = vmatprep.mubr.f32.mxu0 0.0
      %1834 = vmatmul.mubr.f32.gmra.mrb[0].mxu0 %v1724
      %v1835 = vpop.f32.mrb[0].mxu0
      %v1836 = vadd.f32 0.0, %v1835
      %v1837 = vpop.f32.mrb[0].mxu0
      %1838 = vmatprep.mubr.f32.mxu0 0.0
      %1839 = vmatmul.mubr.f32.gmra.mrb[0].mxu0 %v1725
      %v1840 = vpop.f32.mrb[0].mxu0
      %v1841 = vadd.f32 0.0, %v1840
      %v1842 = vpop.f32.mrb[0].mxu0
      %1843 = vmatprep.mubr.f32.mxu0 0.0
      %1844 = vmatmul.mubr.f32.gmra.mrb[0].mxu0 %v1726
      %v1845 = vpop.f32.mrb[0].mxu0
      %v1846 = vadd.f32 0.0, %v1845
      %v1847 = vpop.f32.mrb[0].mxu0
      %1848 = vdwg.mxu0
      %v1849 = vadd.f32 %v1711, %v1811
      %v1850 = vadd.f32 %v1712, %v1816
      %v1851 = vadd.f32 %v1713, %v1821
      %v1852 = vadd.f32 %v1714, %v1826
      %v1853 = vadd.f32 %v1715, %v1831
      %v1854 = vadd.f32 %v1716, %v1836
      %v1855 = vadd.f32 %v1717, %v1841
      %v1856 = vadd.f32 %v1718, %v1846
      %v1857 = vld [vmem:[%s328 + $0x2] sm:$0xff]
      %v1858 = vld [vmem:[%s328 + $0x12] sm:$0xff]
      %v1859 = vld [vmem:[%s328 + $0x22] sm:$0xff]
      %v1860 = vld [vmem:[%s328 + $0x32] sm:$0xff]
      %v1861 = vld [vmem:[%s328 + $0x42] sm:$0xff]
      %v1862 = vld [vmem:[%s328 + $0x52] sm:$0xff]
      %v1863 = vld [vmem:[%s328 + $0x62] sm:$0xff]
      %v1864 = vld [vmem:[%s328 + $0x72] sm:$0xff]
      %s1865 = scalar_lea.vmem %s3, 1408
      %v1866 = vld [vmem:[%s1865] sm:$0xff]
      %v1867 = vld [vmem:[%s1865 + $0x8] sm:$0xff]
      %v1868 = vld [vmem:[%s1865 + $0x10] sm:$0xff]
      %v1869 = vld [vmem:[%s1865 + $0x18] sm:$0xff]
      %v1870 = vld [vmem:[%s1865 + $0x20] sm:$0xff]
      %v1871 = vld [vmem:[%s1865 + $0x28] sm:$0xff]
      %v1872 = vld [vmem:[%s1865 + $0x30] sm:$0xff]
      %v1873 = vld [vmem:[%s1865 + $0x38] sm:$0xff]
      %v1874 = vld [vmem:[%s1865 + $0x40] sm:$0xff]
      %v1875 = vld [vmem:[%s1865 + $0x48] sm:$0xff]
      %v1876 = vld [vmem:[%s1865 + $0x50] sm:$0xff]
      %v1877 = vld [vmem:[%s1865 + $0x58] sm:$0xff]
      %v1878 = vld [vmem:[%s1865 + $0x60] sm:$0xff]
      %v1879 = vld [vmem:[%s1865 + $0x68] sm:$0xff]
      %v1880 = vld [vmem:[%s1865 + $0x70] sm:$0xff]
      %v1881 = vld [vmem:[%s1865 + $0x78] sm:$0xff]
      %1882 = vmatprep.subr.mxu0 0.0
      %1883 = vmatpush1.msra.mxu0 %v1866
      %1884 = vmatprep.subr.mxu0 0.0
      %1885 = vmatpush1.msra.mxu0 %v1867
      %1886 = vmatprep.subr.mxu0 0.0
      %1887 = vmatpush1.msra.mxu0 %v1868
      %1888 = vmatprep.subr.mxu0 0.0
      %1889 = vmatpush1.msra.mxu0 %v1869
      %1890 = vmatprep.subr.mxu0 0.0
      %1891 = vmatpush1.msra.mxu0 %v1870
      %1892 = vmatprep.subr.mxu0 0.0
      %1893 = vmatpush1.msra.mxu0 %v1871
      %1894 = vmatprep.subr.mxu0 0.0
      %1895 = vmatpush1.msra.mxu0 %v1872
      %1896 = vmatprep.subr.mxu0 0.0
      %1897 = vmatpush1.msra.mxu0 %v1873
      %1898 = vmatprep.subr.mxu0 0.0
      %1899 = vmatpush1.msra.mxu0 %v1874
      %1900 = vmatprep.subr.mxu0 0.0
      %1901 = vmatpush1.msra.mxu0 %v1875
      %1902 = vmatprep.subr.mxu0 0.0
      %1903 = vmatpush1.msra.mxu0 %v1876
      %1904 = vmatprep.subr.mxu0 0.0
      %1905 = vmatpush1.msra.mxu0 %v1877
      %1906 = vmatprep.subr.mxu0 0.0
      %1907 = vmatpush1.msra.mxu0 %v1878
      %1908 = vmatprep.subr.mxu0 0.0
      %1909 = vmatpush1.msra.mxu0 %v1879
      %1910 = vmatprep.subr.mxu0 0.0
      %1911 = vmatpush1.msra.mxu0 %v1880
      %1912 = vmatprep.subr.mxu0 0.0
      %1913 = vmatpush1.msra.mxu0 %v1881
      %1914 = vmatprep.subr.mxu0 0.0
      %1915 = vmatpush1.msra.mxu0 0.0
      %1916 = vmatprep.subr.mxu0 0.0
      %1917 = vmatpush1.msra.mxu0 0.0
      %1918 = vmatprep.subr.mxu0 0.0
      %1919 = vmatpush1.msra.mxu0 0.0
      %1920 = vmatprep.subr.mxu0 0.0
      %1921 = vmatpush1.msra.mxu0 0.0
      %1922 = vmatprep.subr.mxu0 0.0
      %1923 = vmatpush1.msra.mxu0 0.0
      %1924 = vmatprep.subr.mxu0 0.0
      %1925 = vmatpush1.msra.mxu0 0.0
      %1926 = vmatprep.subr.mxu0 0.0
      %1927 = vmatpush1.msra.mxu0 0.0
      %1928 = vmatprep.subr.mxu0 0.0
      %1929 = vmatpush1.msra.mxu0 0.0
      %1930 = vmatprep.subr.mxu0 0.0
      %1931 = vmatpush1.msra.mxu0 0.0
      %1932 = vmatprep.subr.mxu0 0.0
      %1933 = vmatpush1.msra.mxu0 0.0
      %1934 = vmatprep.subr.mxu0 0.0
      %1935 = vmatpush1.msra.mxu0 0.0
      %1936 = vmatprep.subr.mxu0 0.0
      %1937 = vmatpush1.msra.mxu0 0.0
      %1938 = vmatprep.subr.mxu0 0.0
      %1939 = vmatpush1.msra.mxu0 0.0
      %1940 = vmatprep.subr.mxu0 0.0
      %1941 = vmatpush1.msra.mxu0 0.0
      %1942 = vmatprep.subr.mxu0 0.0
      %1943 = vmatpush1.msra.mxu0 0.0
      %1944 = vmatprep.subr.mxu0 0.0
      %1945 = vmatpush1.msra.mxu0 0.0
      %1946 = vmatprep.mubr.f32.mxu0 0.0
      %1947 = vmatmul.mubr.f32.gmra.mrb[0].mxu0 %v1857
      %v1948 = vpop.f32.mrb[0].mxu0
      %v1949 = vadd.f32 0.0, %v1948
      %v1950 = vpop.f32.mrb[0].mxu0
      %1951 = vmatprep.mubr.f32.mxu0 0.0
      %1952 = vmatmul.mubr.f32.gmra.mrb[0].mxu0 %v1858
      %v1953 = vpop.f32.mrb[0].mxu0
      %v1954 = vadd.f32 0.0, %v1953
      %v1955 = vpop.f32.mrb[0].mxu0
      %1956 = vmatprep.mubr.f32.mxu0 0.0
      %1957 = vmatmul.mubr.f32.gmra.mrb[0].mxu0 %v1859
      %v1958 = vpop.f32.mrb[0].mxu0
      %v1959 = vadd.f32 0.0, %v1958
      %v1960 = vpop.f32.mrb[0].mxu0
      %1961 = vmatprep.mubr.f32.mxu0 0.0
      %1962 = vmatmul.mubr.f32.gmra.mrb[0].mxu0 %v1860
      %v1963 = vpop.f32.mrb[0].mxu0
      %v1964 = vadd.f32 0.0, %v1963
      %v1965 = vpop.f32.mrb[0].mxu0
      %1966 = vmatprep.mubr.f32.mxu0 0.0
      %1967 = vmatmul.mubr.f32.gmra.mrb[0].mxu0 %v1861
      %v1968 = vpop.f32.mrb[0].mxu0
      %v1969 = vadd.f32 0.0, %v1968
      %v1970 = vpop.f32.mrb[0].mxu0
      %1971 = vmatprep.mubr.f32.mxu0 0.0
      %1972 = vmatmul.mubr.f32.gmra.mrb[0].mxu0 %v1862
      %v1973 = vpop.f32.mrb[0].mxu0
      %v1974 = vadd.f32 0.0, %v1973
      %v1975 = vpop.f32.mrb[0].mxu0
      %1976 = vmatprep.mubr.f32.mxu0 0.0
      %1977 = vmatmul.mubr.f32.gmra.mrb[0].mxu0 %v1863
      %v1978 = vpop.f32.mrb[0].mxu0
      %v1979 = vadd.f32 0.0, %v1978
      %v1980 = vpop.f32.mrb[0].mxu0
      %1981 = vmatprep.mubr.f32.mxu0 0.0
      %1982 = vmatmul.mubr.f32.gmra.mrb[0].mxu0 %v1864
      %v1983 = vpop.f32.mrb[0].mxu0
      %v1984 = vadd.f32 0.0, %v1983
      %v1985 = vpop.f32.mrb[0].mxu0
      %1986 = vdwg.mxu0
      %v1987 = vadd.f32 %v1849, %v1949
      %v1988 = vadd.f32 %v1850, %v1954
      %v1989 = vadd.f32 %v1851, %v1959
      %v1990 = vadd.f32 %v1852, %v1964
      %v1991 = vadd.f32 %v1853, %v1969
      %v1992 = vadd.f32 %v1854, %v1974
      %v1993 = vadd.f32 %v1855, %v1979
      %v1994 = vadd.f32 %v1856, %v1984
      %s1995 = scalar_lea.vmem %s328, 16
      %v1996 = vld [vmem:[%s1995] sm:$0xff]
      %v1997 = vld [vmem:[%s1995 + $0x10] sm:$0xff]
      %v1998 = vld [vmem:[%s1995 + $0x20] sm:$0xff]
      %v1999 = vld [vmem:[%s1995 + $0x30] sm:$0xff]
      %v2000 = vld [vmem:[%s1995 + $0x40] sm:$0xff]
      %v2001 = vld [vmem:[%s1995 + $0x50] sm:$0xff]
      %v2002 = vld [vmem:[%s1995 + $0x60] sm:$0xff]
      %v2003 = vld [vmem:[%s1995 + $0x70] sm:$0xff]
      %s2004 = scalar_lea.vmem %s3, 1536
      %v2005 = vld [vmem:[%s2004] sm:$0xff]
      %v2006 = vld [vmem:[%s2004 + $0x8] sm:$0xff]
      %v2007 = vld [vmem:[%s2004 + $0x10] sm:$0xff]
      %v2008 = vld [vmem:[%s2004 + $0x18] sm:$0xff]
      %v2009 = vld [vmem:[%s2004 + $0x20] sm:$0xff]
      %v2010 = vld [vmem:[%s2004 + $0x28] sm:$0xff]
      %v2011 = vld [vmem:[%s2004 + $0x30] sm:$0xff]
      %v2012 = vld [vmem:[%s2004 + $0x38] sm:$0xff]
      %v2013 = vld [vmem:[%s2004 + $0x40] sm:$0xff]
      %v2014 = vld [vmem:[%s2004 + $0x48] sm:$0xff]
      %v2015 = vld [vmem:[%s2004 + $0x50] sm:$0xff]
      %v2016 = vld [vmem:[%s2004 + $0x58] sm:$0xff]
      %v2017 = vld [vmem:[%s2004 + $0x60] sm:$0xff]
      %v2018 = vld [vmem:[%s2004 + $0x68] sm:$0xff]
      %v2019 = vld [vmem:[%s2004 + $0x70] sm:$0xff]
      %v2020 = vld [vmem:[%s2004 + $0x78] sm:$0xff]
      %2021 = vmatprep.subr.mxu0 0.0
      %2022 = vmatpush1.msra.mxu0 %v2005
      %2023 = vmatprep.subr.mxu0 0.0
      %2024 = vmatpush1.msra.mxu0 %v2006
      %2025 = vmatprep.subr.mxu0 0.0
      %2026 = vmatpush1.msra.mxu0 %v2007
      %2027 = vmatprep.subr.mxu0 0.0
      %2028 = vmatpush1.msra.mxu0 %v2008
      %2029 = vmatprep.subr.mxu0 0.0
      %2030 = vmatpush1.msra.mxu0 %v2009
      %2031 = vmatprep.subr.mxu0 0.0
      %2032 = vmatpush1.msra.mxu0 %v2010
      %2033 = vmatprep.subr.mxu0 0.0
      %2034 = vmatpush1.msra.mxu0 %v2011
      %2035 = vmatprep.subr.mxu0 0.0
      %2036 = vmatpush1.msra.mxu0 %v2012
      %2037 = vmatprep.subr.mxu0 0.0
      %2038 = vmatpush1.msra.mxu0 %v2013
      %2039 = vmatprep.subr.mxu0 0.0
      %2040 = vmatpush1.msra.mxu0 %v2014
      %2041 = vmatprep.subr.mxu0 0.0
      %2042 = vmatpush1.msra.mxu0 %v2015
      %2043 = vmatprep.subr.mxu0 0.0
      %2044 = vmatpush1.msra.mxu0 %v2016
      %2045 = vmatprep.subr.mxu0 0.0
      %2046 = vmatpush1.msra.mxu0 %v2017
      %2047 = vmatprep.subr.mxu0 0.0
      %2048 = vmatpush1.msra.mxu0 %v2018
      %2049 = vmatprep.subr.mxu0 0.0
      %2050 = vmatpush1.msra.mxu0 %v2019
      %2051 = vmatprep.subr.mxu0 0.0
      %2052 = vmatpush1.msra.mxu0 %v2020
      %2053 = vmatprep.subr.mxu0 0.0
      %2054 = vmatpush1.msra.mxu0 0.0
      %2055 = vmatprep.subr.mxu0 0.0
      %2056 = vmatpush1.msra.mxu0 0.0
      %2057 = vmatprep.subr.mxu0 0.0
      %2058 = vmatpush1.msra.mxu0 0.0
      %2059 = vmatprep.subr.mxu0 0.0
      %2060 = vmatpush1.msra.mxu0 0.0
      %2061 = vmatprep.subr.mxu0 0.0
      %2062 = vmatpush1.msra.mxu0 0.0
      %2063 = vmatprep.subr.mxu0 0.0
      %2064 = vmatpush1.msra.mxu0 0.0
      %2065 = vmatprep.subr.mxu0 0.0
      %2066 = vmatpush1.msra.mxu0 0.0
      %2067 = vmatprep.subr.mxu0 0.0
      %2068 = vmatpush1.msra.mxu0 0.0
      %2069 = vmatprep.subr.mxu0 0.0
      %2070 = vmatpush1.msra.mxu0 0.0
      %2071 = vmatprep.subr.mxu0 0.0
      %2072 = vmatpush1.msra.mxu0 0.0
      %2073 = vmatprep.subr.mxu0 0.0
      %2074 = vmatpush1.msra.mxu0 0.0
      %2075 = vmatprep.subr.mxu0 0.0
      %2076 = vmatpush1.msra.mxu0 0.0
      %2077 = vmatprep.subr.mxu0 0.0
      %2078 = vmatpush1.msra.mxu0 0.0
      %2079 = vmatprep.subr.mxu0 0.0
      %2080 = vmatpush1.msra.mxu0 0.0
      %2081 = vmatprep.subr.mxu0 0.0
      %2082 = vmatpush1.msra.mxu0 0.0
      %2083 = vmatprep.subr.mxu0 0.0
      %2084 = vmatpush1.msra.mxu0 0.0
      %2085 = vmatprep.mubr.f32.mxu0 0.0
      %2086 = vmatmul.mubr.f32.gmra.mrb[0].mxu0 %v1996
      %v2087 = vpop.f32.mrb[0].mxu0
      %v2088 = vadd.f32 0.0, %v2087
      %v2089 = vpop.f32.mrb[0].mxu0
      %2090 = vmatprep.mubr.f32.mxu0 0.0
      %2091 = vmatmul.mubr.f32.gmra.mrb[0].mxu0 %v1997
      %v2092 = vpop.f32.mrb[0].mxu0
      %v2093 = vadd.f32 0.0, %v2092
      %v2094 = vpop.f32.mrb[0].mxu0
      %2095 = vmatprep.mubr.f32.mxu0 0.0
      %2096 = vmatmul.mubr.f32.gmra.mrb[0].mxu0 %v1998
      %v2097 = vpop.f32.mrb[0].mxu0
      %v2098 = vadd.f32 0.0, %v2097
      %v2099 = vpop.f32.mrb[0].mxu0
      %2100 = vmatprep.mubr.f32.mxu0 0.0
      %2101 = vmatmul.mubr.f32.gmra.mrb[0].mxu0 %v1999
      %v2102 = vpop.f32.mrb[0].mxu0
      %v2103 = vadd.f32 0.0, %v2102
      %v2104 = vpop.f32.mrb[0].mxu0
      %2105 = vmatprep.mubr.f32.mxu0 0.0
      %2106 = vmatmul.mubr.f32.gmra.mrb[0].mxu0 %v2000
      %v2107 = vpop.f32.mrb[0].mxu0
      %v2108 = vadd.f32 0.0, %v2107
      %v2109 = vpop.f32.mrb[0].mxu0
      %2110 = vmatprep.mubr.f32.mxu0 0.0
      %2111 = vmatmul.mubr.f32.gmra.mrb[0].mxu0 %v2001
      %v2112 = vpop.f32.mrb[0].mxu0
      %v2113 = vadd.f32 0.0, %v2112
      %v2114 = vpop.f32.mrb[0].mxu0
      %2115 = vmatprep.mubr.f32.mxu0 0.0
      %2116 = vmatmul.mubr.f32.gmra.mrb[0].mxu0 %v2002
      %v2117 = vpop.f32.mrb[0].mxu0
      %v2118 = vadd.f32 0.0, %v2117
      %v2119 = vpop.f32.mrb[0].mxu0
      %2120 = vmatprep.mubr.f32.mxu0 0.0
      %2121 = vmatmul.mubr.f32.gmra.mrb[0].mxu0 %v2003
      %v2122 = vpop.f32.mrb[0].mxu0
      %v2123 = vadd.f32 0.0, %v2122
      %v2124 = vpop.f32.mrb[0].mxu0
      %2125 = vdwg.mxu0
      %v2126 = vadd.f32 %v1987, %v2088
      %v2127 = vadd.f32 %v1988, %v2093
      %v2128 = vadd.f32 %v1989, %v2098
      %v2129 = vadd.f32 %v1990, %v2103
      %v2130 = vadd.f32 %v1991, %v2108
      %v2131 = vadd.f32 %v1992, %v2113
      %v2132 = vadd.f32 %v1993, %v2118
      %v2133 = vadd.f32 %v1994, %v2123
      %v2134 = vld [vmem:[%s1995 + $0x1] sm:$0xff]
      %v2135 = vld [vmem:[%s1995 + $0x11] sm:$0xff]
      %v2136 = vld [vmem:[%s1995 + $0x21] sm:$0xff]
      %v2137 = vld [vmem:[%s1995 + $0x31] sm:$0xff]
      %v2138 = vld [vmem:[%s1995 + $0x41] sm:$0xff]
      %v2139 = vld [vmem:[%s1995 + $0x51] sm:$0xff]
      %v2140 = vld [vmem:[%s1995 + $0x61] sm:$0xff]
      %v2141 = vld [vmem:[%s1995 + $0x71] sm:$0xff]
      %s2142 = scalar_lea.vmem %s3, 1664
      %v2143 = vld [vmem:[%s2142] sm:$0xff]
      %v2144 = vld [vmem:[%s2142 + $0x8] sm:$0xff]
      %v2145 = vld [vmem:[%s2142 + $0x10] sm:$0xff]
      %v2146 = vld [vmem:[%s2142 + $0x18] sm:$0xff]
      %v2147 = vld [vmem:[%s2142 + $0x20] sm:$0xff]
      %v2148 = vld [vmem:[%s2142 + $0x28] sm:$0xff]
      %v2149 = vld [vmem:[%s2142 + $0x30] sm:$0xff]
      %v2150 = vld [vmem:[%s2142 + $0x38] sm:$0xff]
      %v2151 = vld [vmem:[%s2142 + $0x40] sm:$0xff]
      %v2152 = vld [vmem:[%s2142 + $0x48] sm:$0xff]
      %v2153 = vld [vmem:[%s2142 + $0x50] sm:$0xff]
      %v2154 = vld [vmem:[%s2142 + $0x58] sm:$0xff]
      %v2155 = vld [vmem:[%s2142 + $0x60] sm:$0xff]
      %v2156 = vld [vmem:[%s2142 + $0x68] sm:$0xff]
      %v2157 = vld [vmem:[%s2142 + $0x70] sm:$0xff]
      %v2158 = vld [vmem:[%s2142 + $0x78] sm:$0xff]
      %2159 = vmatprep.subr.mxu0 0.0
      %2160 = vmatpush1.msra.mxu0 %v2143
      %2161 = vmatprep.subr.mxu0 0.0
      %2162 = vmatpush1.msra.mxu0 %v2144
      %2163 = vmatprep.subr.mxu0 0.0
      %2164 = vmatpush1.msra.mxu0 %v2145
      %2165 = vmatprep.subr.mxu0 0.0
      %2166 = vmatpush1.msra.mxu0 %v2146
      %2167 = vmatprep.subr.mxu0 0.0
      %2168 = vmatpush1.msra.mxu0 %v2147
      %2169 = vmatprep.subr.mxu0 0.0
      %2170 = vmatpush1.msra.mxu0 %v2148
      %2171 = vmatprep.subr.mxu0 0.0
      %2172 = vmatpush1.msra.mxu0 %v2149
      %2173 = vmatprep.subr.mxu0 0.0
      %2174 = vmatpush1.msra.mxu0 %v2150
      %2175 = vmatprep.subr.mxu0 0.0
      %2176 = vmatpush1.msra.mxu0 %v2151
      %2177 = vmatprep.subr.mxu0 0.0
      %2178 = vmatpush1.msra.mxu0 %v2152
      %2179 = vmatprep.subr.mxu0 0.0
      %2180 = vmatpush1.msra.mxu0 %v2153
      %2181 = vmatprep.subr.mxu0 0.0
      %2182 = vmatpush1.msra.mxu0 %v2154
      %2183 = vmatprep.subr.mxu0 0.0
      %2184 = vmatpush1.msra.mxu0 %v2155
      %2185 = vmatprep.subr.mxu0 0.0
      %2186 = vmatpush1.msra.mxu0 %v2156
      %2187 = vmatprep.subr.mxu0 0.0
      %2188 = vmatpush1.msra.mxu0 %v2157
      %2189 = vmatprep.subr.mxu0 0.0
      %2190 = vmatpush1.msra.mxu0 %v2158
      %2191 = vmatprep.subr.mxu0 0.0
      %2192 = vmatpush1.msra.mxu0 0.0
      %2193 = vmatprep.subr.mxu0 0.0
      %2194 = vmatpush1.msra.mxu0 0.0
      %2195 = vmatprep.subr.mxu0 0.0
      %2196 = vmatpush1.msra.mxu0 0.0
      %2197 = vmatprep.subr.mxu0 0.0
      %2198 = vmatpush1.msra.mxu0 0.0
      %2199 = vmatprep.subr.mxu0 0.0
      %2200 = vmatpush1.msra.mxu0 0.0
      %2201 = vmatprep.subr.mxu0 0.0
      %2202 = vmatpush1.msra.mxu0 0.0
      %2203 = vmatprep.subr.mxu0 0.0
      %2204 = vmatpush1.msra.mxu0 0.0
      %2205 = vmatprep.subr.mxu0 0.0
      %2206 = vmatpush1.msra.mxu0 0.0
      %2207 = vmatprep.subr.mxu0 0.0
      %2208 = vmatpush1.msra.mxu0 0.0
      %2209 = vmatprep.subr.mxu0 0.0
      %2210 = vmatpush1.msra.mxu0 0.0
      %2211 = vmatprep.subr.mxu0 0.0
      %2212 = vmatpush1.msra.mxu0 0.0
      %2213 = vmatprep.subr.mxu0 0.0
      %2214 = vmatpush1.msra.mxu0 0.0
      %2215 = vmatprep.subr.mxu0 0.0
      %2216 = vmatpush1.msra.mxu0 0.0
      %2217 = vmatprep.subr.mxu0 0.0
      %2218 = vmatpush1.msra.mxu0 0.0
      %2219 = vmatprep.subr.mxu0 0.0
      %2220 = vmatpush1.msra.mxu0 0.0
      %2221 = vmatprep.subr.mxu0 0.0
      %2222 = vmatpush1.msra.mxu0 0.0
      %2223 = vmatprep.mubr.f32.mxu0 0.0
      %2224 = vmatmul.mubr.f32.gmra.mrb[0].mxu0 %v2134
      %v2225 = vpop.f32.mrb[0].mxu0
      %v2226 = vadd.f32 0.0, %v2225
      %v2227 = vpop.f32.mrb[0].mxu0
      %2228 = vmatprep.mubr.f32.mxu0 0.0
      %2229 = vmatmul.mubr.f32.gmra.mrb[0].mxu0 %v2135
      %v2230 = vpop.f32.mrb[0].mxu0
      %v2231 = vadd.f32 0.0, %v2230
      %v2232 = vpop.f32.mrb[0].mxu0
      %2233 = vmatprep.mubr.f32.mxu0 0.0
      %2234 = vmatmul.mubr.f32.gmra.mrb[0].mxu0 %v2136
      %v2235 = vpop.f32.mrb[0].mxu0
      %v2236 = vadd.f32 0.0, %v2235
      %v2237 = vpop.f32.mrb[0].mxu0
      %2238 = vmatprep.mubr.f32.mxu0 0.0
      %2239 = vmatmul.mubr.f32.gmra.mrb[0].mxu0 %v2137
      %v2240 = vpop.f32.mrb[0].mxu0
      %v2241 = vadd.f32 0.0, %v2240
      %v2242 = vpop.f32.mrb[0].mxu0
      %2243 = vmatprep.mubr.f32.mxu0 0.0
      %2244 = vmatmul.mubr.f32.gmra.mrb[0].mxu0 %v2138
      %v2245 = vpop.f32.mrb[0].mxu0
      %v2246 = vadd.f32 0.0, %v2245
      %v2247 = vpop.f32.mrb[0].mxu0
      %2248 = vmatprep.mubr.f32.mxu0 0.0
      %2249 = vmatmul.mubr.f32.gmra.mrb[0].mxu0 %v2139
      %v2250 = vpop.f32.mrb[0].mxu0
      %v2251 = vadd.f32 0.0, %v2250
      %v2252 = vpop.f32.mrb[0].mxu0
      %2253 = vmatprep.mubr.f32.mxu0 0.0
      %2254 = vmatmul.mubr.f32.gmra.mrb[0].mxu0 %v2140
      %v2255 = vpop.f32.mrb[0].mxu0
      %v2256 = vadd.f32 0.0, %v2255
      %v2257 = vpop.f32.mrb[0].mxu0
      %2258 = vmatprep.mubr.f32.mxu0 0.0
      %2259 = vmatmul.mubr.f32.gmra.mrb[0].mxu0 %v2141
      %v2260 = vpop.f32.mrb[0].mxu0
      %v2261 = vadd.f32 0.0, %v2260
      %v2262 = vpop.f32.mrb[0].mxu0
      %2263 = vdwg.mxu0
      %v2264 = vadd.f32 %v2126, %v2226
      %v2265 = vadd.f32 %v2127, %v2231
      %v2266 = vadd.f32 %v2128, %v2236
      %v2267 = vadd.f32 %v2129, %v2241
      %v2268 = vadd.f32 %v2130, %v2246
      %v2269 = vadd.f32 %v2131, %v2251
      %v2270 = vadd.f32 %v2132, %v2256
      %v2271 = vadd.f32 %v2133, %v2261
      %v2272 = vld [vmem:[%s1995 + $0x2] sm:$0xff]
      %v2273 = vld [vmem:[%s1995 + $0x12] sm:$0xff]
      %v2274 = vld [vmem:[%s1995 + $0x22] sm:$0xff]
      %v2275 = vld [vmem:[%s1995 + $0x32] sm:$0xff]
      %v2276 = vld [vmem:[%s1995 + $0x42] sm:$0xff]
      %v2277 = vld [vmem:[%s1995 + $0x52] sm:$0xff]
      %v2278 = vld [vmem:[%s1995 + $0x62] sm:$0xff]
      %v2279 = vld [vmem:[%s1995 + $0x72] sm:$0xff]
      %s2280 = scalar_lea.vmem %s3, 1792
      %v2281 = vld [vmem:[%s2280] sm:$0xff]
      %v2282 = vld [vmem:[%s2280 + $0x8] sm:$0xff]
      %v2283 = vld [vmem:[%s2280 + $0x10] sm:$0xff]
      %v2284 = vld [vmem:[%s2280 + $0x18] sm:$0xff]
      %v2285 = vld [vmem:[%s2280 + $0x20] sm:$0xff]
      %v2286 = vld [vmem:[%s2280 + $0x28] sm:$0xff]
      %v2287 = vld [vmem:[%s2280 + $0x30] sm:$0xff]
      %v2288 = vld [vmem:[%s2280 + $0x38] sm:$0xff]
      %v2289 = vld [vmem:[%s2280 + $0x40] sm:$0xff]
      %v2290 = vld [vmem:[%s2280 + $0x48] sm:$0xff]
      %v2291 = vld [vmem:[%s2280 + $0x50] sm:$0xff]
      %v2292 = vld [vmem:[%s2280 + $0x58] sm:$0xff]
      %v2293 = vld [vmem:[%s2280 + $0x60] sm:$0xff]
      %v2294 = vld [vmem:[%s2280 + $0x68] sm:$0xff]
      %v2295 = vld [vmem:[%s2280 + $0x70] sm:$0xff]
      %v2296 = vld [vmem:[%s2280 + $0x78] sm:$0xff]
      %2297 = vmatprep.subr.mxu0 0.0
      %2298 = vmatpush1.msra.mxu0 %v2281
      %2299 = vmatprep.subr.mxu0 0.0
      %2300 = vmatpush1.msra.mxu0 %v2282
      %2301 = vmatprep.subr.mxu0 0.0
      %2302 = vmatpush1.msra.mxu0 %v2283
      %2303 = vmatprep.subr.mxu0 0.0
      %2304 = vmatpush1.msra.mxu0 %v2284
      %2305 = vmatprep.subr.mxu0 0.0
      %2306 = vmatpush1.msra.mxu0 %v2285
      %2307 = vmatprep.subr.mxu0 0.0
      %2308 = vmatpush1.msra.mxu0 %v2286
      %2309 = vmatprep.subr.mxu0 0.0
      %2310 = vmatpush1.msra.mxu0 %v2287
      %2311 = vmatprep.subr.mxu0 0.0
      %2312 = vmatpush1.msra.mxu0 %v2288
      %2313 = vmatprep.subr.mxu0 0.0
      %2314 = vmatpush1.msra.mxu0 %v2289
      %2315 = vmatprep.subr.mxu0 0.0
      %2316 = vmatpush1.msra.mxu0 %v2290
      %2317 = vmatprep.subr.mxu0 0.0
      %2318 = vmatpush1.msra.mxu0 %v2291
      %2319 = vmatprep.subr.mxu0 0.0
      %2320 = vmatpush1.msra.mxu0 %v2292
      %2321 = vmatprep.subr.mxu0 0.0
      %2322 = vmatpush1.msra.mxu0 %v2293
      %2323 = vmatprep.subr.mxu0 0.0
      %2324 = vmatpush1.msra.mxu0 %v2294
      %2325 = vmatprep.subr.mxu0 0.0
      %2326 = vmatpush1.msra.mxu0 %v2295
      %2327 = vmatprep.subr.mxu0 0.0
      %2328 = vmatpush1.msra.mxu0 %v2296
      %2329 = vmatprep.subr.mxu0 0.0
      %2330 = vmatpush1.msra.mxu0 0.0
      %2331 = vmatprep.subr.mxu0 0.0
      %2332 = vmatpush1.msra.mxu0 0.0
      %2333 = vmatprep.subr.mxu0 0.0
      %2334 = vmatpush1.msra.mxu0 0.0
      %2335 = vmatprep.subr.mxu0 0.0
      %2336 = vmatpush1.msra.mxu0 0.0
      %2337 = vmatprep.subr.mxu0 0.0
      %2338 = vmatpush1.msra.mxu0 0.0
      %2339 = vmatprep.subr.mxu0 0.0
      %2340 = vmatpush1.msra.mxu0 0.0
      %2341 = vmatprep.subr.mxu0 0.0
      %2342 = vmatpush1.msra.mxu0 0.0
      %2343 = vmatprep.subr.mxu0 0.0
      %2344 = vmatpush1.msra.mxu0 0.0
      %2345 = vmatprep.subr.mxu0 0.0
      %2346 = vmatpush1.msra.mxu0 0.0
      %2347 = vmatprep.subr.mxu0 0.0
      %2348 = vmatpush1.msra.mxu0 0.0
      %2349 = vmatprep.subr.mxu0 0.0
      %2350 = vmatpush1.msra.mxu0 0.0
      %2351 = vmatprep.subr.mxu0 0.0
      %2352 = vmatpush1.msra.mxu0 0.0
      %2353 = vmatprep.subr.mxu0 0.0
      %2354 = vmatpush1.msra.mxu0 0.0
      %2355 = vmatprep.subr.mxu0 0.0
      %2356 = vmatpush1.msra.mxu0 0.0
      %2357 = vmatprep.subr.mxu0 0.0
      %2358 = vmatpush1.msra.mxu0 0.0
      %2359 = vmatprep.subr.mxu0 0.0
      %2360 = vmatpush1.msra.mxu0 0.0
      %2361 = vmatprep.mubr.f32.mxu0 0.0
      %2362 = vmatmul.mubr.f32.gmra.mrb[0].mxu0 %v2272
      %v2363 = vpop.f32.mrb[0].mxu0
      %v2364 = vadd.f32 0.0, %v2363
      %v2365 = vpop.f32.mrb[0].mxu0
      %2366 = vmatprep.mubr.f32.mxu0 0.0
      %2367 = vmatmul.mubr.f32.gmra.mrb[0].mxu0 %v2273
      %v2368 = vpop.f32.mrb[0].mxu0
      %v2369 = vadd.f32 0.0, %v2368
      %v2370 = vpop.f32.mrb[0].mxu0
      %2371 = vmatprep.mubr.f32.mxu0 0.0
      %2372 = vmatmul.mubr.f32.gmra.mrb[0].mxu0 %v2274
      %v2373 = vpop.f32.mrb[0].mxu0
      %v2374 = vadd.f32 0.0, %v2373
      %v2375 = vpop.f32.mrb[0].mxu0
      %2376 = vmatprep.mubr.f32.mxu0 0.0
      %2377 = vmatmul.mubr.f32.gmra.mrb[0].mxu0 %v2275
      %v2378 = vpop.f32.mrb[0].mxu0
      %v2379 = vadd.f32 0.0, %v2378
      %v2380 = vpop.f32.mrb[0].mxu0
      %2381 = vmatprep.mubr.f32.mxu0 0.0
      %2382 = vmatmul.mubr.f32.gmra.mrb[0].mxu0 %v2276
      %v2383 = vpop.f32.mrb[0].mxu0
      %v2384 = vadd.f32 0.0, %v2383
      %v2385 = vpop.f32.mrb[0].mxu0
      %2386 = vmatprep.mubr.f32.mxu0 0.0
      %2387 = vmatmul.mubr.f32.gmra.mrb[0].mxu0 %v2277
      %v2388 = vpop.f32.mrb[0].mxu0
      %v2389 = vadd.f32 0.0, %v2388
      %v2390 = vpop.f32.mrb[0].mxu0
      %2391 = vmatprep.mubr.f32.mxu0 0.0
      %2392 = vmatmul.mubr.f32.gmra.mrb[0].mxu0 %v2278
      %v2393 = vpop.f32.mrb[0].mxu0
      %v2394 = vadd.f32 0.0, %v2393
      %v2395 = vpop.f32.mrb[0].mxu0
      %2396 = vmatprep.mubr.f32.mxu0 0.0
      %2397 = vmatmul.mubr.f32.gmra.mrb[0].mxu0 %v2279
      %v2398 = vpop.f32.mrb[0].mxu0
      %v2399 = vadd.f32 0.0, %v2398
      %v2400 = vpop.f32.mrb[0].mxu0
      %2401 = vdwg.mxu0
      %v2402 = vadd.f32 %v2264, %v2364
      %v2403 = vadd.f32 %v2265, %v2369
      %v2404 = vadd.f32 %v2266, %v2374
      %v2405 = vadd.f32 %v2267, %v2379
      %v2406 = vadd.f32 %v2268, %v2384
      %v2407 = vadd.f32 %v2269, %v2389
      %v2408 = vadd.f32 %v2270, %v2394
      %v2409 = vadd.f32 %v2271, %v2399
      %s2410 = scalar_lea.vmem %s328, 32
      %v2411 = vld [vmem:[%s2410] sm:$0xff]
      %v2412 = vld [vmem:[%s2410 + $0x10] sm:$0xff]
      %v2413 = vld [vmem:[%s2410 + $0x20] sm:$0xff]
      %v2414 = vld [vmem:[%s2410 + $0x30] sm:$0xff]
      %v2415 = vld [vmem:[%s2410 + $0x40] sm:$0xff]
      %v2416 = vld [vmem:[%s2410 + $0x50] sm:$0xff]
      %v2417 = vld [vmem:[%s2410 + $0x60] sm:$0xff]
      %v2418 = vld [vmem:[%s2410 + $0x70] sm:$0xff]
      %s2419 = scalar_lea.vmem %s3, 1920
      %v2420 = vld [vmem:[%s2419] sm:$0xff]
      %v2421 = vld [vmem:[%s2419 + $0x8] sm:$0xff]
      %v2422 = vld [vmem:[%s2419 + $0x10] sm:$0xff]
      %v2423 = vld [vmem:[%s2419 + $0x18] sm:$0xff]
      %v2424 = vld [vmem:[%s2419 + $0x20] sm:$0xff]
      %v2425 = vld [vmem:[%s2419 + $0x28] sm:$0xff]
      %v2426 = vld [vmem:[%s2419 + $0x30] sm:$0xff]
      %v2427 = vld [vmem:[%s2419 + $0x38] sm:$0xff]
      %v2428 = vld [vmem:[%s2419 + $0x40] sm:$0xff]
      %v2429 = vld [vmem:[%s2419 + $0x48] sm:$0xff]
      %v2430 = vld [vmem:[%s2419 + $0x50] sm:$0xff]
      %v2431 = vld [vmem:[%s2419 + $0x58] sm:$0xff]
      %v2432 = vld [vmem:[%s2419 + $0x60] sm:$0xff]
      %v2433 = vld [vmem:[%s2419 + $0x68] sm:$0xff]
      %v2434 = vld [vmem:[%s2419 + $0x70] sm:$0xff]
      %v2435 = vld [vmem:[%s2419 + $0x78] sm:$0xff]
      %2436 = vmatprep.subr.mxu0 0.0
      %2437 = vmatpush1.msra.mxu0 %v2420
      %2438 = vmatprep.subr.mxu0 0.0
      %2439 = vmatpush1.msra.mxu0 %v2421
      %2440 = vmatprep.subr.mxu0 0.0
      %2441 = vmatpush1.msra.mxu0 %v2422
      %2442 = vmatprep.subr.mxu0 0.0
      %2443 = vmatpush1.msra.mxu0 %v2423
      %2444 = vmatprep.subr.mxu0 0.0
      %2445 = vmatpush1.msra.mxu0 %v2424
      %2446 = vmatprep.subr.mxu0 0.0
      %2447 = vmatpush1.msra.mxu0 %v2425
      %2448 = vmatprep.subr.mxu0 0.0
      %2449 = vmatpush1.msra.mxu0 %v2426
      %2450 = vmatprep.subr.mxu0 0.0
      %2451 = vmatpush1.msra.mxu0 %v2427
      %2452 = vmatprep.subr.mxu0 0.0
      %2453 = vmatpush1.msra.mxu0 %v2428
      %2454 = vmatprep.subr.mxu0 0.0
      %2455 = vmatpush1.msra.mxu0 %v2429
      %2456 = vmatprep.subr.mxu0 0.0
      %2457 = vmatpush1.msra.mxu0 %v2430
      %2458 = vmatprep.subr.mxu0 0.0
      %2459 = vmatpush1.msra.mxu0 %v2431
      %2460 = vmatprep.subr.mxu0 0.0
      %2461 = vmatpush1.msra.mxu0 %v2432
      %2462 = vmatprep.subr.mxu0 0.0
      %2463 = vmatpush1.msra.mxu0 %v2433
      %2464 = vmatprep.subr.mxu0 0.0
      %2465 = vmatpush1.msra.mxu0 %v2434
      %2466 = vmatprep.subr.mxu0 0.0
      %2467 = vmatpush1.msra.mxu0 %v2435
      %2468 = vmatprep.subr.mxu0 0.0
      %2469 = vmatpush1.msra.mxu0 0.0
      %2470 = vmatprep.subr.mxu0 0.0
      %2471 = vmatpush1.msra.mxu0 0.0
      %2472 = vmatprep.subr.mxu0 0.0
      %2473 = vmatpush1.msra.mxu0 0.0
      %2474 = vmatprep.subr.mxu0 0.0
      %2475 = vmatpush1.msra.mxu0 0.0
      %2476 = vmatprep.subr.mxu0 0.0
      %2477 = vmatpush1.msra.mxu0 0.0
      %2478 = vmatprep.subr.mxu0 0.0
      %2479 = vmatpush1.msra.mxu0 0.0
      %2480 = vmatprep.subr.mxu0 0.0
      %2481 = vmatpush1.msra.mxu0 0.0
      %2482 = vmatprep.subr.mxu0 0.0
      %2483 = vmatpush1.msra.mxu0 0.0
      %2484 = vmatprep.subr.mxu0 0.0
      %2485 = vmatpush1.msra.mxu0 0.0
      %2486 = vmatprep.subr.mxu0 0.0
      %2487 = vmatpush1.msra.mxu0 0.0
      %2488 = vmatprep.subr.mxu0 0.0
      %2489 = vmatpush1.msra.mxu0 0.0
      %2490 = vmatprep.subr.mxu0 0.0
      %2491 = vmatpush1.msra.mxu0 0.0
      %2492 = vmatprep.subr.mxu0 0.0
      %2493 = vmatpush1.msra.mxu0 0.0
      %2494 = vmatprep.subr.mxu0 0.0
      %2495 = vmatpush1.msra.mxu0 0.0
      %2496 = vmatprep.subr.mxu0 0.0
      %2497 = vmatpush1.msra.mxu0 0.0
      %2498 = vmatprep.subr.mxu0 0.0
      %2499 = vmatpush1.msra.mxu0 0.0
      %2500 = vmatprep.mubr.f32.mxu0 0.0
      %2501 = vmatmul.mubr.f32.gmra.mrb[0].mxu0 %v2411
      %v2502 = vpop.f32.mrb[0].mxu0
      %v2503 = vadd.f32 0.0, %v2502
      %v2504 = vpop.f32.mrb[0].mxu0
      %2505 = vmatprep.mubr.f32.mxu0 0.0
      %2506 = vmatmul.mubr.f32.gmra.mrb[0].mxu0 %v2412
      %v2507 = vpop.f32.mrb[0].mxu0
      %v2508 = vadd.f32 0.0, %v2507
      %v2509 = vpop.f32.mrb[0].mxu0
      %2510 = vmatprep.mubr.f32.mxu0 0.0
      %2511 = vmatmul.mubr.f32.gmra.mrb[0].mxu0 %v2413
      %v2512 = vpop.f32.mrb[0].mxu0
      %v2513 = vadd.f32 0.0, %v2512
      %v2514 = vpop.f32.mrb[0].mxu0
      %2515 = vmatprep.mubr.f32.mxu0 0.0
      %2516 = vmatmul.mubr.f32.gmra.mrb[0].mxu0 %v2414
      %v2517 = vpop.f32.mrb[0].mxu0
      %v2518 = vadd.f32 0.0, %v2517
      %v2519 = vpop.f32.mrb[0].mxu0
      %2520 = vmatprep.mubr.f32.mxu0 0.0
      %2521 = vmatmul.mubr.f32.gmra.mrb[0].mxu0 %v2415
      %v2522 = vpop.f32.mrb[0].mxu0
      %v2523 = vadd.f32 0.0, %v2522
      %v2524 = vpop.f32.mrb[0].mxu0
      %2525 = vmatprep.mubr.f32.mxu0 0.0
      %2526 = vmatmul.mubr.f32.gmra.mrb[0].mxu0 %v2416
      %v2527 = vpop.f32.mrb[0].mxu0
      %v2528 = vadd.f32 0.0, %v2527
      %v2529 = vpop.f32.mrb[0].mxu0
      %2530 = vmatprep.mubr.f32.mxu0 0.0
      %2531 = vmatmul.mubr.f32.gmra.mrb[0].mxu0 %v2417
      %v2532 = vpop.f32.mrb[0].mxu0
      %v2533 = vadd.f32 0.0, %v2532
      %v2534 = vpop.f32.mrb[0].mxu0
      %2535 = vmatprep.mubr.f32.mxu0 0.0
      %2536 = vmatmul.mubr.f32.gmra.mrb[0].mxu0 %v2418
      %v2537 = vpop.f32.mrb[0].mxu0
      %v2538 = vadd.f32 0.0, %v2537
      %v2539 = vpop.f32.mrb[0].mxu0
      %2540 = vdwg.mxu0
      %v2541 = vadd.f32 %v2402, %v2503
      %v2542 = vadd.f32 %v2403, %v2508
      %v2543 = vadd.f32 %v2404, %v2513
      %v2544 = vadd.f32 %v2405, %v2518
      %v2545 = vadd.f32 %v2406, %v2523
      %v2546 = vadd.f32 %v2407, %v2528
      %v2547 = vadd.f32 %v2408, %v2533
      %v2548 = vadd.f32 %v2409, %v2538
      %v2549 = vld [vmem:[%s2410 + $0x1] sm:$0xff]
      %v2550 = vld [vmem:[%s2410 + $0x11] sm:$0xff]
      %v2551 = vld [vmem:[%s2410 + $0x21] sm:$0xff]
      %v2552 = vld [vmem:[%s2410 + $0x31] sm:$0xff]
      %v2553 = vld [vmem:[%s2410 + $0x41] sm:$0xff]
      %v2554 = vld [vmem:[%s2410 + $0x51] sm:$0xff]
      %v2555 = vld [vmem:[%s2410 + $0x61] sm:$0xff]
      %v2556 = vld [vmem:[%s2410 + $0x71] sm:$0xff]
      %s2557 = scalar_lea.vmem %s3, 2048
      %v2558 = vld [vmem:[%s2557] sm:$0xff]
      %v2559 = vld [vmem:[%s2557 + $0x8] sm:$0xff]
      %v2560 = vld [vmem:[%s2557 + $0x10] sm:$0xff]
      %v2561 = vld [vmem:[%s2557 + $0x18] sm:$0xff]
      %v2562 = vld [vmem:[%s2557 + $0x20] sm:$0xff]
      %v2563 = vld [vmem:[%s2557 + $0x28] sm:$0xff]
      %v2564 = vld [vmem:[%s2557 + $0x30] sm:$0xff]
      %v2565 = vld [vmem:[%s2557 + $0x38] sm:$0xff]
      %v2566 = vld [vmem:[%s2557 + $0x40] sm:$0xff]
      %v2567 = vld [vmem:[%s2557 + $0x48] sm:$0xff]
      %v2568 = vld [vmem:[%s2557 + $0x50] sm:$0xff]
      %v2569 = vld [vmem:[%s2557 + $0x58] sm:$0xff]
      %v2570 = vld [vmem:[%s2557 + $0x60] sm:$0xff]
      %v2571 = vld [vmem:[%s2557 + $0x68] sm:$0xff]
      %v2572 = vld [vmem:[%s2557 + $0x70] sm:$0xff]
      %v2573 = vld [vmem:[%s2557 + $0x78] sm:$0xff]
      %2574 = vmatprep.subr.mxu0 0.0
      %2575 = vmatpush1.msra.mxu0 %v2558
      %2576 = vmatprep.subr.mxu0 0.0
      %2577 = vmatpush1.msra.mxu0 %v2559
      %2578 = vmatprep.subr.mxu0 0.0
      %2579 = vmatpush1.msra.mxu0 %v2560
      %2580 = vmatprep.subr.mxu0 0.0
      %2581 = vmatpush1.msra.mxu0 %v2561
      %2582 = vmatprep.subr.mxu0 0.0
      %2583 = vmatpush1.msra.mxu0 %v2562
      %2584 = vmatprep.subr.mxu0 0.0
      %2585 = vmatpush1.msra.mxu0 %v2563
      %2586 = vmatprep.subr.mxu0 0.0
      %2587 = vmatpush1.msra.mxu0 %v2564
      %2588 = vmatprep.subr.mxu0 0.0
      %2589 = vmatpush1.msra.mxu0 %v2565
      %2590 = vmatprep.subr.mxu0 0.0
      %2591 = vmatpush1.msra.mxu0 %v2566
      %2592 = vmatprep.subr.mxu0 0.0
      %2593 = vmatpush1.msra.mxu0 %v2567
      %2594 = vmatprep.subr.mxu0 0.0
      %2595 = vmatpush1.msra.mxu0 %v2568
      %2596 = vmatprep.subr.mxu0 0.0
      %2597 = vmatpush1.msra.mxu0 %v2569
      %2598 = vmatprep.subr.mxu0 0.0
      %2599 = vmatpush1.msra.mxu0 %v2570
      %2600 = vmatprep.subr.mxu0 0.0
      %2601 = vmatpush1.msra.mxu0 %v2571
      %2602 = vmatprep.subr.mxu0 0.0
      %2603 = vmatpush1.msra.mxu0 %v2572
      %2604 = vmatprep.subr.mxu0 0.0
      %2605 = vmatpush1.msra.mxu0 %v2573
      %2606 = vmatprep.subr.mxu0 0.0
      %2607 = vmatpush1.msra.mxu0 0.0
      %2608 = vmatprep.subr.mxu0 0.0
      %2609 = vmatpush1.msra.mxu0 0.0
      %2610 = vmatprep.subr.mxu0 0.0
      %2611 = vmatpush1.msra.mxu0 0.0
      %2612 = vmatprep.subr.mxu0 0.0
      %2613 = vmatpush1.msra.mxu0 0.0
      %2614 = vmatprep.subr.mxu0 0.0
      %2615 = vmatpush1.msra.mxu0 0.0
      %2616 = vmatprep.subr.mxu0 0.0
      %2617 = vmatpush1.msra.mxu0 0.0
      %2618 = vmatprep.subr.mxu0 0.0
      %2619 = vmatpush1.msra.mxu0 0.0
      %2620 = vmatprep.subr.mxu0 0.0
      %2621 = vmatpush1.msra.mxu0 0.0
      %2622 = vmatprep.subr.mxu0 0.0
      %2623 = vmatpush1.msra.mxu0 0.0
      %2624 = vmatprep.subr.mxu0 0.0
      %2625 = vmatpush1.msra.mxu0 0.0
      %2626 = vmatprep.subr.mxu0 0.0
      %2627 = vmatpush1.msra.mxu0 0.0
      %2628 = vmatprep.subr.mxu0 0.0
      %2629 = vmatpush1.msra.mxu0 0.0
      %2630 = vmatprep.subr.mxu0 0.0
      %2631 = vmatpush1.msra.mxu0 0.0
      %2632 = vmatprep.subr.mxu0 0.0
      %2633 = vmatpush1.msra.mxu0 0.0
      %2634 = vmatprep.subr.mxu0 0.0
      %2635 = vmatpush1.msra.mxu0 0.0
      %2636 = vmatprep.subr.mxu0 0.0
      %2637 = vmatpush1.msra.mxu0 0.0
      %2638 = vmatprep.mubr.f32.mxu0 0.0
      %2639 = vmatmul.mubr.f32.gmra.mrb[0].mxu0 %v2549
      %v2640 = vpop.f32.mrb[0].mxu0
      %v2641 = vadd.f32 0.0, %v2640
      %v2642 = vpop.f32.mrb[0].mxu0
      %2643 = vmatprep.mubr.f32.mxu0 0.0
      %2644 = vmatmul.mubr.f32.gmra.mrb[0].mxu0 %v2550
      %v2645 = vpop.f32.mrb[0].mxu0
      %v2646 = vadd.f32 0.0, %v2645
      %v2647 = vpop.f32.mrb[0].mxu0
      %2648 = vmatprep.mubr.f32.mxu0 0.0
      %2649 = vmatmul.mubr.f32.gmra.mrb[0].mxu0 %v2551
      %v2650 = vpop.f32.mrb[0].mxu0
      %v2651 = vadd.f32 0.0, %v2650
      %v2652 = vpop.f32.mrb[0].mxu0
      %2653 = vmatprep.mubr.f32.mxu0 0.0
      %2654 = vmatmul.mubr.f32.gmra.mrb[0].mxu0 %v2552
      %v2655 = vpop.f32.mrb[0].mxu0
      %v2656 = vadd.f32 0.0, %v2655
      %v2657 = vpop.f32.mrb[0].mxu0
      %2658 = vmatprep.mubr.f32.mxu0 0.0
      %2659 = vmatmul.mubr.f32.gmra.mrb[0].mxu0 %v2553
      %v2660 = vpop.f32.mrb[0].mxu0
      %v2661 = vadd.f32 0.0, %v2660
      %v2662 = vpop.f32.mrb[0].mxu0
      %2663 = vmatprep.mubr.f32.mxu0 0.0
      %2664 = vmatmul.mubr.f32.gmra.mrb[0].mxu0 %v2554
      %v2665 = vpop.f32.mrb[0].mxu0
      %v2666 = vadd.f32 0.0, %v2665
      %v2667 = vpop.f32.mrb[0].mxu0
      %2668 = vmatprep.mubr.f32.mxu0 0.0
      %2669 = vmatmul.mubr.f32.gmra.mrb[0].mxu0 %v2555
      %v2670 = vpop.f32.mrb[0].mxu0
      %v2671 = vadd.f32 0.0, %v2670
      %v2672 = vpop.f32.mrb[0].mxu0
      %2673 = vmatprep.mubr.f32.mxu0 0.0
      %2674 = vmatmul.mubr.f32.gmra.mrb[0].mxu0 %v2556
      %v2675 = vpop.f32.mrb[0].mxu0
      %v2676 = vadd.f32 0.0, %v2675
      %v2677 = vpop.f32.mrb[0].mxu0
      %2678 = vdwg.mxu0
      %v2679 = vadd.f32 %v2541, %v2641
      %v2680 = vadd.f32 %v2542, %v2646
      %v2681 = vadd.f32 %v2543, %v2651
      %v2682 = vadd.f32 %v2544, %v2656
      %v2683 = vadd.f32 %v2545, %v2661
      %v2684 = vadd.f32 %v2546, %v2666
      %v2685 = vadd.f32 %v2547, %v2671
      %v2686 = vadd.f32 %v2548, %v2676
      %v2687 = vld [vmem:[%s2410 + $0x2] sm:$0xff]
      %v2688 = vld [vmem:[%s2410 + $0x12] sm:$0xff]
      %v2689 = vld [vmem:[%s2410 + $0x22] sm:$0xff]
      %v2690 = vld [vmem:[%s2410 + $0x32] sm:$0xff]
      %v2691 = vld [vmem:[%s2410 + $0x42] sm:$0xff]
      %v2692 = vld [vmem:[%s2410 + $0x52] sm:$0xff]
      %v2693 = vld [vmem:[%s2410 + $0x62] sm:$0xff]
      %v2694 = vld [vmem:[%s2410 + $0x72] sm:$0xff]
      %s2695 = scalar_lea.vmem %s3, 2176
      %v2696 = vld [vmem:[%s2695] sm:$0xff]
      %v2697 = vld [vmem:[%s2695 + $0x8] sm:$0xff]
      %v2698 = vld [vmem:[%s2695 + $0x10] sm:$0xff]
      %v2699 = vld [vmem:[%s2695 + $0x18] sm:$0xff]
      %v2700 = vld [vmem:[%s2695 + $0x20] sm:$0xff]
      %v2701 = vld [vmem:[%s2695 + $0x28] sm:$0xff]
      %v2702 = vld [vmem:[%s2695 + $0x30] sm:$0xff]
      %v2703 = vld [vmem:[%s2695 + $0x38] sm:$0xff]
      %v2704 = vld [vmem:[%s2695 + $0x40] sm:$0xff]
      %v2705 = vld [vmem:[%s2695 + $0x48] sm:$0xff]
      %v2706 = vld [vmem:[%s2695 + $0x50] sm:$0xff]
      %v2707 = vld [vmem:[%s2695 + $0x58] sm:$0xff]
      %v2708 = vld [vmem:[%s2695 + $0x60] sm:$0xff]
      %v2709 = vld [vmem:[%s2695 + $0x68] sm:$0xff]
      %v2710 = vld [vmem:[%s2695 + $0x70] sm:$0xff]
      %v2711 = vld [vmem:[%s2695 + $0x78] sm:$0xff]
      %2712 = vmatprep.subr.mxu0 0.0
      %2713 = vmatpush1.msra.mxu0 %v2696
      %2714 = vmatprep.subr.mxu0 0.0
      %2715 = vmatpush1.msra.mxu0 %v2697
      %2716 = vmatprep.subr.mxu0 0.0
      %2717 = vmatpush1.msra.mxu0 %v2698
      %2718 = vmatprep.subr.mxu0 0.0
      %2719 = vmatpush1.msra.mxu0 %v2699
      %2720 = vmatprep.subr.mxu0 0.0
      %2721 = vmatpush1.msra.mxu0 %v2700
      %2722 = vmatprep.subr.mxu0 0.0
      %2723 = vmatpush1.msra.mxu0 %v2701
      %2724 = vmatprep.subr.mxu0 0.0
      %2725 = vmatpush1.msra.mxu0 %v2702
      %2726 = vmatprep.subr.mxu0 0.0
      %2727 = vmatpush1.msra.mxu0 %v2703
      %2728 = vmatprep.subr.mxu0 0.0
      %2729 = vmatpush1.msra.mxu0 %v2704
      %2730 = vmatprep.subr.mxu0 0.0
      %2731 = vmatpush1.msra.mxu0 %v2705
      %2732 = vmatprep.subr.mxu0 0.0
      %2733 = vmatpush1.msra.mxu0 %v2706
      %2734 = vmatprep.subr.mxu0 0.0
      %2735 = vmatpush1.msra.mxu0 %v2707
      %2736 = vmatprep.subr.mxu0 0.0
      %2737 = vmatpush1.msra.mxu0 %v2708
      %2738 = vmatprep.subr.mxu0 0.0
      %2739 = vmatpush1.msra.mxu0 %v2709
      %2740 = vmatprep.subr.mxu0 0.0
      %2741 = vmatpush1.msra.mxu0 %v2710
      %2742 = vmatprep.subr.mxu0 0.0
      %2743 = vmatpush1.msra.mxu0 %v2711
      %2744 = vmatprep.subr.mxu0 0.0
      %2745 = vmatpush1.msra.mxu0 0.0
      %2746 = vmatprep.subr.mxu0 0.0
      %2747 = vmatpush1.msra.mxu0 0.0
      %2748 = vmatprep.subr.mxu0 0.0
      %2749 = vmatpush1.msra.mxu0 0.0
      %2750 = vmatprep.subr.mxu0 0.0
      %2751 = vmatpush1.msra.mxu0 0.0
      %2752 = vmatprep.subr.mxu0 0.0
      %2753 = vmatpush1.msra.mxu0 0.0
      %2754 = vmatprep.subr.mxu0 0.0
      %2755 = vmatpush1.msra.mxu0 0.0
      %2756 = vmatprep.subr.mxu0 0.0
      %2757 = vmatpush1.msra.mxu0 0.0
      %2758 = vmatprep.subr.mxu0 0.0
      %2759 = vmatpush1.msra.mxu0 0.0
      %2760 = vmatprep.subr.mxu0 0.0
      %2761 = vmatpush1.msra.mxu0 0.0
      %2762 = vmatprep.subr.mxu0 0.0
      %2763 = vmatpush1.msra.mxu0 0.0
      %2764 = vmatprep.subr.mxu0 0.0
      %2765 = vmatpush1.msra.mxu0 0.0
      %2766 = vmatprep.subr.mxu0 0.0
      %2767 = vmatpush1.msra.mxu0 0.0
      %2768 = vmatprep.subr.mxu0 0.0
      %2769 = vmatpush1.msra.mxu0 0.0
      %2770 = vmatprep.subr.mxu0 0.0
      %2771 = vmatpush1.msra.mxu0 0.0
      %2772 = vmatprep.subr.mxu0 0.0
      %2773 = vmatpush1.msra.mxu0 0.0
      %2774 = vmatprep.subr.mxu0 0.0
      %2775 = vmatpush1.msra.mxu0 0.0
      %2776 = vmatprep.mubr.f32.mxu0 0.0
      %2777 = vmatmul.mubr.f32.gmra.mrb[0].mxu0 %v2687
      %v2778 = vpop.f32.mrb[0].mxu0
      %v2779 = vadd.f32 0.0, %v2778
      %v2780 = vpop.f32.mrb[0].mxu0
      %2781 = vmatprep.mubr.f32.mxu0 0.0
      %2782 = vmatmul.mubr.f32.gmra.mrb[0].mxu0 %v2688
      %v2783 = vpop.f32.mrb[0].mxu0
      %v2784 = vadd.f32 0.0, %v2783
      %v2785 = vpop.f32.mrb[0].mxu0
      %2786 = vmatprep.mubr.f32.mxu0 0.0
      %2787 = vmatmul.mubr.f32.gmra.mrb[0].mxu0 %v2689
      %v2788 = vpop.f32.mrb[0].mxu0
      %v2789 = vadd.f32 0.0, %v2788
      %v2790 = vpop.f32.mrb[0].mxu0
      %2791 = vmatprep.mubr.f32.mxu0 0.0
      %2792 = vmatmul.mubr.f32.gmra.mrb[0].mxu0 %v2690
      %v2793 = vpop.f32.mrb[0].mxu0
      %v2794 = vadd.f32 0.0, %v2793
      %v2795 = vpop.f32.mrb[0].mxu0
      %2796 = vmatprep.mubr.f32.mxu0 0.0
      %2797 = vmatmul.mubr.f32.gmra.mrb[0].mxu0 %v2691
      %v2798 = vpop.f32.mrb[0].mxu0
      %v2799 = vadd.f32 0.0, %v2798
      %v2800 = vpop.f32.mrb[0].mxu0
      %2801 = vmatprep.mubr.f32.mxu0 0.0
      %2802 = vmatmul.mubr.f32.gmra.mrb[0].mxu0 %v2692
      %v2803 = vpop.f32.mrb[0].mxu0
      %v2804 = vadd.f32 0.0, %v2803
      %v2805 = vpop.f32.mrb[0].mxu0
      %2806 = vmatprep.mubr.f32.mxu0 0.0
      %2807 = vmatmul.mubr.f32.gmra.mrb[0].mxu0 %v2693
      %v2808 = vpop.f32.mrb[0].mxu0
      %v2809 = vadd.f32 0.0, %v2808
      %v2810 = vpop.f32.mrb[0].mxu0
      %2811 = vmatprep.mubr.f32.mxu0 0.0
      %2812 = vmatmul.mubr.f32.gmra.mrb[0].mxu0 %v2694
      %v2813 = vpop.f32.mrb[0].mxu0
      %v2814 = vadd.f32 0.0, %v2813
      %v2815 = vpop.f32.mrb[0].mxu0
      %2816 = vdwg.mxu0
      %v2817 = vadd.f32 %v2679, %v2779
      %v2818 = vadd.f32 %v2680, %v2784
      %v2819 = vadd.f32 %v2681, %v2789
      %v2820 = vadd.f32 %v2682, %v2794
      %v2821 = vadd.f32 %v2683, %v2799
      %v2822 = vadd.f32 %v2684, %v2804
      %v2823 = vadd.f32 %v2685, %v2809
      %v2824 = vadd.f32 %v2686, %v2814
      %v2825 = vld [vmem:[%s339] sm:$0xff]
      %v2826 = vld [vmem:[%s339 + $0x10] sm:$0xff]
      %v2827 = vld [vmem:[%s339 + $0x20] sm:$0xff]
      %v2828 = vld [vmem:[%s339 + $0x30] sm:$0xff]
      %v2829 = vld [vmem:[%s339 + $0x40] sm:$0xff]
      %v2830 = vld [vmem:[%s339 + $0x50] sm:$0xff]
      %v2831 = vld [vmem:[%s339 + $0x60] sm:$0xff]
      %v2832 = vld [vmem:[%s339 + $0x70] sm:$0xff]
      %s2833 = scalar_lea.vmem %s3, 2304
      %v2834 = vld [vmem:[%s2833] sm:$0xff]
      %v2835 = vld [vmem:[%s2833 + $0x8] sm:$0xff]
      %v2836 = vld [vmem:[%s2833 + $0x10] sm:$0xff]
      %v2837 = vld [vmem:[%s2833 + $0x18] sm:$0xff]
      %v2838 = vld [vmem:[%s2833 + $0x20] sm:$0xff]
      %v2839 = vld [vmem:[%s2833 + $0x28] sm:$0xff]
      %v2840 = vld [vmem:[%s2833 + $0x30] sm:$0xff]
      %v2841 = vld [vmem:[%s2833 + $0x38] sm:$0xff]
      %v2842 = vld [vmem:[%s2833 + $0x40] sm:$0xff]
      %v2843 = vld [vmem:[%s2833 + $0x48] sm:$0xff]
      %v2844 = vld [vmem:[%s2833 + $0x50] sm:$0xff]
      %v2845 = vld [vmem:[%s2833 + $0x58] sm:$0xff]
      %v2846 = vld [vmem:[%s2833 + $0x60] sm:$0xff]
      %v2847 = vld [vmem:[%s2833 + $0x68] sm:$0xff]
      %v2848 = vld [vmem:[%s2833 + $0x70] sm:$0xff]
      %v2849 = vld [vmem:[%s2833 + $0x78] sm:$0xff]
      %2850 = vmatprep.subr.mxu0 0.0
      %2851 = vmatpush1.msra.mxu0 %v2834
      %2852 = vmatprep.subr.mxu0 0.0
      %2853 = vmatpush1.msra.mxu0 %v2835
      %2854 = vmatprep.subr.mxu0 0.0
      %2855 = vmatpush1.msra.mxu0 %v2836
      %2856 = vmatprep.subr.mxu0 0.0
      %2857 = vmatpush1.msra.mxu0 %v2837
      %2858 = vmatprep.subr.mxu0 0.0
      %2859 = vmatpush1.msra.mxu0 %v2838
      %2860 = vmatprep.subr.mxu0 0.0
      %2861 = vmatpush1.msra.mxu0 %v2839
      %2862 = vmatprep.subr.mxu0 0.0
      %2863 = vmatpush1.msra.mxu0 %v2840
      %2864 = vmatprep.subr.mxu0 0.0
      %2865 = vmatpush1.msra.mxu0 %v2841
      %2866 = vmatprep.subr.mxu0 0.0
      %2867 = vmatpush1.msra.mxu0 %v2842
      %2868 = vmatprep.subr.mxu0 0.0
      %2869 = vmatpush1.msra.mxu0 %v2843
      %2870 = vmatprep.subr.mxu0 0.0
      %2871 = vmatpush1.msra.mxu0 %v2844
      %2872 = vmatprep.subr.mxu0 0.0
      %2873 = vmatpush1.msra.mxu0 %v2845
      %2874 = vmatprep.subr.mxu0 0.0
      %2875 = vmatpush1.msra.mxu0 %v2846
      %2876 = vmatprep.subr.mxu0 0.0
      %2877 = vmatpush1.msra.mxu0 %v2847
      %2878 = vmatprep.subr.mxu0 0.0
      %2879 = vmatpush1.msra.mxu0 %v2848
      %2880 = vmatprep.subr.mxu0 0.0
      %2881 = vmatpush1.msra.mxu0 %v2849
      %2882 = vmatprep.subr.mxu0 0.0
      %2883 = vmatpush1.msra.mxu0 0.0
      %2884 = vmatprep.subr.mxu0 0.0
      %2885 = vmatpush1.msra.mxu0 0.0
      %2886 = vmatprep.subr.mxu0 0.0
      %2887 = vmatpush1.msra.mxu0 0.0
      %2888 = vmatprep.subr.mxu0 0.0
      %2889 = vmatpush1.msra.mxu0 0.0
      %2890 = vmatprep.subr.mxu0 0.0
      %2891 = vmatpush1.msra.mxu0 0.0
      %2892 = vmatprep.subr.mxu0 0.0
      %2893 = vmatpush1.msra.mxu0 0.0
      %2894 = vmatprep.subr.mxu0 0.0
      %2895 = vmatpush1.msra.mxu0 0.0
      %2896 = vmatprep.subr.mxu0 0.0
      %2897 = vmatpush1.msra.mxu0 0.0
      %2898 = vmatprep.subr.mxu0 0.0
      %2899 = vmatpush1.msra.mxu0 0.0
      %2900 = vmatprep.subr.mxu0 0.0
      %2901 = vmatpush1.msra.mxu0 0.0
      %2902 = vmatprep.subr.mxu0 0.0
      %2903 = vmatpush1.msra.mxu0 0.0
      %2904 = vmatprep.subr.mxu0 0.0
      %2905 = vmatpush1.msra.mxu0 0.0
      %2906 = vmatprep.subr.mxu0 0.0
      %2907 = vmatpush1.msra.mxu0 0.0
      %2908 = vmatprep.subr.mxu0 0.0
      %2909 = vmatpush1.msra.mxu0 0.0
      %2910 = vmatprep.subr.mxu0 0.0
      %2911 = vmatpush1.msra.mxu0 0.0
      %2912 = vmatprep.subr.mxu0 0.0
      %2913 = vmatpush1.msra.mxu0 0.0
      %2914 = vmatprep.mubr.f32.mxu0 0.0
      %2915 = vmatmul.mubr.f32.gmra.mrb[0].mxu0 %v2825
      %v2916 = vpop.f32.mrb[0].mxu0
      %v2917 = vadd.f32 0.0, %v2916
      %v2918 = vpop.f32.mrb[0].mxu0
      %2919 = vmatprep.mubr.f32.mxu0 0.0
      %2920 = vmatmul.mubr.f32.gmra.mrb[0].mxu0 %v2826
      %v2921 = vpop.f32.mrb[0].mxu0
      %v2922 = vadd.f32 0.0, %v2921
      %v2923 = vpop.f32.mrb[0].mxu0
      %2924 = vmatprep.mubr.f32.mxu0 0.0
      %2925 = vmatmul.mubr.f32.gmra.mrb[0].mxu0 %v2827
      %v2926 = vpop.f32.mrb[0].mxu0
      %v2927 = vadd.f32 0.0, %v2926
      %v2928 = vpop.f32.mrb[0].mxu0
      %2929 = vmatprep.mubr.f32.mxu0 0.0
      %2930 = vmatmul.mubr.f32.gmra.mrb[0].mxu0 %v2828
      %v2931 = vpop.f32.mrb[0].mxu0
      %v2932 = vadd.f32 0.0, %v2931
      %v2933 = vpop.f32.mrb[0].mxu0
      %2934 = vmatprep.mubr.f32.mxu0 0.0
      %2935 = vmatmul.mubr.f32.gmra.mrb[0].mxu0 %v2829
      %v2936 = vpop.f32.mrb[0].mxu0
      %v2937 = vadd.f32 0.0, %v2936
      %v2938 = vpop.f32.mrb[0].mxu0
      %2939 = vmatprep.mubr.f32.mxu0 0.0
      %2940 = vmatmul.mubr.f32.gmra.mrb[0].mxu0 %v2830
      %v2941 = vpop.f32.mrb[0].mxu0
      %v2942 = vadd.f32 0.0, %v2941
      %v2943 = vpop.f32.mrb[0].mxu0
      %2944 = vmatprep.mubr.f32.mxu0 0.0
      %2945 = vmatmul.mubr.f32.gmra.mrb[0].mxu0 %v2831
      %v2946 = vpop.f32.mrb[0].mxu0
      %v2947 = vadd.f32 0.0, %v2946
      %v2948 = vpop.f32.mrb[0].mxu0
      %2949 = vmatprep.mubr.f32.mxu0 0.0
      %2950 = vmatmul.mubr.f32.gmra.mrb[0].mxu0 %v2832
      %v2951 = vpop.f32.mrb[0].mxu0
      %v2952 = vadd.f32 0.0, %v2951
      %v2953 = vpop.f32.mrb[0].mxu0
      %2954 = vdwg.mxu0
      %v2955 = vadd.f32 %v2817, %v2917
      %v2956 = vadd.f32 %v2818, %v2922
      %v2957 = vadd.f32 %v2819, %v2927
      %v2958 = vadd.f32 %v2820, %v2932
      %v2959 = vadd.f32 %v2821, %v2937
      %v2960 = vadd.f32 %v2822, %v2942
      %v2961 = vadd.f32 %v2823, %v2947
      %v2962 = vadd.f32 %v2824, %v2952
      %v2963 = vld [vmem:[%s339 + $0x1] sm:$0xff]
      %v2964 = vld [vmem:[%s339 + $0x11] sm:$0xff]
      %v2965 = vld [vmem:[%s339 + $0x21] sm:$0xff]
      %v2966 = vld [vmem:[%s339 + $0x31] sm:$0xff]
      %v2967 = vld [vmem:[%s339 + $0x41] sm:$0xff]
      %v2968 = vld [vmem:[%s339 + $0x51] sm:$0xff]
      %v2969 = vld [vmem:[%s339 + $0x61] sm:$0xff]
      %v2970 = vld [vmem:[%s339 + $0x71] sm:$0xff]
      %s2971 = scalar_lea.vmem %s3, 2432
      %v2972 = vld [vmem:[%s2971] sm:$0xff]
      %v2973 = vld [vmem:[%s2971 + $0x8] sm:$0xff]
      %v2974 = vld [vmem:[%s2971 + $0x10] sm:$0xff]
      %v2975 = vld [vmem:[%s2971 + $0x18] sm:$0xff]
      %v2976 = vld [vmem:[%s2971 + $0x20] sm:$0xff]
      %v2977 = vld [vmem:[%s2971 + $0x28] sm:$0xff]
      %v2978 = vld [vmem:[%s2971 + $0x30] sm:$0xff]
      %v2979 = vld [vmem:[%s2971 + $0x38] sm:$0xff]
      %v2980 = vld [vmem:[%s2971 + $0x40] sm:$0xff]
      %v2981 = vld [vmem:[%s2971 + $0x48] sm:$0xff]
      %v2982 = vld [vmem:[%s2971 + $0x50] sm:$0xff]
      %v2983 = vld [vmem:[%s2971 + $0x58] sm:$0xff]
      %v2984 = vld [vmem:[%s2971 + $0x60] sm:$0xff]
      %v2985 = vld [vmem:[%s2971 + $0x68] sm:$0xff]
      %v2986 = vld [vmem:[%s2971 + $0x70] sm:$0xff]
      %v2987 = vld [vmem:[%s2971 + $0x78] sm:$0xff]
      %2988 = vmatprep.subr.mxu0 0.0
      %2989 = vmatpush1.msra.mxu0 %v2972
      %2990 = vmatprep.subr.mxu0 0.0
      %2991 = vmatpush1.msra.mxu0 %v2973
      %2992 = vmatprep.subr.mxu0 0.0
      %2993 = vmatpush1.msra.mxu0 %v2974
      %2994 = vmatprep.subr.mxu0 0.0
      %2995 = vmatpush1.msra.mxu0 %v2975
      %2996 = vmatprep.subr.mxu0 0.0
      %2997 = vmatpush1.msra.mxu0 %v2976
      %2998 = vmatprep.subr.mxu0 0.0
      %2999 = vmatpush1.msra.mxu0 %v2977
      %3000 = vmatprep.subr.mxu0 0.0
      %3001 = vmatpush1.msra.mxu0 %v2978
      %3002 = vmatprep.subr.mxu0 0.0
      %3003 = vmatpush1.msra.mxu0 %v2979
      %3004 = vmatprep.subr.mxu0 0.0
      %3005 = vmatpush1.msra.mxu0 %v2980
      %3006 = vmatprep.subr.mxu0 0.0
      %3007 = vmatpush1.msra.mxu0 %v2981
      %3008 = vmatprep.subr.mxu0 0.0
      %3009 = vmatpush1.msra.mxu0 %v2982
      %3010 = vmatprep.subr.mxu0 0.0
      %3011 = vmatpush1.msra.mxu0 %v2983
      %3012 = vmatprep.subr.mxu0 0.0
      %3013 = vmatpush1.msra.mxu0 %v2984
      %3014 = vmatprep.subr.mxu0 0.0
      %3015 = vmatpush1.msra.mxu0 %v2985
      %3016 = vmatprep.subr.mxu0 0.0
      %3017 = vmatpush1.msra.mxu0 %v2986
      %3018 = vmatprep.subr.mxu0 0.0
      %3019 = vmatpush1.msra.mxu0 %v2987
      %3020 = vmatprep.subr.mxu0 0.0
      %3021 = vmatpush1.msra.mxu0 0.0
      %3022 = vmatprep.subr.mxu0 0.0
      %3023 = vmatpush1.msra.mxu0 0.0
      %3024 = vmatprep.subr.mxu0 0.0
      %3025 = vmatpush1.msra.mxu0 0.0
      %3026 = vmatprep.subr.mxu0 0.0
      %3027 = vmatpush1.msra.mxu0 0.0
      %3028 = vmatprep.subr.mxu0 0.0
      %3029 = vmatpush1.msra.mxu0 0.0
      %3030 = vmatprep.subr.mxu0 0.0
      %3031 = vmatpush1.msra.mxu0 0.0
      %3032 = vmatprep.subr.mxu0 0.0
      %3033 = vmatpush1.msra.mxu0 0.0
      %3034 = vmatprep.subr.mxu0 0.0
      %3035 = vmatpush1.msra.mxu0 0.0
      %3036 = vmatprep.subr.mxu0 0.0
      %3037 = vmatpush1.msra.mxu0 0.0
      %3038 = vmatprep.subr.mxu0 0.0
      %3039 = vmatpush1.msra.mxu0 0.0
      %3040 = vmatprep.subr.mxu0 0.0
      %3041 = vmatpush1.msra.mxu0 0.0
      %3042 = vmatprep.subr.mxu0 0.0
      %3043 = vmatpush1.msra.mxu0 0.0
      %3044 = vmatprep.subr.mxu0 0.0
      %3045 = vmatpush1.msra.mxu0 0.0
      %3046 = vmatprep.subr.mxu0 0.0
      %3047 = vmatpush1.msra.mxu0 0.0
      %3048 = vmatprep.subr.mxu0 0.0
      %3049 = vmatpush1.msra.mxu0 0.0
      %3050 = vmatprep.subr.mxu0 0.0
      %3051 = vmatpush1.msra.mxu0 0.0
      %3052 = vmatprep.mubr.f32.mxu0 0.0
      %3053 = vmatmul.mubr.f32.gmra.mrb[0].mxu0 %v2963
      %v3054 = vpop.f32.mrb[0].mxu0
      %v3055 = vadd.f32 0.0, %v3054
      %v3056 = vpop.f32.mrb[0].mxu0
      %3057 = vmatprep.mubr.f32.mxu0 0.0
      %3058 = vmatmul.mubr.f32.gmra.mrb[0].mxu0 %v2964
      %v3059 = vpop.f32.mrb[0].mxu0
      %v3060 = vadd.f32 0.0, %v3059
      %v3061 = vpop.f32.mrb[0].mxu0
      %3062 = vmatprep.mubr.f32.mxu0 0.0
      %3063 = vmatmul.mubr.f32.gmra.mrb[0].mxu0 %v2965
      %v3064 = vpop.f32.mrb[0].mxu0
      %v3065 = vadd.f32 0.0, %v3064
      %v3066 = vpop.f32.mrb[0].mxu0
      %3067 = vmatprep.mubr.f32.mxu0 0.0
      %3068 = vmatmul.mubr.f32.gmra.mrb[0].mxu0 %v2966
      %v3069 = vpop.f32.mrb[0].mxu0
      %v3070 = vadd.f32 0.0, %v3069
      %v3071 = vpop.f32.mrb[0].mxu0
      %3072 = vmatprep.mubr.f32.mxu0 0.0
      %3073 = vmatmul.mubr.f32.gmra.mrb[0].mxu0 %v2967
      %v3074 = vpop.f32.mrb[0].mxu0
      %v3075 = vadd.f32 0.0, %v3074
      %v3076 = vpop.f32.mrb[0].mxu0
      %3077 = vmatprep.mubr.f32.mxu0 0.0
      %3078 = vmatmul.mubr.f32.gmra.mrb[0].mxu0 %v2968
      %v3079 = vpop.f32.mrb[0].mxu0
      %v3080 = vadd.f32 0.0, %v3079
      %v3081 = vpop.f32.mrb[0].mxu0
      %3082 = vmatprep.mubr.f32.mxu0 0.0
      %3083 = vmatmul.mubr.f32.gmra.mrb[0].mxu0 %v2969
      %v3084 = vpop.f32.mrb[0].mxu0
      %v3085 = vadd.f32 0.0, %v3084
      %v3086 = vpop.f32.mrb[0].mxu0
      %3087 = vmatprep.mubr.f32.mxu0 0.0
      %3088 = vmatmul.mubr.f32.gmra.mrb[0].mxu0 %v2970
      %v3089 = vpop.f32.mrb[0].mxu0
      %v3090 = vadd.f32 0.0, %v3089
      %v3091 = vpop.f32.mrb[0].mxu0
      %3092 = vdwg.mxu0
      %v3093 = vadd.f32 %v2955, %v3055
      %v3094 = vadd.f32 %v2956, %v3060
      %v3095 = vadd.f32 %v2957, %v3065
      %v3096 = vadd.f32 %v2958, %v3070
      %v3097 = vadd.f32 %v2959, %v3075
      %v3098 = vadd.f32 %v2960, %v3080
      %v3099 = vadd.f32 %v2961, %v3085
      %v3100 = vadd.f32 %v2962, %v3090
      %v3101 = vld [vmem:[%s339 + $0x2] sm:$0xff]
      %v3102 = vld [vmem:[%s339 + $0x12] sm:$0xff]
      %v3103 = vld [vmem:[%s339 + $0x22] sm:$0xff]
      %v3104 = vld [vmem:[%s339 + $0x32] sm:$0xff]
      %v3105 = vld [vmem:[%s339 + $0x42] sm:$0xff]
      %v3106 = vld [vmem:[%s339 + $0x52] sm:$0xff]
      %v3107 = vld [vmem:[%s339 + $0x62] sm:$0xff]
      %v3108 = vld [vmem:[%s339 + $0x72] sm:$0xff]
      %s3109 = scalar_lea.vmem %s3, 2560
      %v3110 = vld [vmem:[%s3109] sm:$0xff]
      %v3111 = vld [vmem:[%s3109 + $0x8] sm:$0xff]
      %v3112 = vld [vmem:[%s3109 + $0x10] sm:$0xff]
      %v3113 = vld [vmem:[%s3109 + $0x18] sm:$0xff]
      %v3114 = vld [vmem:[%s3109 + $0x20] sm:$0xff]
      %v3115 = vld [vmem:[%s3109 + $0x28] sm:$0xff]
      %v3116 = vld [vmem:[%s3109 + $0x30] sm:$0xff]
      %v3117 = vld [vmem:[%s3109 + $0x38] sm:$0xff]
      %v3118 = vld [vmem:[%s3109 + $0x40] sm:$0xff]
      %v3119 = vld [vmem:[%s3109 + $0x48] sm:$0xff]
      %v3120 = vld [vmem:[%s3109 + $0x50] sm:$0xff]
      %v3121 = vld [vmem:[%s3109 + $0x58] sm:$0xff]
      %v3122 = vld [vmem:[%s3109 + $0x60] sm:$0xff]
      %v3123 = vld [vmem:[%s3109 + $0x68] sm:$0xff]
      %v3124 = vld [vmem:[%s3109 + $0x70] sm:$0xff]
      %v3125 = vld [vmem:[%s3109 + $0x78] sm:$0xff]
      %3126 = vmatprep.subr.mxu0 0.0
      %3127 = vmatpush1.msra.mxu0 %v3110
      %3128 = vmatprep.subr.mxu0 0.0
      %3129 = vmatpush1.msra.mxu0 %v3111
      %3130 = vmatprep.subr.mxu0 0.0
      %3131 = vmatpush1.msra.mxu0 %v3112
      %3132 = vmatprep.subr.mxu0 0.0
      %3133 = vmatpush1.msra.mxu0 %v3113
      %3134 = vmatprep.subr.mxu0 0.0
      %3135 = vmatpush1.msra.mxu0 %v3114
      %3136 = vmatprep.subr.mxu0 0.0
      %3137 = vmatpush1.msra.mxu0 %v3115
      %3138 = vmatprep.subr.mxu0 0.0
      %3139 = vmatpush1.msra.mxu0 %v3116
      %3140 = vmatprep.subr.mxu0 0.0
      %3141 = vmatpush1.msra.mxu0 %v3117
      %3142 = vmatprep.subr.mxu0 0.0
      %3143 = vmatpush1.msra.mxu0 %v3118
      %3144 = vmatprep.subr.mxu0 0.0
      %3145 = vmatpush1.msra.mxu0 %v3119
      %3146 = vmatprep.subr.mxu0 0.0
      %3147 = vmatpush1.msra.mxu0 %v3120
      %3148 = vmatprep.subr.mxu0 0.0
      %3149 = vmatpush1.msra.mxu0 %v3121
      %3150 = vmatprep.subr.mxu0 0.0
      %3151 = vmatpush1.msra.mxu0 %v3122
      %3152 = vmatprep.subr.mxu0 0.0
      %3153 = vmatpush1.msra.mxu0 %v3123
      %3154 = vmatprep.subr.mxu0 0.0
      %3155 = vmatpush1.msra.mxu0 %v3124
      %3156 = vmatprep.subr.mxu0 0.0
      %3157 = vmatpush1.msra.mxu0 %v3125
      %3158 = vmatprep.subr.mxu0 0.0
      %3159 = vmatpush1.msra.mxu0 0.0
      %3160 = vmatprep.subr.mxu0 0.0
      %3161 = vmatpush1.msra.mxu0 0.0
      %3162 = vmatprep.subr.mxu0 0.0
      %3163 = vmatpush1.msra.mxu0 0.0
      %3164 = vmatprep.subr.mxu0 0.0
      %3165 = vmatpush1.msra.mxu0 0.0
      %3166 = vmatprep.subr.mxu0 0.0
      %3167 = vmatpush1.msra.mxu0 0.0
      %3168 = vmatprep.subr.mxu0 0.0
      %3169 = vmatpush1.msra.mxu0 0.0
      %3170 = vmatprep.subr.mxu0 0.0
      %3171 = vmatpush1.msra.mxu0 0.0
      %3172 = vmatprep.subr.mxu0 0.0
      %3173 = vmatpush1.msra.mxu0 0.0
      %3174 = vmatprep.subr.mxu0 0.0
      %3175 = vmatpush1.msra.mxu0 0.0
      %3176 = vmatprep.subr.mxu0 0.0
      %3177 = vmatpush1.msra.mxu0 0.0
      %3178 = vmatprep.subr.mxu0 0.0
      %3179 = vmatpush1.msra.mxu0 0.0
      %3180 = vmatprep.subr.mxu0 0.0
      %3181 = vmatpush1.msra.mxu0 0.0
      %3182 = vmatprep.subr.mxu0 0.0
      %3183 = vmatpush1.msra.mxu0 0.0
      %3184 = vmatprep.subr.mxu0 0.0
      %3185 = vmatpush1.msra.mxu0 0.0
      %3186 = vmatprep.subr.mxu0 0.0
      %3187 = vmatpush1.msra.mxu0 0.0
      %3188 = vmatprep.subr.mxu0 0.0
      %3189 = vmatpush1.msra.mxu0 0.0
      %3190 = vmatprep.mubr.f32.mxu0 0.0
      %3191 = vmatmul.mubr.f32.gmra.mrb[0].mxu0 %v3101
      %v3192 = vpop.f32.mrb[0].mxu0
      %v3193 = vadd.f32 0.0, %v3192
      %v3194 = vpop.f32.mrb[0].mxu0
      %3195 = vmatprep.mubr.f32.mxu0 0.0
      %3196 = vmatmul.mubr.f32.gmra.mrb[0].mxu0 %v3102
      %v3197 = vpop.f32.mrb[0].mxu0
      %v3198 = vadd.f32 0.0, %v3197
      %v3199 = vpop.f32.mrb[0].mxu0
      %3200 = vmatprep.mubr.f32.mxu0 0.0
      %3201 = vmatmul.mubr.f32.gmra.mrb[0].mxu0 %v3103
      %v3202 = vpop.f32.mrb[0].mxu0
      %v3203 = vadd.f32 0.0, %v3202
      %v3204 = vpop.f32.mrb[0].mxu0
      %3205 = vmatprep.mubr.f32.mxu0 0.0
      %3206 = vmatmul.mubr.f32.gmra.mrb[0].mxu0 %v3104
      %v3207 = vpop.f32.mrb[0].mxu0
      %v3208 = vadd.f32 0.0, %v3207
      %v3209 = vpop.f32.mrb[0].mxu0
      %3210 = vmatprep.mubr.f32.mxu0 0.0
      %3211 = vmatmul.mubr.f32.gmra.mrb[0].mxu0 %v3105
      %v3212 = vpop.f32.mrb[0].mxu0
      %v3213 = vadd.f32 0.0, %v3212
      %v3214 = vpop.f32.mrb[0].mxu0
      %3215 = vmatprep.mubr.f32.mxu0 0.0
      %3216 = vmatmul.mubr.f32.gmra.mrb[0].mxu0 %v3106
      %v3217 = vpop.f32.mrb[0].mxu0
      %v3218 = vadd.f32 0.0, %v3217
      %v3219 = vpop.f32.mrb[0].mxu0
      %3220 = vmatprep.mubr.f32.mxu0 0.0
      %3221 = vmatmul.mubr.f32.gmra.mrb[0].mxu0 %v3107
      %v3222 = vpop.f32.mrb[0].mxu0
      %v3223 = vadd.f32 0.0, %v3222
      %v3224 = vpop.f32.mrb[0].mxu0
      %3225 = vmatprep.mubr.f32.mxu0 0.0
      %3226 = vmatmul.mubr.f32.gmra.mrb[0].mxu0 %v3108
      %v3227 = vpop.f32.mrb[0].mxu0
      %v3228 = vadd.f32 0.0, %v3227
      %v3229 = vpop.f32.mrb[0].mxu0
      %3230 = vdwg.mxu0
      %v3231 = vadd.f32 %v3093, %v3193
      %v3232 = vadd.f32 %v3094, %v3198
      %v3233 = vadd.f32 %v3095, %v3203
      %v3234 = vadd.f32 %v3096, %v3208
      %v3235 = vadd.f32 %v3097, %v3213
      %v3236 = vadd.f32 %v3098, %v3218
      %v3237 = vadd.f32 %v3099, %v3223
      %v3238 = vadd.f32 %v3100, %v3228
      %s3239 = scalar_lea.vmem %s339, 16
      %v3240 = vld [vmem:[%s3239] sm:$0xff]
      %v3241 = vld [vmem:[%s3239 + $0x10] sm:$0xff]
      %v3242 = vld [vmem:[%s3239 + $0x20] sm:$0xff]
      %v3243 = vld [vmem:[%s3239 + $0x30] sm:$0xff]
      %v3244 = vld [vmem:[%s3239 + $0x40] sm:$0xff]
      %v3245 = vld [vmem:[%s3239 + $0x50] sm:$0xff]
      %v3246 = vld [vmem:[%s3239 + $0x60] sm:$0xff]
      %v3247 = vld [vmem:[%s3239 + $0x70] sm:$0xff]
      %s3248 = scalar_lea.vmem %s3, 2688
      %v3249 = vld [vmem:[%s3248] sm:$0xff]
      %v3250 = vld [vmem:[%s3248 + $0x8] sm:$0xff]
      %v3251 = vld [vmem:[%s3248 + $0x10] sm:$0xff]
      %v3252 = vld [vmem:[%s3248 + $0x18] sm:$0xff]
      %v3253 = vld [vmem:[%s3248 + $0x20] sm:$0xff]
      %v3254 = vld [vmem:[%s3248 + $0x28] sm:$0xff]
      %v3255 = vld [vmem:[%s3248 + $0x30] sm:$0xff]
      %v3256 = vld [vmem:[%s3248 + $0x38] sm:$0xff]
      %v3257 = vld [vmem:[%s3248 + $0x40] sm:$0xff]
      %v3258 = vld [vmem:[%s3248 + $0x48] sm:$0xff]
      %v3259 = vld [vmem:[%s3248 + $0x50] sm:$0xff]
      %v3260 = vld [vmem:[%s3248 + $0x58] sm:$0xff]
      %v3261 = vld [vmem:[%s3248 + $0x60] sm:$0xff]
      %v3262 = vld [vmem:[%s3248 + $0x68] sm:$0xff]
      %v3263 = vld [vmem:[%s3248 + $0x70] sm:$0xff]
      %v3264 = vld [vmem:[%s3248 + $0x78] sm:$0xff]
      %3265 = vmatprep.subr.mxu0 0.0
      %3266 = vmatpush1.msra.mxu0 %v3249
      %3267 = vmatprep.subr.mxu0 0.0
      %3268 = vmatpush1.msra.mxu0 %v3250
      %3269 = vmatprep.subr.mxu0 0.0
      %3270 = vmatpush1.msra.mxu0 %v3251
      %3271 = vmatprep.subr.mxu0 0.0
      %3272 = vmatpush1.msra.mxu0 %v3252
      %3273 = vmatprep.subr.mxu0 0.0
      %3274 = vmatpush1.msra.mxu0 %v3253
      %3275 = vmatprep.subr.mxu0 0.0
      %3276 = vmatpush1.msra.mxu0 %v3254
      %3277 = vmatprep.subr.mxu0 0.0
      %3278 = vmatpush1.msra.mxu0 %v3255
      %3279 = vmatprep.subr.mxu0 0.0
      %3280 = vmatpush1.msra.mxu0 %v3256
      %3281 = vmatprep.subr.mxu0 0.0
      %3282 = vmatpush1.msra.mxu0 %v3257
      %3283 = vmatprep.subr.mxu0 0.0
      %3284 = vmatpush1.msra.mxu0 %v3258
      %3285 = vmatprep.subr.mxu0 0.0
      %3286 = vmatpush1.msra.mxu0 %v3259
      %3287 = vmatprep.subr.mxu0 0.0
      %3288 = vmatpush1.msra.mxu0 %v3260
      %3289 = vmatprep.subr.mxu0 0.0
      %3290 = vmatpush1.msra.mxu0 %v3261
      %3291 = vmatprep.subr.mxu0 0.0
      %3292 = vmatpush1.msra.mxu0 %v3262
      %3293 = vmatprep.subr.mxu0 0.0
      %3294 = vmatpush1.msra.mxu0 %v3263
      %3295 = vmatprep.subr.mxu0 0.0
      %3296 = vmatpush1.msra.mxu0 %v3264
      %3297 = vmatprep.subr.mxu0 0.0
      %3298 = vmatpush1.msra.mxu0 0.0
      %3299 = vmatprep.subr.mxu0 0.0
      %3300 = vmatpush1.msra.mxu0 0.0
      %3301 = vmatprep.subr.mxu0 0.0
      %3302 = vmatpush1.msra.mxu0 0.0
      %3303 = vmatprep.subr.mxu0 0.0
      %3304 = vmatpush1.msra.mxu0 0.0
      %3305 = vmatprep.subr.mxu0 0.0
      %3306 = vmatpush1.msra.mxu0 0.0
      %3307 = vmatprep.subr.mxu0 0.0
      %3308 = vmatpush1.msra.mxu0 0.0
      %3309 = vmatprep.subr.mxu0 0.0
      %3310 = vmatpush1.msra.mxu0 0.0
      %3311 = vmatprep.subr.mxu0 0.0
      %3312 = vmatpush1.msra.mxu0 0.0
      %3313 = vmatprep.subr.mxu0 0.0
      %3314 = vmatpush1.msra.mxu0 0.0
      %3315 = vmatprep.subr.mxu0 0.0
      %3316 = vmatpush1.msra.mxu0 0.0
      %3317 = vmatprep.subr.mxu0 0.0
      %3318 = vmatpush1.msra.mxu0 0.0
      %3319 = vmatprep.subr.mxu0 0.0
      %3320 = vmatpush1.msra.mxu0 0.0
      %3321 = vmatprep.subr.mxu0 0.0
      %3322 = vmatpush1.msra.mxu0 0.0
      %3323 = vmatprep.subr.mxu0 0.0
      %3324 = vmatpush1.msra.mxu0 0.0
      %3325 = vmatprep.subr.mxu0 0.0
      %3326 = vmatpush1.msra.mxu0 0.0
      %3327 = vmatprep.subr.mxu0 0.0
      %3328 = vmatpush1.msra.mxu0 0.0
      %3329 = vmatprep.mubr.f32.mxu0 0.0
      %3330 = vmatmul.mubr.f32.gmra.mrb[0].mxu0 %v3240
      %v3331 = vpop.f32.mrb[0].mxu0
      %v3332 = vadd.f32 0.0, %v3331
      %v3333 = vpop.f32.mrb[0].mxu0
      %3334 = vmatprep.mubr.f32.mxu0 0.0
      %3335 = vmatmul.mubr.f32.gmra.mrb[0].mxu0 %v3241
      %v3336 = vpop.f32.mrb[0].mxu0
      %v3337 = vadd.f32 0.0, %v3336
      %v3338 = vpop.f32.mrb[0].mxu0
      %3339 = vmatprep.mubr.f32.mxu0 0.0
      %3340 = vmatmul.mubr.f32.gmra.mrb[0].mxu0 %v3242
      %v3341 = vpop.f32.mrb[0].mxu0
      %v3342 = vadd.f32 0.0, %v3341
      %v3343 = vpop.f32.mrb[0].mxu0
      %3344 = vmatprep.mubr.f32.mxu0 0.0
      %3345 = vmatmul.mubr.f32.gmra.mrb[0].mxu0 %v3243
      %v3346 = vpop.f32.mrb[0].mxu0
      %v3347 = vadd.f32 0.0, %v3346
      %v3348 = vpop.f32.mrb[0].mxu0
      %3349 = vmatprep.mubr.f32.mxu0 0.0
      %3350 = vmatmul.mubr.f32.gmra.mrb[0].mxu0 %v3244
      %v3351 = vpop.f32.mrb[0].mxu0
      %v3352 = vadd.f32 0.0, %v3351
      %v3353 = vpop.f32.mrb[0].mxu0
      %3354 = vmatprep.mubr.f32.mxu0 0.0
      %3355 = vmatmul.mubr.f32.gmra.mrb[0].mxu0 %v3245
      %v3356 = vpop.f32.mrb[0].mxu0
      %v3357 = vadd.f32 0.0, %v3356
      %v3358 = vpop.f32.mrb[0].mxu0
      %3359 = vmatprep.mubr.f32.mxu0 0.0
      %3360 = vmatmul.mubr.f32.gmra.mrb[0].mxu0 %v3246
      %v3361 = vpop.f32.mrb[0].mxu0
      %v3362 = vadd.f32 0.0, %v3361
      %v3363 = vpop.f32.mrb[0].mxu0
      %3364 = vmatprep.mubr.f32.mxu0 0.0
      %3365 = vmatmul.mubr.f32.gmra.mrb[0].mxu0 %v3247
      %v3366 = vpop.f32.mrb[0].mxu0
      %v3367 = vadd.f32 0.0, %v3366
      %v3368 = vpop.f32.mrb[0].mxu0
      %3369 = vdwg.mxu0
      %v3370 = vadd.f32 %v3231, %v3332
      %v3371 = vadd.f32 %v3232, %v3337
      %v3372 = vadd.f32 %v3233, %v3342
      %v3373 = vadd.f32 %v3234, %v3347
      %v3374 = vadd.f32 %v3235, %v3352
      %v3375 = vadd.f32 %v3236, %v3357
      %v3376 = vadd.f32 %v3237, %v3362
      %v3377 = vadd.f32 %v3238, %v3367
      %v3378 = vld [vmem:[%s3239 + $0x1] sm:$0xff]
      %v3379 = vld [vmem:[%s3239 + $0x11] sm:$0xff]
      %v3380 = vld [vmem:[%s3239 + $0x21] sm:$0xff]
      %v3381 = vld [vmem:[%s3239 + $0x31] sm:$0xff]
      %v3382 = vld [vmem:[%s3239 + $0x41] sm:$0xff]
      %v3383 = vld [vmem:[%s3239 + $0x51] sm:$0xff]
      %v3384 = vld [vmem:[%s3239 + $0x61] sm:$0xff]
      %v3385 = vld [vmem:[%s3239 + $0x71] sm:$0xff]
      %s3386 = scalar_lea.vmem %s3, 2816
      %v3387 = vld [vmem:[%s3386] sm:$0xff]
      %v3388 = vld [vmem:[%s3386 + $0x8] sm:$0xff]
      %v3389 = vld [vmem:[%s3386 + $0x10] sm:$0xff]
      %v3390 = vld [vmem:[%s3386 + $0x18] sm:$0xff]
      %v3391 = vld [vmem:[%s3386 + $0x20] sm:$0xff]
      %v3392 = vld [vmem:[%s3386 + $0x28] sm:$0xff]
      %v3393 = vld [vmem:[%s3386 + $0x30] sm:$0xff]
      %v3394 = vld [vmem:[%s3386 + $0x38] sm:$0xff]
      %v3395 = vld [vmem:[%s3386 + $0x40] sm:$0xff]
      %v3396 = vld [vmem:[%s3386 + $0x48] sm:$0xff]
      %v3397 = vld [vmem:[%s3386 + $0x50] sm:$0xff]
      %v3398 = vld [vmem:[%s3386 + $0x58] sm:$0xff]
      %v3399 = vld [vmem:[%s3386 + $0x60] sm:$0xff]
      %v3400 = vld [vmem:[%s3386 + $0x68] sm:$0xff]
      %v3401 = vld [vmem:[%s3386 + $0x70] sm:$0xff]
      %v3402 = vld [vmem:[%s3386 + $0x78] sm:$0xff]
      %3403 = vmatprep.subr.mxu0 0.0
      %3404 = vmatpush1.msra.mxu0 %v3387
      %3405 = vmatprep.subr.mxu0 0.0
      %3406 = vmatpush1.msra.mxu0 %v3388
      %3407 = vmatprep.subr.mxu0 0.0
      %3408 = vmatpush1.msra.mxu0 %v3389
      %3409 = vmatprep.subr.mxu0 0.0
      %3410 = vmatpush1.msra.mxu0 %v3390
      %3411 = vmatprep.subr.mxu0 0.0
      %3412 = vmatpush1.msra.mxu0 %v3391
      %3413 = vmatprep.subr.mxu0 0.0
      %3414 = vmatpush1.msra.mxu0 %v3392
      %3415 = vmatprep.subr.mxu0 0.0
      %3416 = vmatpush1.msra.mxu0 %v3393
      %3417 = vmatprep.subr.mxu0 0.0
      %3418 = vmatpush1.msra.mxu0 %v3394
      %3419 = vmatprep.subr.mxu0 0.0
      %3420 = vmatpush1.msra.mxu0 %v3395
      %3421 = vmatprep.subr.mxu0 0.0
      %3422 = vmatpush1.msra.mxu0 %v3396
      %3423 = vmatprep.subr.mxu0 0.0
      %3424 = vmatpush1.msra.mxu0 %v3397
      %3425 = vmatprep.subr.mxu0 0.0
      %3426 = vmatpush1.msra.mxu0 %v3398
      %3427 = vmatprep.subr.mxu0 0.0
      %3428 = vmatpush1.msra.mxu0 %v3399
      %3429 = vmatprep.subr.mxu0 0.0
      %3430 = vmatpush1.msra.mxu0 %v3400
      %3431 = vmatprep.subr.mxu0 0.0
      %3432 = vmatpush1.msra.mxu0 %v3401
      %3433 = vmatprep.subr.mxu0 0.0
      %3434 = vmatpush1.msra.mxu0 %v3402
      %3435 = vmatprep.subr.mxu0 0.0
      %3436 = vmatpush1.msra.mxu0 0.0
      %3437 = vmatprep.subr.mxu0 0.0
      %3438 = vmatpush1.msra.mxu0 0.0
      %3439 = vmatprep.subr.mxu0 0.0
      %3440 = vmatpush1.msra.mxu0 0.0
      %3441 = vmatprep.subr.mxu0 0.0
      %3442 = vmatpush1.msra.mxu0 0.0
      %3443 = vmatprep.subr.mxu0 0.0
      %3444 = vmatpush1.msra.mxu0 0.0
      %3445 = vmatprep.subr.mxu0 0.0
      %3446 = vmatpush1.msra.mxu0 0.0
      %3447 = vmatprep.subr.mxu0 0.0
      %3448 = vmatpush1.msra.mxu0 0.0
      %3449 = vmatprep.subr.mxu0 0.0
      %3450 = vmatpush1.msra.mxu0 0.0
      %3451 = vmatprep.subr.mxu0 0.0
      %3452 = vmatpush1.msra.mxu0 0.0
      %3453 = vmatprep.subr.mxu0 0.0
      %3454 = vmatpush1.msra.mxu0 0.0
      %3455 = vmatprep.subr.mxu0 0.0
      %3456 = vmatpush1.msra.mxu0 0.0
      %3457 = vmatprep.subr.mxu0 0.0
      %3458 = vmatpush1.msra.mxu0 0.0
      %3459 = vmatprep.subr.mxu0 0.0
      %3460 = vmatpush1.msra.mxu0 0.0
      %3461 = vmatprep.subr.mxu0 0.0
      %3462 = vmatpush1.msra.mxu0 0.0
      %3463 = vmatprep.subr.mxu0 0.0
      %3464 = vmatpush1.msra.mxu0 0.0
      %3465 = vmatprep.subr.mxu0 0.0
      %3466 = vmatpush1.msra.mxu0 0.0
      %3467 = vmatprep.mubr.f32.mxu0 0.0
      %3468 = vmatmul.mubr.f32.gmra.mrb[0].mxu0 %v3378
      %v3469 = vpop.f32.mrb[0].mxu0
      %v3470 = vadd.f32 0.0, %v3469
      %v3471 = vpop.f32.mrb[0].mxu0
      %3472 = vmatprep.mubr.f32.mxu0 0.0
      %3473 = vmatmul.mubr.f32.gmra.mrb[0].mxu0 %v3379
      %v3474 = vpop.f32.mrb[0].mxu0
      %v3475 = vadd.f32 0.0, %v3474
      %v3476 = vpop.f32.mrb[0].mxu0
      %3477 = vmatprep.mubr.f32.mxu0 0.0
      %3478 = vmatmul.mubr.f32.gmra.mrb[0].mxu0 %v3380
      %v3479 = vpop.f32.mrb[0].mxu0
      %v3480 = vadd.f32 0.0, %v3479
      %v3481 = vpop.f32.mrb[0].mxu0
      %3482 = vmatprep.mubr.f32.mxu0 0.0
      %3483 = vmatmul.mubr.f32.gmra.mrb[0].mxu0 %v3381
      %v3484 = vpop.f32.mrb[0].mxu0
      %v3485 = vadd.f32 0.0, %v3484
      %v3486 = vpop.f32.mrb[0].mxu0
      %3487 = vmatprep.mubr.f32.mxu0 0.0
      %3488 = vmatmul.mubr.f32.gmra.mrb[0].mxu0 %v3382
      %v3489 = vpop.f32.mrb[0].mxu0
      %v3490 = vadd.f32 0.0, %v3489
      %v3491 = vpop.f32.mrb[0].mxu0
      %3492 = vmatprep.mubr.f32.mxu0 0.0
      %3493 = vmatmul.mubr.f32.gmra.mrb[0].mxu0 %v3383
      %v3494 = vpop.f32.mrb[0].mxu0
      %v3495 = vadd.f32 0.0, %v3494
      %v3496 = vpop.f32.mrb[0].mxu0
      %3497 = vmatprep.mubr.f32.mxu0 0.0
      %3498 = vmatmul.mubr.f32.gmra.mrb[0].mxu0 %v3384
      %v3499 = vpop.f32.mrb[0].mxu0
      %v3500 = vadd.f32 0.0, %v3499
      %v3501 = vpop.f32.mrb[0].mxu0
      %3502 = vmatprep.mubr.f32.mxu0 0.0
      %3503 = vmatmul.mubr.f32.gmra.mrb[0].mxu0 %v3385
      %v3504 = vpop.f32.mrb[0].mxu0
      %v3505 = vadd.f32 0.0, %v3504
      %v3506 = vpop.f32.mrb[0].mxu0
      %3507 = vdwg.mxu0
      %v3508 = vadd.f32 %v3370, %v3470
      %v3509 = vadd.f32 %v3371, %v3475
      %v3510 = vadd.f32 %v3372, %v3480
      %v3511 = vadd.f32 %v3373, %v3485
      %v3512 = vadd.f32 %v3374, %v3490
      %v3513 = vadd.f32 %v3375, %v3495
      %v3514 = vadd.f32 %v3376, %v3500
      %v3515 = vadd.f32 %v3377, %v3505
      %v3516 = vld [vmem:[%s3239 + $0x2] sm:$0xff]
      %v3517 = vld [vmem:[%s3239 + $0x12] sm:$0xff]
      %v3518 = vld [vmem:[%s3239 + $0x22] sm:$0xff]
      %v3519 = vld [vmem:[%s3239 + $0x32] sm:$0xff]
      %v3520 = vld [vmem:[%s3239 + $0x42] sm:$0xff]
      %v3521 = vld [vmem:[%s3239 + $0x52] sm:$0xff]
      %v3522 = vld [vmem:[%s3239 + $0x62] sm:$0xff]
      %v3523 = vld [vmem:[%s3239 + $0x72] sm:$0xff]
      %s3524 = scalar_lea.vmem %s3, 2944
      %v3525 = vld [vmem:[%s3524] sm:$0xff]
      %v3526 = vld [vmem:[%s3524 + $0x8] sm:$0xff]
      %v3527 = vld [vmem:[%s3524 + $0x10] sm:$0xff]
      %v3528 = vld [vmem:[%s3524 + $0x18] sm:$0xff]
      %v3529 = vld [vmem:[%s3524 + $0x20] sm:$0xff]
      %v3530 = vld [vmem:[%s3524 + $0x28] sm:$0xff]
      %v3531 = vld [vmem:[%s3524 + $0x30] sm:$0xff]
      %v3532 = vld [vmem:[%s3524 + $0x38] sm:$0xff]
      %v3533 = vld [vmem:[%s3524 + $0x40] sm:$0xff]
      %v3534 = vld [vmem:[%s3524 + $0x48] sm:$0xff]
      %v3535 = vld [vmem:[%s3524 + $0x50] sm:$0xff]
      %v3536 = vld [vmem:[%s3524 + $0x58] sm:$0xff]
      %v3537 = vld [vmem:[%s3524 + $0x60] sm:$0xff]
      %v3538 = vld [vmem:[%s3524 + $0x68] sm:$0xff]
      %v3539 = vld [vmem:[%s3524 + $0x70] sm:$0xff]
      %v3540 = vld [vmem:[%s3524 + $0x78] sm:$0xff]
      %3541 = vmatprep.subr.mxu0 0.0
      %3542 = vmatpush1.msra.mxu0 %v3525
      %3543 = vmatprep.subr.mxu0 0.0
      %3544 = vmatpush1.msra.mxu0 %v3526
      %3545 = vmatprep.subr.mxu0 0.0
      %3546 = vmatpush1.msra.mxu0 %v3527
      %3547 = vmatprep.subr.mxu0 0.0
      %3548 = vmatpush1.msra.mxu0 %v3528
      %3549 = vmatprep.subr.mxu0 0.0
      %3550 = vmatpush1.msra.mxu0 %v3529
      %3551 = vmatprep.subr.mxu0 0.0
      %3552 = vmatpush1.msra.mxu0 %v3530
      %3553 = vmatprep.subr.mxu0 0.0
      %3554 = vmatpush1.msra.mxu0 %v3531
      %3555 = vmatprep.subr.mxu0 0.0
      %3556 = vmatpush1.msra.mxu0 %v3532
      %3557 = vmatprep.subr.mxu0 0.0
      %3558 = vmatpush1.msra.mxu0 %v3533
      %3559 = vmatprep.subr.mxu0 0.0
      %3560 = vmatpush1.msra.mxu0 %v3534
      %3561 = vmatprep.subr.mxu0 0.0
      %3562 = vmatpush1.msra.mxu0 %v3535
      %3563 = vmatprep.subr.mxu0 0.0
      %3564 = vmatpush1.msra.mxu0 %v3536
      %3565 = vmatprep.subr.mxu0 0.0
      %3566 = vmatpush1.msra.mxu0 %v3537
      %3567 = vmatprep.subr.mxu0 0.0
      %3568 = vmatpush1.msra.mxu0 %v3538
      %3569 = vmatprep.subr.mxu0 0.0
      %3570 = vmatpush1.msra.mxu0 %v3539
      %3571 = vmatprep.subr.mxu0 0.0
      %3572 = vmatpush1.msra.mxu0 %v3540
      %3573 = vmatprep.subr.mxu0 0.0
      %3574 = vmatpush1.msra.mxu0 0.0
      %3575 = vmatprep.subr.mxu0 0.0
      %3576 = vmatpush1.msra.mxu0 0.0
      %3577 = vmatprep.subr.mxu0 0.0
      %3578 = vmatpush1.msra.mxu0 0.0
      %3579 = vmatprep.subr.mxu0 0.0
      %3580 = vmatpush1.msra.mxu0 0.0
      %3581 = vmatprep.subr.mxu0 0.0
      %3582 = vmatpush1.msra.mxu0 0.0
      %3583 = vmatprep.subr.mxu0 0.0
      %3584 = vmatpush1.msra.mxu0 0.0
      %3585 = vmatprep.subr.mxu0 0.0
      %3586 = vmatpush1.msra.mxu0 0.0
      %3587 = vmatprep.subr.mxu0 0.0
      %3588 = vmatpush1.msra.mxu0 0.0
      %3589 = vmatprep.subr.mxu0 0.0
      %3590 = vmatpush1.msra.mxu0 0.0
      %3591 = vmatprep.subr.mxu0 0.0
      %3592 = vmatpush1.msra.mxu0 0.0
      %3593 = vmatprep.subr.mxu0 0.0
      %3594 = vmatpush1.msra.mxu0 0.0
      %3595 = vmatprep.subr.mxu0 0.0
      %3596 = vmatpush1.msra.mxu0 0.0
      %3597 = vmatprep.subr.mxu0 0.0
      %3598 = vmatpush1.msra.mxu0 0.0
      %3599 = vmatprep.subr.mxu0 0.0
      %3600 = vmatpush1.msra.mxu0 0.0
      %3601 = vmatprep.subr.mxu0 0.0
      %3602 = vmatpush1.msra.mxu0 0.0
      %3603 = vmatprep.subr.mxu0 0.0
      %3604 = vmatpush1.msra.mxu0 0.0
      %3605 = vmatprep.mubr.f32.mxu0 0.0
      %3606 = vmatmul.mubr.f32.gmra.mrb[0].mxu0 %v3516
      %v3607 = vpop.f32.mrb[0].mxu0
      %v3608 = vadd.f32 0.0, %v3607
      %v3609 = vpop.f32.mrb[0].mxu0
      %3610 = vmatprep.mubr.f32.mxu0 0.0
      %3611 = vmatmul.mubr.f32.gmra.mrb[0].mxu0 %v3517
      %v3612 = vpop.f32.mrb[0].mxu0
      %v3613 = vadd.f32 0.0, %v3612
      %v3614 = vpop.f32.mrb[0].mxu0
      %3615 = vmatprep.mubr.f32.mxu0 0.0
      %3616 = vmatmul.mubr.f32.gmra.mrb[0].mxu0 %v3518
      %v3617 = vpop.f32.mrb[0].mxu0
      %v3618 = vadd.f32 0.0, %v3617
      %v3619 = vpop.f32.mrb[0].mxu0
      %3620 = vmatprep.mubr.f32.mxu0 0.0
      %3621 = vmatmul.mubr.f32.gmra.mrb[0].mxu0 %v3519
      %v3622 = vpop.f32.mrb[0].mxu0
      %v3623 = vadd.f32 0.0, %v3622
      %v3624 = vpop.f32.mrb[0].mxu0
      %3625 = vmatprep.mubr.f32.mxu0 0.0
      %3626 = vmatmul.mubr.f32.gmra.mrb[0].mxu0 %v3520
      %v3627 = vpop.f32.mrb[0].mxu0
      %v3628 = vadd.f32 0.0, %v3627
      %v3629 = vpop.f32.mrb[0].mxu0
      %3630 = vmatprep.mubr.f32.mxu0 0.0
      %3631 = vmatmul.mubr.f32.gmra.mrb[0].mxu0 %v3521
      %v3632 = vpop.f32.mrb[0].mxu0
      %v3633 = vadd.f32 0.0, %v3632
      %v3634 = vpop.f32.mrb[0].mxu0
      %3635 = vmatprep.mubr.f32.mxu0 0.0
      %3636 = vmatmul.mubr.f32.gmra.mrb[0].mxu0 %v3522
      %v3637 = vpop.f32.mrb[0].mxu0
      %v3638 = vadd.f32 0.0, %v3637
      %v3639 = vpop.f32.mrb[0].mxu0
      %3640 = vmatprep.mubr.f32.mxu0 0.0
      %3641 = vmatmul.mubr.f32.gmra.mrb[0].mxu0 %v3523
      %v3642 = vpop.f32.mrb[0].mxu0
      %v3643 = vadd.f32 0.0, %v3642
      %v3644 = vpop.f32.mrb[0].mxu0
      %3645 = vdwg.mxu0
      %v3646 = vadd.f32 %v3508, %v3608
      %v3647 = vadd.f32 %v3509, %v3613
      %v3648 = vadd.f32 %v3510, %v3618
      %v3649 = vadd.f32 %v3511, %v3623
      %v3650 = vadd.f32 %v3512, %v3628
      %v3651 = vadd.f32 %v3513, %v3633
      %v3652 = vadd.f32 %v3514, %v3638
      %v3653 = vadd.f32 %v3515, %v3643
      %s3654 = scalar_lea.vmem %s339, 32
      %v3655 = vld [vmem:[%s3654] sm:$0xff]
      %v3656 = vld [vmem:[%s3654 + $0x10] sm:$0xff]
      %v3657 = vld [vmem:[%s3654 + $0x20] sm:$0xff]
      %v3658 = vld [vmem:[%s3654 + $0x30] sm:$0xff]
      %v3659 = vld [vmem:[%s3654 + $0x40] sm:$0xff]
      %v3660 = vld [vmem:[%s3654 + $0x50] sm:$0xff]
      %v3661 = vld [vmem:[%s3654 + $0x60] sm:$0xff]
      %v3662 = vld [vmem:[%s3654 + $0x70] sm:$0xff]
      %s3663 = scalar_lea.vmem %s3, 3072
      %v3664 = vld [vmem:[%s3663] sm:$0xff]
      %v3665 = vld [vmem:[%s3663 + $0x8] sm:$0xff]
      %v3666 = vld [vmem:[%s3663 + $0x10] sm:$0xff]
      %v3667 = vld [vmem:[%s3663 + $0x18] sm:$0xff]
      %v3668 = vld [vmem:[%s3663 + $0x20] sm:$0xff]
      %v3669 = vld [vmem:[%s3663 + $0x28] sm:$0xff]
      %v3670 = vld [vmem:[%s3663 + $0x30] sm:$0xff]
      %v3671 = vld [vmem:[%s3663 + $0x38] sm:$0xff]
      %v3672 = vld [vmem:[%s3663 + $0x40] sm:$0xff]
      %v3673 = vld [vmem:[%s3663 + $0x48] sm:$0xff]
      %v3674 = vld [vmem:[%s3663 + $0x50] sm:$0xff]
      %v3675 = vld [vmem:[%s3663 + $0x58] sm:$0xff]
      %v3676 = vld [vmem:[%s3663 + $0x60] sm:$0xff]
      %v3677 = vld [vmem:[%s3663 + $0x68] sm:$0xff]
      %v3678 = vld [vmem:[%s3663 + $0x70] sm:$0xff]
      %v3679 = vld [vmem:[%s3663 + $0x78] sm:$0xff]
      %3680 = vmatprep.subr.mxu0 0.0
      %3681 = vmatpush1.msra.mxu0 %v3664
      %3682 = vmatprep.subr.mxu0 0.0
      %3683 = vmatpush1.msra.mxu0 %v3665
      %3684 = vmatprep.subr.mxu0 0.0
      %3685 = vmatpush1.msra.mxu0 %v3666
      %3686 = vmatprep.subr.mxu0 0.0
      %3687 = vmatpush1.msra.mxu0 %v3667
      %3688 = vmatprep.subr.mxu0 0.0
      %3689 = vmatpush1.msra.mxu0 %v3668
      %3690 = vmatprep.subr.mxu0 0.0
      %3691 = vmatpush1.msra.mxu0 %v3669
      %3692 = vmatprep.subr.mxu0 0.0
      %3693 = vmatpush1.msra.mxu0 %v3670
      %3694 = vmatprep.subr.mxu0 0.0
      %3695 = vmatpush1.msra.mxu0 %v3671
      %3696 = vmatprep.subr.mxu0 0.0
      %3697 = vmatpush1.msra.mxu0 %v3672
      %3698 = vmatprep.subr.mxu0 0.0
      %3699 = vmatpush1.msra.mxu0 %v3673
      %3700 = vmatprep.subr.mxu0 0.0
      %3701 = vmatpush1.msra.mxu0 %v3674
      %3702 = vmatprep.subr.mxu0 0.0
      %3703 = vmatpush1.msra.mxu0 %v3675
      %3704 = vmatprep.subr.mxu0 0.0
      %3705 = vmatpush1.msra.mxu0 %v3676
      %3706 = vmatprep.subr.mxu0 0.0
      %3707 = vmatpush1.msra.mxu0 %v3677
      %3708 = vmatprep.subr.mxu0 0.0
      %3709 = vmatpush1.msra.mxu0 %v3678
      %3710 = vmatprep.subr.mxu0 0.0
      %3711 = vmatpush1.msra.mxu0 %v3679
      %3712 = vmatprep.subr.mxu0 0.0
      %3713 = vmatpush1.msra.mxu0 0.0
      %3714 = vmatprep.subr.mxu0 0.0
      %3715 = vmatpush1.msra.mxu0 0.0
      %3716 = vmatprep.subr.mxu0 0.0
      %3717 = vmatpush1.msra.mxu0 0.0
      %3718 = vmatprep.subr.mxu0 0.0
      %3719 = vmatpush1.msra.mxu0 0.0
      %3720 = vmatprep.subr.mxu0 0.0
      %3721 = vmatpush1.msra.mxu0 0.0
      %3722 = vmatprep.subr.mxu0 0.0
      %3723 = vmatpush1.msra.mxu0 0.0
      %3724 = vmatprep.subr.mxu0 0.0
      %3725 = vmatpush1.msra.mxu0 0.0
      %3726 = vmatprep.subr.mxu0 0.0
      %3727 = vmatpush1.msra.mxu0 0.0
      %3728 = vmatprep.subr.mxu0 0.0
      %3729 = vmatpush1.msra.mxu0 0.0
      %3730 = vmatprep.subr.mxu0 0.0
      %3731 = vmatpush1.msra.mxu0 0.0
      %3732 = vmatprep.subr.mxu0 0.0
      %3733 = vmatpush1.msra.mxu0 0.0
      %3734 = vmatprep.subr.mxu0 0.0
      %3735 = vmatpush1.msra.mxu0 0.0
      %3736 = vmatprep.subr.mxu0 0.0
      %3737 = vmatpush1.msra.mxu0 0.0
      %3738 = vmatprep.subr.mxu0 0.0
      %3739 = vmatpush1.msra.mxu0 0.0
      %3740 = vmatprep.subr.mxu0 0.0
      %3741 = vmatpush1.msra.mxu0 0.0
      %3742 = vmatprep.subr.mxu0 0.0
      %3743 = vmatpush1.msra.mxu0 0.0
      %3744 = vmatprep.mubr.f32.mxu0 0.0
      %3745 = vmatmul.mubr.f32.gmra.mrb[0].mxu0 %v3655
      %v3746 = vpop.f32.mrb[0].mxu0
      %v3747 = vadd.f32 0.0, %v3746
      %v3748 = vpop.f32.mrb[0].mxu0
      %3749 = vmatprep.mubr.f32.mxu0 0.0
      %3750 = vmatmul.mubr.f32.gmra.mrb[0].mxu0 %v3656
      %v3751 = vpop.f32.mrb[0].mxu0
      %v3752 = vadd.f32 0.0, %v3751
      %v3753 = vpop.f32.mrb[0].mxu0
      %3754 = vmatprep.mubr.f32.mxu0 0.0
      %3755 = vmatmul.mubr.f32.gmra.mrb[0].mxu0 %v3657
      %v3756 = vpop.f32.mrb[0].mxu0
      %v3757 = vadd.f32 0.0, %v3756
      %v3758 = vpop.f32.mrb[0].mxu0
      %3759 = vmatprep.mubr.f32.mxu0 0.0
      %3760 = vmatmul.mubr.f32.gmra.mrb[0].mxu0 %v3658
      %v3761 = vpop.f32.mrb[0].mxu0
      %v3762 = vadd.f32 0.0, %v3761
      %v3763 = vpop.f32.mrb[0].mxu0
      %3764 = vmatprep.mubr.f32.mxu0 0.0
      %3765 = vmatmul.mubr.f32.gmra.mrb[0].mxu0 %v3659
      %v3766 = vpop.f32.mrb[0].mxu0
      %v3767 = vadd.f32 0.0, %v3766
      %v3768 = vpop.f32.mrb[0].mxu0
      %3769 = vmatprep.mubr.f32.mxu0 0.0
      %3770 = vmatmul.mubr.f32.gmra.mrb[0].mxu0 %v3660
      %v3771 = vpop.f32.mrb[0].mxu0
      %v3772 = vadd.f32 0.0, %v3771
      %v3773 = vpop.f32.mrb[0].mxu0
      %3774 = vmatprep.mubr.f32.mxu0 0.0
      %3775 = vmatmul.mubr.f32.gmra.mrb[0].mxu0 %v3661
      %v3776 = vpop.f32.mrb[0].mxu0
      %v3777 = vadd.f32 0.0, %v3776
      %v3778 = vpop.f32.mrb[0].mxu0
      %3779 = vmatprep.mubr.f32.mxu0 0.0
      %3780 = vmatmul.mubr.f32.gmra.mrb[0].mxu0 %v3662
      %v3781 = vpop.f32.mrb[0].mxu0
      %v3782 = vadd.f32 0.0, %v3781
      %v3783 = vpop.f32.mrb[0].mxu0
      %3784 = vdwg.mxu0
      %v3785 = vadd.f32 %v3646, %v3747
      %v3786 = vadd.f32 %v3647, %v3752
      %v3787 = vadd.f32 %v3648, %v3757
      %v3788 = vadd.f32 %v3649, %v3762
      %v3789 = vadd.f32 %v3650, %v3767
      %v3790 = vadd.f32 %v3651, %v3772
      %v3791 = vadd.f32 %v3652, %v3777
      %v3792 = vadd.f32 %v3653, %v3782
      %v3793 = vld [vmem:[%s3654 + $0x1] sm:$0xff]
      %v3794 = vld [vmem:[%s3654 + $0x11] sm:$0xff]
      %v3795 = vld [vmem:[%s3654 + $0x21] sm:$0xff]
      %v3796 = vld [vmem:[%s3654 + $0x31] sm:$0xff]
      %v3797 = vld [vmem:[%s3654 + $0x41] sm:$0xff]
      %v3798 = vld [vmem:[%s3654 + $0x51] sm:$0xff]
      %v3799 = vld [vmem:[%s3654 + $0x61] sm:$0xff]
      %v3800 = vld [vmem:[%s3654 + $0x71] sm:$0xff]
      %s3801 = scalar_lea.vmem %s3, 3200
      %v3802 = vld [vmem:[%s3801] sm:$0xff]
      %v3803 = vld [vmem:[%s3801 + $0x8] sm:$0xff]
      %v3804 = vld [vmem:[%s3801 + $0x10] sm:$0xff]
      %v3805 = vld [vmem:[%s3801 + $0x18] sm:$0xff]
      %v3806 = vld [vmem:[%s3801 + $0x20] sm:$0xff]
      %v3807 = vld [vmem:[%s3801 + $0x28] sm:$0xff]
      %v3808 = vld [vmem:[%s3801 + $0x30] sm:$0xff]
      %v3809 = vld [vmem:[%s3801 + $0x38] sm:$0xff]
      %v3810 = vld [vmem:[%s3801 + $0x40] sm:$0xff]
      %v3811 = vld [vmem:[%s3801 + $0x48] sm:$0xff]
      %v3812 = vld [vmem:[%s3801 + $0x50] sm:$0xff]
      %v3813 = vld [vmem:[%s3801 + $0x58] sm:$0xff]
      %v3814 = vld [vmem:[%s3801 + $0x60] sm:$0xff]
      %v3815 = vld [vmem:[%s3801 + $0x68] sm:$0xff]
      %v3816 = vld [vmem:[%s3801 + $0x70] sm:$0xff]
      %v3817 = vld [vmem:[%s3801 + $0x78] sm:$0xff]
      %3818 = vmatprep.subr.mxu0 0.0
      %3819 = vmatpush1.msra.mxu0 %v3802
      %3820 = vmatprep.subr.mxu0 0.0
      %3821 = vmatpush1.msra.mxu0 %v3803
      %3822 = vmatprep.subr.mxu0 0.0
      %3823 = vmatpush1.msra.mxu0 %v3804
      %3824 = vmatprep.subr.mxu0 0.0
      %3825 = vmatpush1.msra.mxu0 %v3805
      %3826 = vmatprep.subr.mxu0 0.0
      %3827 = vmatpush1.msra.mxu0 %v3806
      %3828 = vmatprep.subr.mxu0 0.0
      %3829 = vmatpush1.msra.mxu0 %v3807
      %3830 = vmatprep.subr.mxu0 0.0
      %3831 = vmatpush1.msra.mxu0 %v3808
      %3832 = vmatprep.subr.mxu0 0.0
      %3833 = vmatpush1.msra.mxu0 %v3809
      %3834 = vmatprep.subr.mxu0 0.0
      %3835 = vmatpush1.msra.mxu0 %v3810
      %3836 = vmatprep.subr.mxu0 0.0
      %3837 = vmatpush1.msra.mxu0 %v3811
      %3838 = vmatprep.subr.mxu0 0.0
      %3839 = vmatpush1.msra.mxu0 %v3812
      %3840 = vmatprep.subr.mxu0 0.0
      %3841 = vmatpush1.msra.mxu0 %v3813
      %3842 = vmatprep.subr.mxu0 0.0
      %3843 = vmatpush1.msra.mxu0 %v3814
      %3844 = vmatprep.subr.mxu0 0.0
      %3845 = vmatpush1.msra.mxu0 %v3815
      %3846 = vmatprep.subr.mxu0 0.0
      %3847 = vmatpush1.msra.mxu0 %v3816
      %3848 = vmatprep.subr.mxu0 0.0
      %3849 = vmatpush1.msra.mxu0 %v3817
      %3850 = vmatprep.subr.mxu0 0.0
      %3851 = vmatpush1.msra.mxu0 0.0
      %3852 = vmatprep.subr.mxu0 0.0
      %3853 = vmatpush1.msra.mxu0 0.0
      %3854 = vmatprep.subr.mxu0 0.0
      %3855 = vmatpush1.msra.mxu0 0.0
      %3856 = vmatprep.subr.mxu0 0.0
      %3857 = vmatpush1.msra.mxu0 0.0
      %3858 = vmatprep.subr.mxu0 0.0
      %3859 = vmatpush1.msra.mxu0 0.0
      %3860 = vmatprep.subr.mxu0 0.0
      %3861 = vmatpush1.msra.mxu0 0.0
      %3862 = vmatprep.subr.mxu0 0.0
      %3863 = vmatpush1.msra.mxu0 0.0
      %3864 = vmatprep.subr.mxu0 0.0
      %3865 = vmatpush1.msra.mxu0 0.0
      %3866 = vmatprep.subr.mxu0 0.0
      %3867 = vmatpush1.msra.mxu0 0.0
      %3868 = vmatprep.subr.mxu0 0.0
      %3869 = vmatpush1.msra.mxu0 0.0
      %3870 = vmatprep.subr.mxu0 0.0
      %3871 = vmatpush1.msra.mxu0 0.0
      %3872 = vmatprep.subr.mxu0 0.0
      %3873 = vmatpush1.msra.mxu0 0.0
      %3874 = vmatprep.subr.mxu0 0.0
      %3875 = vmatpush1.msra.mxu0 0.0
      %3876 = vmatprep.subr.mxu0 0.0
      %3877 = vmatpush1.msra.mxu0 0.0
      %3878 = vmatprep.subr.mxu0 0.0
      %3879 = vmatpush1.msra.mxu0 0.0
      %3880 = vmatprep.subr.mxu0 0.0
      %3881 = vmatpush1.msra.mxu0 0.0
      %3882 = vmatprep.mubr.f32.mxu0 0.0
      %3883 = vmatmul.mubr.f32.gmra.mrb[0].mxu0 %v3793
      %v3884 = vpop.f32.mrb[0].mxu0
      %v3885 = vadd.f32 0.0, %v3884
      %v3886 = vpop.f32.mrb[0].mxu0
      %3887 = vmatprep.mubr.f32.mxu0 0.0
      %3888 = vmatmul.mubr.f32.gmra.mrb[0].mxu0 %v3794
      %v3889 = vpop.f32.mrb[0].mxu0
      %v3890 = vadd.f32 0.0, %v3889
      %v3891 = vpop.f32.mrb[0].mxu0
      %3892 = vmatprep.mubr.f32.mxu0 0.0
      %3893 = vmatmul.mubr.f32.gmra.mrb[0].mxu0 %v3795
      %v3894 = vpop.f32.mrb[0].mxu0
      %v3895 = vadd.f32 0.0, %v3894
      %v3896 = vpop.f32.mrb[0].mxu0
      %3897 = vmatprep.mubr.f32.mxu0 0.0
      %3898 = vmatmul.mubr.f32.gmra.mrb[0].mxu0 %v3796
      %v3899 = vpop.f32.mrb[0].mxu0
      %v3900 = vadd.f32 0.0, %v3899
      %v3901 = vpop.f32.mrb[0].mxu0
      %3902 = vmatprep.mubr.f32.mxu0 0.0
      %3903 = vmatmul.mubr.f32.gmra.mrb[0].mxu0 %v3797
      %v3904 = vpop.f32.mrb[0].mxu0
      %v3905 = vadd.f32 0.0, %v3904
      %v3906 = vpop.f32.mrb[0].mxu0
      %3907 = vmatprep.mubr.f32.mxu0 0.0
      %3908 = vmatmul.mubr.f32.gmra.mrb[0].mxu0 %v3798
      %v3909 = vpop.f32.mrb[0].mxu0
      %v3910 = vadd.f32 0.0, %v3909
      %v3911 = vpop.f32.mrb[0].mxu0
      %3912 = vmatprep.mubr.f32.mxu0 0.0
      %3913 = vmatmul.mubr.f32.gmra.mrb[0].mxu0 %v3799
      %v3914 = vpop.f32.mrb[0].mxu0
      %v3915 = vadd.f32 0.0, %v3914
      %v3916 = vpop.f32.mrb[0].mxu0
      %3917 = vmatprep.mubr.f32.mxu0 0.0
      %3918 = vmatmul.mubr.f32.gmra.mrb[0].mxu0 %v3800
      %v3919 = vpop.f32.mrb[0].mxu0
      %v3920 = vadd.f32 0.0, %v3919
      %v3921 = vpop.f32.mrb[0].mxu0
      %3922 = vdwg.mxu0
      %v3923 = vadd.f32 %v3785, %v3885
      %v3924 = vadd.f32 %v3786, %v3890
      %v3925 = vadd.f32 %v3787, %v3895
      %v3926 = vadd.f32 %v3788, %v3900
      %v3927 = vadd.f32 %v3789, %v3905
      %v3928 = vadd.f32 %v3790, %v3910
      %v3929 = vadd.f32 %v3791, %v3915
      %v3930 = vadd.f32 %v3792, %v3920
      %v3931 = vld [vmem:[%s3654 + $0x2] sm:$0xff]
      %v3932 = vld [vmem:[%s3654 + $0x12] sm:$0xff]
      %v3933 = vld [vmem:[%s3654 + $0x22] sm:$0xff]
      %v3934 = vld [vmem:[%s3654 + $0x32] sm:$0xff]
      %v3935 = vld [vmem:[%s3654 + $0x42] sm:$0xff]
      %v3936 = vld [vmem:[%s3654 + $0x52] sm:$0xff]
      %v3937 = vld [vmem:[%s3654 + $0x62] sm:$0xff]
      %v3938 = vld [vmem:[%s3654 + $0x72] sm:$0xff]
      %s3939 = scalar_lea.vmem %s3, 3328
      %v3940 = vld [vmem:[%s3939] sm:$0xff]
      %v3941 = vld [vmem:[%s3939 + $0x8] sm:$0xff]
      %v3942 = vld [vmem:[%s3939 + $0x10] sm:$0xff]
      %v3943 = vld [vmem:[%s3939 + $0x18] sm:$0xff]
      %v3944 = vld [vmem:[%s3939 + $0x20] sm:$0xff]
      %v3945 = vld [vmem:[%s3939 + $0x28] sm:$0xff]
      %v3946 = vld [vmem:[%s3939 + $0x30] sm:$0xff]
      %v3947 = vld [vmem:[%s3939 + $0x38] sm:$0xff]
      %v3948 = vld [vmem:[%s3939 + $0x40] sm:$0xff]
      %v3949 = vld [vmem:[%s3939 + $0x48] sm:$0xff]
      %v3950 = vld [vmem:[%s3939 + $0x50] sm:$0xff]
      %v3951 = vld [vmem:[%s3939 + $0x58] sm:$0xff]
      %v3952 = vld [vmem:[%s3939 + $0x60] sm:$0xff]
      %v3953 = vld [vmem:[%s3939 + $0x68] sm:$0xff]
      %v3954 = vld [vmem:[%s3939 + $0x70] sm:$0xff]
      %v3955 = vld [vmem:[%s3939 + $0x78] sm:$0xff]
      %3956 = vmatprep.subr.mxu0 0.0
      %3957 = vmatpush1.msra.mxu0 %v3940
      %3958 = vmatprep.subr.mxu0 0.0
      %3959 = vmatpush1.msra.mxu0 %v3941
      %3960 = vmatprep.subr.mxu0 0.0
      %3961 = vmatpush1.msra.mxu0 %v3942
      %3962 = vmatprep.subr.mxu0 0.0
      %3963 = vmatpush1.msra.mxu0 %v3943
      %3964 = vmatprep.subr.mxu0 0.0
      %3965 = vmatpush1.msra.mxu0 %v3944
      %3966 = vmatprep.subr.mxu0 0.0
      %3967 = vmatpush1.msra.mxu0 %v3945
      %3968 = vmatprep.subr.mxu0 0.0
      %3969 = vmatpush1.msra.mxu0 %v3946
      %3970 = vmatprep.subr.mxu0 0.0
      %3971 = vmatpush1.msra.mxu0 %v3947
      %3972 = vmatprep.subr.mxu0 0.0
      %3973 = vmatpush1.msra.mxu0 %v3948
      %3974 = vmatprep.subr.mxu0 0.0
      %3975 = vmatpush1.msra.mxu0 %v3949
      %3976 = vmatprep.subr.mxu0 0.0
      %3977 = vmatpush1.msra.mxu0 %v3950
      %3978 = vmatprep.subr.mxu0 0.0
      %3979 = vmatpush1.msra.mxu0 %v3951
      %3980 = vmatprep.subr.mxu0 0.0
      %3981 = vmatpush1.msra.mxu0 %v3952
      %3982 = vmatprep.subr.mxu0 0.0
      %3983 = vmatpush1.msra.mxu0 %v3953
      %3984 = vmatprep.subr.mxu0 0.0
      %3985 = vmatpush1.msra.mxu0 %v3954
      %3986 = vmatprep.subr.mxu0 0.0
      %3987 = vmatpush1.msra.mxu0 %v3955
      %3988 = vmatprep.subr.mxu0 0.0
      %3989 = vmatpush1.msra.mxu0 0.0
      %3990 = vmatprep.subr.mxu0 0.0
      %3991 = vmatpush1.msra.mxu0 0.0
      %3992 = vmatprep.subr.mxu0 0.0
      %3993 = vmatpush1.msra.mxu0 0.0
      %3994 = vmatprep.subr.mxu0 0.0
      %3995 = vmatpush1.msra.mxu0 0.0
      %3996 = vmatprep.subr.mxu0 0.0
      %3997 = vmatpush1.msra.mxu0 0.0
      %3998 = vmatprep.subr.mxu0 0.0
      %3999 = vmatpush1.msra.mxu0 0.0
      %4000 = vmatprep.subr.mxu0 0.0
      %4001 = vmatpush1.msra.mxu0 0.0
      %4002 = vmatprep.subr.mxu0 0.0
      %4003 = vmatpush1.msra.mxu0 0.0
      %4004 = vmatprep.subr.mxu0 0.0
      %4005 = vmatpush1.msra.mxu0 0.0
      %4006 = vmatprep.subr.mxu0 0.0
      %4007 = vmatpush1.msra.mxu0 0.0
      %4008 = vmatprep.subr.mxu0 0.0
      %4009 = vmatpush1.msra.mxu0 0.0
      %4010 = vmatprep.subr.mxu0 0.0
      %4011 = vmatpush1.msra.mxu0 0.0
      %4012 = vmatprep.subr.mxu0 0.0
      %4013 = vmatpush1.msra.mxu0 0.0
      %4014 = vmatprep.subr.mxu0 0.0
      %4015 = vmatpush1.msra.mxu0 0.0
      %4016 = vmatprep.subr.mxu0 0.0
      %4017 = vmatpush1.msra.mxu0 0.0
      %4018 = vmatprep.subr.mxu0 0.0
      %4019 = vmatpush1.msra.mxu0 0.0
      %4020 = vmatprep.mubr.f32.mxu0 0.0
      %4021 = vmatmul.mubr.f32.gmra.mrb[0].mxu0 %v3931
      %v4022 = vpop.f32.mrb[0].mxu0
      %v4023 = vadd.f32 0.0, %v4022
      %v4024 = vpop.f32.mrb[0].mxu0
      %4025 = vmatprep.mubr.f32.mxu0 0.0
      %4026 = vmatmul.mubr.f32.gmra.mrb[0].mxu0 %v3932
      %v4027 = vpop.f32.mrb[0].mxu0
      %v4028 = vadd.f32 0.0, %v4027
      %v4029 = vpop.f32.mrb[0].mxu0
      %4030 = vmatprep.mubr.f32.mxu0 0.0
      %4031 = vmatmul.mubr.f32.gmra.mrb[0].mxu0 %v3933
      %v4032 = vpop.f32.mrb[0].mxu0
      %v4033 = vadd.f32 0.0, %v4032
      %v4034 = vpop.f32.mrb[0].mxu0
      %4035 = vmatprep.mubr.f32.mxu0 0.0
      %4036 = vmatmul.mubr.f32.gmra.mrb[0].mxu0 %v3934
      %v4037 = vpop.f32.mrb[0].mxu0
      %v4038 = vadd.f32 0.0, %v4037
      %v4039 = vpop.f32.mrb[0].mxu0
      %4040 = vmatprep.mubr.f32.mxu0 0.0
      %4041 = vmatmul.mubr.f32.gmra.mrb[0].mxu0 %v3935
      %v4042 = vpop.f32.mrb[0].mxu0
      %v4043 = vadd.f32 0.0, %v4042
      %v4044 = vpop.f32.mrb[0].mxu0
      %4045 = vmatprep.mubr.f32.mxu0 0.0
      %4046 = vmatmul.mubr.f32.gmra.mrb[0].mxu0 %v3936
      %v4047 = vpop.f32.mrb[0].mxu0
      %v4048 = vadd.f32 0.0, %v4047
      %v4049 = vpop.f32.mrb[0].mxu0
      %4050 = vmatprep.mubr.f32.mxu0 0.0
      %4051 = vmatmul.mubr.f32.gmra.mrb[0].mxu0 %v3937
      %v4052 = vpop.f32.mrb[0].mxu0
      %v4053 = vadd.f32 0.0, %v4052
      %v4054 = vpop.f32.mrb[0].mxu0
      %4055 = vmatprep.mubr.f32.mxu0 0.0
      %4056 = vmatmul.mubr.f32.gmra.mrb[0].mxu0 %v3938
      %v4057 = vpop.f32.mrb[0].mxu0
      %v4058 = vadd.f32 0.0, %v4057
      %v4059 = vpop.f32.mrb[0].mxu0
      %4060 = vdwg.mxu0
      %v4061 = vadd.f32 %v3923, %v4023
      %v4062 = vadd.f32 %v3924, %v4028
      %v4063 = vadd.f32 %v3925, %v4033
      %v4064 = vadd.f32 %v3926, %v4038
      %v4065 = vadd.f32 %v3927, %v4043
      %v4066 = vadd.f32 %v3928, %v4048
      %v4067 = vadd.f32 %v3929, %v4053
      %v4068 = vadd.f32 %v3930, %v4058
      %4069 = vst [vmem:[%s349] sm:$0xff] %v4061
      %4070 = vst [vmem:[%s349 + $0x8] sm:$0xff] %v4062
      %4071 = vst [vmem:[%s349 + $0x10] sm:$0xff] %v4063
      %4072 = vst [vmem:[%s349 + $0x18] sm:$0xff] %v4064
      %4073 = vst [vmem:[%s349 + $0x20] sm:$0xff] %v4065
      %4074 = vst [vmem:[%s349 + $0x28] sm:$0xff] %v4066
      %4075 = vst [vmem:[%s349 + $0x30] sm:$0xff] %v4067
      %4076 = vst [vmem:[%s349 + $0x38] sm:$0xff] %v4068
      %p4077 = scmp.eq.s32.totalorder %s22, 0
      // Predicated region
      $region37: #{basic_block_forward.4} parent=35 // pred_check
        %p4078 = pneg %p4077
      $region38: #{basic_block_forward.4} parent=35 // pred_check_branch
        %4080 = sbr.rel (%p4078) target = $region40
      $region39: #{basic_block_forward.4} parent=35 // pred_region
        %4081 = vst [vmem:[%s353] sm:$0x3] 0.0
      $region40: #{basic_block_forward.4} parent=35 // pred_fallthru
        _
      %v4082 = vld [vmem:[%s353] sm:$0x3]
      %v4083 = vadd.f32 %v4061, %v4062
      %v4084 = vadd.f32 %v4083, %v4063
      %v4085 = vadd.f32 %v4084, %v4064
      %v4086 = vadd.f32 %v4085, %v4065
      %v4087 = vadd.f32 %v4086, %v4066
      %v4088 = vadd.f32 %v4087, %v4067
      %v4089 = vadd.f32 %v4088, %v4068
      %v4090 = vrot.slane %v4089, 4
      %v4091 = vadd.f32 %v4089, %v4090
      %v4092 = vrot.slane %v4091, 2
      %v4093 = vadd.f32 %v4091, %v4092
      %v4094 = vrot.slane %v4093, 1
      %v4095 = vadd.f32 %v4093, %v4094
      %v4096 = vmul.f32 %v4061, %v4061
      %v4097 = vmul.f32 %v4062, %v4062
      %v4098 = vmul.f32 %v4063, %v4063
      %v4099 = vmul.f32 %v4064, %v4064
      %v4100 = vmul.f32 %v4065, %v4065
      %v4101 = vmul.f32 %v4066, %v4066
      %v4102 = vmul.f32 %v4067, %v4067
      %v4103 = vmul.f32 %v4068, %v4068
      %v4104 = vadd.f32 %v4096, %v4097
      %v4105 = vadd.f32 %v4104, %v4098
      %v4106 = vadd.f32 %v4105, %v4099
      %v4107 = vadd.f32 %v4106, %v4100
      %v4108 = vadd.f32 %v4107, %v4101
      %v4109 = vadd.f32 %v4108, %v4102
      %v4110 = vadd.f32 %v4109, %v4103
      %v4111 = vrot.slane %v4110, 4
      %v4112 = vadd.f32 %v4110, %v4111
      %v4113 = vrot.slane %v4112, 2
      %v4114 = vadd.f32 %v4112, %v4113
      %v4115 = vrot.slane %v4114, 1
      %v4116 = vadd.f32 %v4114, %v4115
      %vm4117 = vcmask 1040384
      %v4118 = vsel %vm4117, %v4095, %v4116
      %v4119 = vadd.f32 %v4082, %v4118
      %4120 = vst [vmem:[%s353] sm:$0x3] %v4119
      %p4121 = scmp.lt.s32.totalorder %s21, 1
      %s4122 = scalar_select %p4121, %s21, 1
      %p4123 = scmp.lt.s32.totalorder %s22, 7
      %s4124 = scalar_select %p4123, %s22, 7
      %s4125 = smul.addr %s4124, 8
      %s4126 = smul.addr %s4122, 64
      %s4127 = sadd.s32 %s4125, %s4126
      %s4128 = smul.addr %s4127, 8
      %s4129 = scalar_lea.vmem %s4, %s4128
      %p4130 = scmp.lt.s32.totalorder %s21, 1
      %s4131 = scalar_select %p4130, %s21, 1
      %s4132 = smul.addr %s4131, 2
      %s4133 = scalar_lea.vmem %s5, %s4132
      // Predicated region
      $region41: #{basic_block_forward.4} parent=35 // pred_check
        %p4134 = pneg %p158
      $region42: #{basic_block_forward.4} parent=35 // pred_check_branch
        %4136 = sbr.rel (%p4134) target = $region44
      $region43: #{basic_block_forward.4} parent=35 // pred_region
        _
      $region44: #{basic_block_forward.4} parent=35 // pred_fallthru
        _
      // Predicated region
      $region45: #{basic_block_forward.4} parent=35 // pred_check
        %p4137 = pneg %p184
      $region46: #{basic_block_forward.4} parent=35 // pred_check_branch
        %4139 = sbr.rel (%p4137) target = $region48
      $region47: #{basic_block_forward.4} parent=35 // pred_region
        _
      $region48: #{basic_block_forward.4} parent=35 // pred_fallthru
        _
    $region36: #{basic_block_forward.4} parent=5 // pred_fallthru
      _
    %p4140 = scmp.le.s32.totalorder 2, %s12
    // Predicated region
    $region49: #{basic_block_forward.4} parent=5 // pred_check
      %p4141 = pneg %p4140
    $region50: #{basic_block_forward.4} parent=5 // pred_check_branch
      %4143 = sbr.rel (%p4141) target = $region52
    $region51: #{basic_block_forward.4} parent=5 // pred_region
      %s4144 = ssub.s32 %s12, 2
      // Predicated region
      $region53: #{basic_block_forward.4} parent=51 // pred_check
        %p4145 = pneg %p164
      $region54: #{basic_block_forward.4} parent=51 // pred_check_branch
        %4147 = sbr.rel (%p4145) target = $region56
      $region55: #{basic_block_forward.4} parent=51 // pred_region
        %p4148 = scmp.lt.s32.totalorder %s23, 1
        %s4149 = scalar_select %p4148, %s23, 1
        %p4150 = scmp.lt.s32.totalorder %s24, 7
        %s4151 = scalar_select %p4150, %s24, 7
        %s4152 = smul.addr %s4151, 8
        %s4153 = smul.addr %s4149, 64
        %s4154 = sadd.s32 %s4152, %s4153
        %s4155 = smul.addr %s4154, 8
        %s4156 = scalar_lea.vmem %s4, %s4155
      $region56: #{basic_block_forward.4} parent=51 // pred_fallthru
        _
      // Predicated region
      $region57: #{basic_block_forward.4} parent=51 // pred_check
        %p4157 = pneg %p190
      $region58: #{basic_block_forward.4} parent=51 // pred_check_branch
        %4159 = sbr.rel (%p4157) target = $region60
      $region59: #{basic_block_forward.4} parent=51 // pred_region
        %p4160 = scmp.lt.s32.totalorder %s23, 1
        %s4161 = scalar_select %p4160, %s23, 1
        %s4162 = smul.addr %s4161, 2
        %s4163 = scalar_lea.vmem %s5, %s4162
      $region60: #{basic_block_forward.4} parent=51 // pred_fallthru
        _
    $region52: #{basic_block_forward.4} parent=5 // pred_fallthru
      _
  $region6: #{basic_block_forward.4} parent=0 // loop_footer
    %s16 = sadd.s32 1, %s12
  $region7: #{basic_block_forward.4} parent=0 // loop_footer_branch
    %11 = sbr.rel target = $region3
  $region8: #{basic_block_forward.4} parent=0 // loop_exit
    _

</llo_original>
